<compile_context>
chip_gen: v7x
topology: tpu7x:2x2x1
jax: 0.10.0
libtpu: 0.0.40
codegen_flags: <defaults>
</compile_context>

<pallas_src>
import functools

import jax
import jax.numpy as jnp
from jax.experimental import pallas as pl
from jax.experimental.pallas import tpu as pltpu


# ----------------------------------------------------------------------------
# Kernel helpers
# ----------------------------------------------------------------------------
def _layernorm(x, w, b, eps=1e-5):
    mean = jnp.mean(x, axis=-1, keepdims=True)
    xc = x - mean
    var = jnp.mean(xc * xc, axis=-1, keepdims=True)
    inv = jax.lax.rsqrt(var + eps)
    return xc * inv * w + b


# ----------------------------------------------------------------------------
# Fused ViT kernel: grid = (num_layers,)
# ----------------------------------------------------------------------------
def _vit_kernel(
    # inputs ------------------------------------------------------------------
    patches_ref,                  # (B, N, K)   bf16   flattened patches (whole batch)
    patch_w_ref, patch_b_ref,     # (K, E) bf16, (1, E) f32
    pos_ref,                      # (N, E) f32
    wq_ref, bq_ref,               # (1, E, E) bf16, (1, 1, E) f32   (1/sqrt(Dh) folded in)
    wk_ref, bk_ref,               # (1, E, E) bf16, (1, 1, E) f32
    wv_ref, bv_ref,               # (1, E, E) bf16, (1, 1, E) f32
    wo_ref, bo_ref,               # (1, E, E) bf16, (1, 1, E) f32
    ln1w_ref, ln1b_ref,           # (1, 1, E) f32
    w1_ref, b1_ref,               # (1, E, F) bf16, (1, 1, F) f32
    w2_ref, b2_ref,               # (1, F, E) bf16, (1, 1, E) f32
    ln2w_ref, ln2b_ref,           # (1, 1, E) f32
    head_w_ref, head_b_ref,       # (E, Cpad) bf16, (1, Cpad) f32
    # outputs -----------------------------------------------------------------
    out_ref,                      # (B, N, Cpad) f32  (resident; written on last layer)
    # scratch -----------------------------------------------------------------
    x_scratch,                    # VMEM (B*N, E) f32 -- activations, resident across layers
    *,
    batch: int, tokens: int, num_heads: int, head_dim: int,
):
    layer = pl.program_id(0)
    num_layers = pl.num_programs(0)
    b, n, nh, dh = batch, tokens, num_heads, head_dim
    e = nh * dh
    m = b * n

    # ---- patch embedding + positional encoding (first layer step only)
    @pl.when(layer == 0)
    def _():
        p = patches_ref[...].reshape(m, patches_ref.shape[-1])          # (M, K) bf16
        emb = jnp.dot(p, patch_w_ref[...],
                      preferred_element_type=jnp.float32)               # (M, E) f32
        emb = emb + patch_b_ref[...]
        emb = emb.reshape(b, n, e) + pos_ref[...]                       # broadcast pos over B
        x_scratch[...] = emb.reshape(m, e)

    x = x_scratch[...]                                                  # (M, E) f32
    xb = x.astype(jnp.bfloat16)

    # ---- multi-head self-attention
    # Fused, lane-dense projections (full E-deep contraction, M = B*N rows).
    q = jnp.dot(xb, wq_ref[0], preferred_element_type=jnp.float32) + bq_ref[0]
    k = jnp.dot(xb, wk_ref[0], preferred_element_type=jnp.float32) + bk_ref[0]
    v = jnp.dot(xb, wv_ref[0], preferred_element_type=jnp.float32) + bv_ref[0]

    q3 = q.astype(jnp.bfloat16).reshape(b, n, e)                        # leading split only
    k3 = k.astype(jnp.bfloat16).reshape(b, n, e)
    v3 = v.astype(jnp.bfloat16).reshape(b, n, e)

    # Head split only for the small score / PV matmuls (static lane slices).
    head_outs = []
    for h in range(nh):
        sl = slice(h * dh, (h + 1) * dh)
        s = jnp.einsum('bnd,bmd->bnm', q3[:, :, sl], k3[:, :, sl],
                       preferred_element_type=jnp.float32)              # (B, N, N)
        s = s - jnp.max(s, axis=-1, keepdims=True)
        p_h = jnp.exp(s)
        p_h = p_h * pl.reciprocal(jnp.sum(p_h, axis=-1, keepdims=True), approx=True)
        head_outs.append(
            jnp.einsum('bnm,bmd->bnd', p_h.astype(jnp.bfloat16), v3[:, :, sl],
                       preferred_element_type=jnp.float32))             # (B, N, Dh)

    # Head merge (lane concat == PyTorch's per-head channel layout), then one
    # full-depth output projection.
    o = jnp.concatenate(head_outs, axis=-1).reshape(m, e)               # (M, E)
    attn = jnp.dot(o.astype(jnp.bfloat16), wo_ref[0],
                   preferred_element_type=jnp.float32) + bo_ref[0]      # (M, E)

    # post-norm residual 1 (dropout = identity in eval mode)
    x1 = _layernorm(x + attn, ln1w_ref[0], ln1b_ref[0])

    # ---- feed-forward (relu)
    h1 = jnp.dot(x1.astype(jnp.bfloat16), w1_ref[0],
                 preferred_element_type=jnp.float32) + b1_ref[0]
    h1 = jnp.maximum(h1, 0.0)
    h2 = jnp.dot(h1.astype(jnp.bfloat16), w2_ref[0],
                 preferred_element_type=jnp.float32) + b2_ref[0]

    # post-norm residual 2
    x2 = _layernorm(x1 + h2, ln2w_ref[0], ln2b_ref[0])
    x_scratch[...] = x2

    # ---- segmentation head: 1x1 conv == per-token matmul, lane-dense padded output
    @pl.when(layer == num_layers - 1)
    def _():
        logits = jnp.dot(x2.astype(jnp.bfloat16), head_w_ref[...],
                         preferred_element_type=jnp.float32) + head_b_ref[...]
        out_ref[...] = logits.reshape(b, n, logits.shape[-1])


# ----------------------------------------------------------------------------
# Wrapper (single fused pallas_call)
# ----------------------------------------------------------------------------
def vit_segmentation_forward(x, params, *, patch_size, num_heads, num_classes):
    # x: [B, C, H, W] (NCHW, matching the PyTorch input convention)
    B, C, H, W = x.shape
    P = patch_size
    Hp, Wp = H // P, W // P
    N = Hp * Wp
    K = C * P * P
    E = params["patch_w"].shape[1]
    F = params["w1"].shape[2]
    L = params["wq"].shape[0]
    Dh = E // num_heads
    Cpad = params["head_w"].shape[1]

    # Patch extraction (glue): flatten order (c, kh, kw) matches conv weight layout.
    patches = x.reshape(B, C, Hp, P, Wp, P).transpose(0, 2, 4, 1, 3, 5)
    patches = patches.reshape(B, N, K).astype(jnp.bfloat16)

    pos = params["pos"][:N]                                    # learnable PE sliced to N tokens

    def const_spec(arr):          # fetched once, resident for the whole grid
        nd = arr.ndim
        return pl.BlockSpec(arr.shape, lambda l, _nd=nd: (0,) * _nd)

    def layer_spec(arr):          # layer-stacked weight, prefetched along the layer axis
        nz = arr.ndim - 1
        return pl.BlockSpec((1,) + arr.shape[1:],
                            lambda l, _nz=nz: (l,) + (0,) * _nz)

    per_layer_keys = ["wq", "bq", "wk", "bk", "wv", "bv", "wo", "bo",
                      "ln1w", "ln1b", "w1", "b1", "w2", "b2", "ln2w", "ln2b"]

    in_specs = [
        const_spec(patches),
        const_spec(params["patch_w"]), const_spec(params["patch_b"]),
        const_spec(pos),
    ] + [layer_spec(params[k]) for k in per_layer_keys] + [
        const_spec(params["head_w"]), const_spec(params["head_b"]),
    ]

    # VMEM budget: double-buffered per-layer weights + resident constants/output +
    # activation scratch + in-flight intermediates (qkv, scores, h1, logits).
    def nbytes(a):
        return int(a.size) * a.dtype.itemsize
    M = B * N
    per_layer_bytes = sum(nbytes(params[k]) // L for k in per_layer_keys)
    const_bytes = (nbytes(patches) + nbytes(params["patch_w"]) + nbytes(params["patch_b"])
                   + nbytes(pos) + nbytes(params["head_w"]) + nbytes(params["head_b"]))
    interm_bytes = 4 * (6 * M * E + 2 * M * F + 2 * B * N * N + M * Cpad)
    est = 2 * (per_layer_bytes + const_bytes + B * N * Cpad * 4) + M * E * 4 + interm_bytes
    vmem_limit = int(min(64 << 20, max(32 << 20, 2 * est)))

    out_padded = pl.pallas_call(
        functools.partial(_vit_kernel, batch=B, tokens=N,
                          num_heads=num_heads, head_dim=Dh),
        out_shape=jax.ShapeDtypeStruct((B, N, Cpad), jnp.float32),
        grid=(L,),
        in_specs=in_specs,
        out_specs=pl.BlockSpec((B, N, Cpad), lambda l: (0, 0, 0)),
        scratch_shapes=[pltpu.VMEM((M, E), jnp.float32)],
        compiler_params=pltpu.CompilerParams(
            dimension_semantics=("arbitrary",),
            vmem_limit_bytes=vmem_limit),
    )(
        patches,
        params["patch_w"], params["patch_b"], pos,
        *[params[k] for k in per_layer_keys],
        params["head_w"], params["head_b"],
    )

    # Drop lane padding, back to NCHW [B, num_classes, Hp, Wp].
    logits_flat = out_padded[:, :, :num_classes]
    logits = logits_flat.transpose(0, 2, 1).reshape(B, num_classes, Hp, Wp)
    return logits


# ----------------------------------------------------------------------------
# Parameter init (deterministic, synthetic; layout matches the kernel)
# ----------------------------------------------------------------------------
def init_params(key, *, in_channels, num_classes, patch_size, embed_dim,
                num_heads, num_layers, hidden_dim, num_patches):
    E, F, P, C = embed_dim, hidden_dim, patch_size, in_channels
    K = C * P * P
    Dh = E // num_heads
    L = num_layers
    Cpad = max(128, ((num_classes + 127) // 128) * 128)   # lane-dense head output
    bf = jnp.bfloat16
    q_scale = 1.0 / (Dh ** 0.5)

    def nrm(k, shape, scale=0.02, dtype=jnp.float32):
        return (scale * jax.random.normal(k, shape)).astype(dtype)

    keys = jax.random.split(key, 16)

    head_w = jnp.zeros((E, Cpad), jnp.float32)
    head_w = head_w.at[:, :num_classes].set(
        0.02 * jax.random.normal(keys[3], (E, num_classes)))

    # 1/sqrt(Dh) folded into the q projection (weights + bias) at init time.
    wq = (nrm(keys[4], (L, E, E)) * q_scale).astype(bf)
    bq = nrm(keys[5], (L, 1, E), scale=0.01) * q_scale

    return {
        # patch-embed conv as [K, E] matmul (flatten order c, kh, kw)
        "patch_w": nrm(keys[0], (K, E), dtype=bf),
        "patch_b": nrm(keys[1], (1, E)),
        # learnable positional embedding (sliced to N tokens in the wrapper)
        "pos": nrm(keys[2], (num_patches, E)),
        # seg head 1x1 conv, zero-padded to Cpad classes
        "head_w": head_w.astype(bf),
        "head_b": nrm(keys[15], (1, Cpad), scale=0.01),
        # layer-stacked encoder weights; projections kept FULL-WIDTH [E, E] (no head split)
        "wq": wq, "bq": bq,
        "wk": nrm(keys[6], (L, E, E), dtype=bf), "bk": nrm(keys[7], (L, 1, E), scale=0.01),
        "wv": nrm(keys[8], (L, E, E), dtype=bf), "bv": nrm(keys[9], (L, 1, E), scale=0.01),
        "wo": nrm(keys[10], (L, E, E), dtype=bf), "bo": nrm(keys[11], (L, 1, E), scale=0.01),
        "ln1w": jnp.ones((L, 1, E), jnp.float32), "ln1b": jnp.zeros((L, 1, E), jnp.float32),
        "w1": nrm(keys[12], (L, E, F), dtype=bf), "b1": nrm(keys[13], (L, 1, F), scale=0.01),
        "w2": nrm(keys[14], (L, F, E), dtype=bf), "b2": jnp.zeros((L, 1, E), jnp.float32),
        "ln2w": jnp.ones((L, 1, E), jnp.float32), "ln2b": jnp.zeros((L, 1, E), jnp.float32),
    }


# ----------------------------------------------------------------------------
if __name__ == "__main__":
    B, C_in, H, W = 2, 4, 16, 16
    patch_size = 4
    embed_dim = 32
    num_heads = 4
    num_layers = 2
    hidden_dim = 64
    num_classes = 2
    num_patches = (H // patch_size) * (W // patch_size)

    key = jax.random.PRNGKey(0)
    kx, kp = jax.random.split(key)
    x = jax.random.normal(kx, (B, C_in, H, W), dtype=jnp.float32)

    params = init_params(
        kp,
        in_channels=C_in,
        num_classes=num_classes,
        patch_size=patch_size,
        embed_dim=embed_dim,
        num_heads=num_heads,
        num_layers=num_layers,
        hidden_dim=hidden_dim,
        num_patches=num_patches,
    )

    fwd = jax.jit(functools.partial(
        vit_segmentation_forward,
        patch_size=patch_size, num_heads=num_heads, num_classes=num_classes))

    logits = jax.block_until_ready(fwd(x, params))

    assert logits.shape == (B, num_classes, H // patch_size, W // patch_size)
    assert bool(jnp.all(jnp.isfinite(logits)))
    print("KERNEL_OK")
</pallas_src>

<mosaic_0001>
module attributes {stable_mosaic.version = 11 : i64} {
  func.func @_vit_kernel(%arg0: i32, %arg1: memref<2x16x64xbf16, #tpu.memory_space<vmem>>, %arg2: memref<64x32xbf16, #tpu.memory_space<vmem>>, %arg3: memref<1x32xf32, #tpu.memory_space<vmem>>, %arg4: memref<16x32xf32, #tpu.memory_space<vmem>>, %arg5: memref<1x32x32xbf16, #tpu.memory_space<vmem>>, %arg6: memref<1x1x32xf32, #tpu.memory_space<vmem>>, %arg7: memref<1x32x32xbf16, #tpu.memory_space<vmem>>, %arg8: memref<1x1x32xf32, #tpu.memory_space<vmem>>, %arg9: memref<1x32x32xbf16, #tpu.memory_space<vmem>>, %arg10: memref<1x1x32xf32, #tpu.memory_space<vmem>>, %arg11: memref<1x32x32xbf16, #tpu.memory_space<vmem>>, %arg12: memref<1x1x32xf32, #tpu.memory_space<vmem>>, %arg13: memref<1x1x32xf32, #tpu.memory_space<vmem>>, %arg14: memref<1x1x32xf32, #tpu.memory_space<vmem>>, %arg15: memref<1x32x64xbf16, #tpu.memory_space<vmem>>, %arg16: memref<1x1x64xf32, #tpu.memory_space<vmem>>, %arg17: memref<1x64x32xbf16, #tpu.memory_space<vmem>>, %arg18: memref<1x1x32xf32, #tpu.memory_space<vmem>>, %arg19: memref<1x1x32xf32, #tpu.memory_space<vmem>>, %arg20: memref<1x1x32xf32, #tpu.memory_space<vmem>>, %arg21: memref<32x128xbf16, #tpu.memory_space<vmem>>, %arg22: memref<1x128xf32, #tpu.memory_space<vmem>>, %arg23: memref<2x16x128xf32, #tpu.memory_space<vmem>>, %arg24: memref<32x32xf32, #tpu.memory_space<vmem>>) attributes {dimension_semantics = [#tpu.dimension_semantics<arbitrary>], iteration_bounds = array<i64: 2>, scalar_prefetch = 0 : i64, scratch_operands = 1 : i64, tpu.core_type = #tpu.core_type<tc>, window_params = [{pipeline_mode = #tpu.pipeline_mode<synchronous>, transform_indices = @transform_0, window_bounds = array<i64: 2, 16, 64>}, {pipeline_mode = #tpu.pipeline_mode<synchronous>, transform_indices = @transform_1, window_bounds = array<i64: 64, 32>}, {pipeline_mode = #tpu.pipeline_mode<synchronous>, transform_indices = @transform_2, window_bounds = array<i64: 1, 32>}, {pipeline_mode = #tpu.pipeline_mode<synchronous>, transform_indices = @transform_3, window_bounds = array<i64: 16, 32>}, {transform_indices = @transform_4, window_bounds = array<i64: 1, 32, 32>}, {transform_indices = @transform_5, window_bounds = array<i64: 1, 1, 32>}, {transform_indices = @transform_6, window_bounds = array<i64: 1, 32, 32>}, {transform_indices = @transform_7, window_bounds = array<i64: 1, 1, 32>}, {transform_indices = @transform_8, window_bounds = array<i64: 1, 32, 32>}, {transform_indices = @transform_9, window_bounds = array<i64: 1, 1, 32>}, {transform_indices = @transform_10, window_bounds = array<i64: 1, 32, 32>}, {transform_indices = @transform_11, window_bounds = array<i64: 1, 1, 32>}, {transform_indices = @transform_12, window_bounds = array<i64: 1, 1, 32>}, {transform_indices = @transform_13, window_bounds = array<i64: 1, 1, 32>}, {transform_indices = @transform_14, window_bounds = array<i64: 1, 32, 64>}, {transform_indices = @transform_15, window_bounds = array<i64: 1, 1, 64>}, {transform_indices = @transform_16, window_bounds = array<i64: 1, 64, 32>}, {transform_indices = @transform_17, window_bounds = array<i64: 1, 1, 32>}, {transform_indices = @transform_18, window_bounds = array<i64: 1, 1, 32>}, {transform_indices = @transform_19, window_bounds = array<i64: 1, 1, 32>}, {pipeline_mode = #tpu.pipeline_mode<synchronous>, transform_indices = @transform_20, window_bounds = array<i64: 32, 128>}, {pipeline_mode = #tpu.pipeline_mode<synchronous>, transform_indices = @transform_21, window_bounds = array<i64: 1, 128>}, {pipeline_mode = #tpu.pipeline_mode<synchronous>, transform_indices = @transform_22, window_bounds = array<i64: 2, 16, 128>}]} {
    %c0_i32 = arith.constant 0 : i32
    %0 = arith.cmpi eq, %arg0, %c0_i32 : i32
    %1 = arith.extui %0 : i1 to i32
    %c0_i32_0 = arith.constant 0 : i32
    %2 = arith.cmpi ne, %1, %c0_i32_0 : i32
    scf.if %2 {
      %c0_85 = arith.constant 0 : index
      %c0_86 = arith.constant 0 : index
      %c0_87 = arith.constant 0 : index
      %178 = vector.load %arg1[%c0_85, %c0_86, %c0_87] : memref<2x16x64xbf16, #tpu.memory_space<vmem>>, vector<2x16x64xbf16>
      %179 = vector.shape_cast %178 : vector<2x16x64xbf16> to vector<32x64xbf16>
      %c0_88 = arith.constant 0 : index
      %c0_89 = arith.constant 0 : index
      %180 = vector.load %arg2[%c0_88, %c0_89] : memref<64x32xbf16, #tpu.memory_space<vmem>>, vector<64x32xbf16>
      %cst_90 = arith.constant dense<0.000000e+00> : vector<32x32xf32>
      %181 = tpu.matmul %179, %180, %cst_90 {dimension_numbers = #tpu.dot_dimension_numbers<[1], [0], [0], [1], [0, 0, 1, 1], [], []>} : vector<32x64xbf16>, vector<64x32xbf16>, vector<32x32xf32> -> vector<32x32xf32>
      %c0_91 = arith.constant 0 : index
      %c0_92 = arith.constant 0 : index
      %182 = vector.load %arg3[%c0_91, %c0_92] : memref<1x32xf32, #tpu.memory_space<vmem>>, vector<1x32xf32>
      %183 = vector.broadcast %182 : vector<1x32xf32> to vector<32x32xf32>
      %184 = arith.addf %181, %183 : vector<32x32xf32>
      %185 = vector.shape_cast %184 : vector<32x32xf32> to vector<2x16x32xf32>
      %c0_93 = arith.constant 0 : index
      %c0_94 = arith.constant 0 : index
      %186 = vector.load %arg4[%c0_93, %c0_94] : memref<16x32xf32, #tpu.memory_space<vmem>>, vector<16x32xf32>
      %187 = vector.shape_cast %186 : vector<16x32xf32> to vector<1x16x32xf32>
      %188 = vector.broadcast %187 : vector<1x16x32xf32> to vector<2x16x32xf32>
      %189 = arith.addf %185, %188 : vector<2x16x32xf32>
      %190 = vector.shape_cast %189 : vector<2x16x32xf32> to vector<32x32xf32>
      %c0_95 = arith.constant 0 : index
      %c0_96 = arith.constant 0 : index
      %191 = vector.load %arg24[%c0_95, %c0_96] : memref<32x32xf32, #tpu.memory_space<vmem>>, vector<32x32xf32>
      tpu.vector_store %arg24[%c0_95, %c0_96], %190 {strides = array<i32>} : memref<32x32xf32, #tpu.memory_space<vmem>>, vector<32x32xf32>,
    } else {
    }
    %c0 = arith.constant 0 : index
    %c0_1 = arith.constant 0 : index
    %3 = vector.load %arg24[%c0, %c0_1] : memref<32x32xf32, #tpu.memory_space<vmem>>, vector<32x32xf32>
    %4 = arith.truncf %3 : vector<32x32xf32> to vector<32x32xbf16>
    %c0_2 = arith.constant 0 : index
    %c0_3 = arith.constant 0 : index
    %c0_4 = arith.constant 0 : index
    %5 = vector.load %arg5[%c0_2, %c0_3, %c0_4] : memref<1x32x32xbf16, #tpu.memory_space<vmem>>, vector<1x32x32xbf16>
    %6 = vector.shape_cast %5 : vector<1x32x32xbf16> to vector<32x32xbf16>
    %cst = arith.constant dense<0.000000e+00> : vector<32x32xf32>
    %7 = tpu.matmul %4, %6, %cst {dimension_numbers = #tpu.dot_dimension_numbers<[1], [0], [0], [1], [0, 0, 1, 1], [], []>} : vector<32x32xbf16>, vector<32x32xbf16>, vector<32x32xf32> -> vector<32x32xf32>
    %c0_5 = arith.constant 0 : index
    %c0_6 = arith.constant 0 : index
    %c0_7 = arith.constant 0 : index
    %8 = vector.load %arg6[%c0_5, %c0_6, %c0_7] : memref<1x1x32xf32, #tpu.memory_space<vmem>>, vector<1x1x32xf32>
    %9 = vector.shape_cast %8 : vector<1x1x32xf32> to vector<1x32xf32>
    %10 = vector.broadcast %9 : vector<1x32xf32> to vector<32x32xf32>
    %11 = arith.addf %7, %10 : vector<32x32xf32>
    %c0_8 = arith.constant 0 : index
    %c0_9 = arith.constant 0 : index
    %c0_10 = arith.constant 0 : index
    %12 = vector.load %arg7[%c0_8, %c0_9, %c0_10] : memref<1x32x32xbf16, #tpu.memory_space<vmem>>, vector<1x32x32xbf16>
    %13 = vector.shape_cast %12 : vector<1x32x32xbf16> to vector<32x32xbf16>
    %cst_11 = arith.constant dense<0.000000e+00> : vector<32x32xf32>
    %14 = tpu.matmul %4, %13, %cst_11 {dimension_numbers = #tpu.dot_dimension_numbers<[1], [0], [0], [1], [0, 0, 1, 1], [], []>} : vector<32x32xbf16>, vector<32x32xbf16>, vector<32x32xf32> -> vector<32x32xf32>
    %c0_12 = arith.constant 0 : index
    %c0_13 = arith.constant 0 : index
    %c0_14 = arith.constant 0 : index
    %15 = vector.load %arg8[%c0_12, %c0_13, %c0_14] : memref<1x1x32xf32, #tpu.memory_space<vmem>>, vector<1x1x32xf32>
    %16 = vector.shape_cast %15 : vector<1x1x32xf32> to vector<1x32xf32>
    %17 = vector.broadcast %16 : vector<1x32xf32> to vector<32x32xf32>
    %18 = arith.addf %14, %17 : vector<32x32xf32>
    %c0_15 = arith.constant 0 : index
    %c0_16 = arith.constant 0 : index
    %c0_17 = arith.constant 0 : index
    %19 = vector.load %arg9[%c0_15, %c0_16, %c0_17] : memref<1x32x32xbf16, #tpu.memory_space<vmem>>, vector<1x32x32xbf16>
    %20 = vector.shape_cast %19 : vector<1x32x32xbf16> to vector<32x32xbf16>
    %cst_18 = arith.constant dense<0.000000e+00> : vector<32x32xf32>
    %21 = tpu.matmul %4, %20, %cst_18 {dimension_numbers = #tpu.dot_dimension_numbers<[1], [0], [0], [1], [0, 0, 1, 1], [], []>} : vector<32x32xbf16>, vector<32x32xbf16>, vector<32x32xf32> -> vector<32x32xf32>
    %c0_19 = arith.constant 0 : index
    %c0_20 = arith.constant 0 : index
    %c0_21 = arith.constant 0 : index
    %22 = vector.load %arg10[%c0_19, %c0_20, %c0_21] : memref<1x1x32xf32, #tpu.memory_space<vmem>>, vector<1x1x32xf32>
    %23 = vector.shape_cast %22 : vector<1x1x32xf32> to vector<1x32xf32>
    %24 = vector.broadcast %23 : vector<1x32xf32> to vector<32x32xf32>
    %25 = arith.addf %21, %24 : vector<32x32xf32>
    %26 = arith.truncf %11 : vector<32x32xf32> to vector<32x32xbf16>
    %27 = vector.shape_cast %26 : vector<32x32xbf16> to vector<2x16x32xbf16>
    %28 = arith.truncf %18 : vector<32x32xf32> to vector<32x32xbf16>
    %29 = vector.shape_cast %28 : vector<32x32xbf16> to vector<2x16x32xbf16>
    %30 = arith.truncf %25 : vector<32x32xf32> to vector<32x32xbf16>
    %31 = vector.shape_cast %30 : vector<32x32xbf16> to vector<2x16x32xbf16>
    %32 = vector.extract_strided_slice %27 {offsets = [0, 0, 0], sizes = [2, 16, 8], strides = [1, 1, 1]} : vector<2x16x32xbf16> to vector<2x16x8xbf16>
    %33 = vector.extract_strided_slice %29 {offsets = [0, 0, 0], sizes = [2, 16, 8], strides = [1, 1, 1]} : vector<2x16x32xbf16> to vector<2x16x8xbf16>
    "tpu.trace_start"() <{level = 10 : i32, message = "bnd,bmd->bnm"}> : () -> ()
    %cst_22 = arith.constant dense<0.000000e+00> : vector<2x16x16xf32>
    %34 = tpu.matmul %32, %33, %cst_22 {dimension_numbers = #tpu.dot_dimension_numbers<[2], [2], [1], [1], [0, 0, 0, 1, 1, 1], [0], [0]>} : vector<2x16x8xbf16>, vector<2x16x8xbf16>, vector<2x16x16xf32> -> vector<2x16x16xf32>
    "tpu.trace_stop"() : () -> ()
    %cst_23 = arith.constant dense<0xFF800000> : vector<2x16xf32>
    %35 = vector.multi_reduction <maximumf>, %34, %cst_23 [2] : vector<2x16x16xf32> to vector<2x16xf32>
    %36 = vector.shape_cast %35 : vector<2x16xf32> to vector<2x16x1xf32>
    %37 = vector.broadcast %36 : vector<2x16x1xf32> to vector<2x16x16xf32>
    %38 = arith.subf %34, %37 : vector<2x16x16xf32>
    %39 = math.exp %38 : vector<2x16x16xf32>
    %cst_24 = arith.constant dense<0.000000e+00> : vector<2x16xf32>
    %40 = vector.multi_reduction <add>, %39, %cst_24 [2] : vector<2x16x16xf32> to vector<2x16xf32>
    %41 = vector.shape_cast %40 : vector<2x16xf32> to vector<2x16x1xf32>
    %42 = tpu.reciprocal %41 {approx = true} : vector<2x16x1xf32> -> vector<2x16x1xf32>
    %43 = vector.broadcast %42 : vector<2x16x1xf32> to vector<2x16x16xf32>
    %44 = arith.mulf %39, %43 : vector<2x16x16xf32>
    %45 = arith.truncf %44 : vector<2x16x16xf32> to vector<2x16x16xbf16>
    %46 = vector.extract_strided_slice %31 {offsets = [0, 0, 0], sizes = [2, 16, 8], strides = [1, 1, 1]} : vector<2x16x32xbf16> to vector<2x16x8xbf16>
    "tpu.trace_start"() <{level = 10 : i32, message = "bnm,bmd->bnd"}> : () -> ()
    %cst_25 = arith.constant dense<0.000000e+00> : vector<2x16x8xf32>
    %47 = tpu.matmul %45, %46, %cst_25 {dimension_numbers = #tpu.dot_dimension_numbers<[2], [1], [1], [2], [0, 0, 0, 1, 1, 2], [0], [0]>} : vector<2x16x16xbf16>, vector<2x16x8xbf16>, vector<2x16x8xf32> -> vector<2x16x8xf32>
    "tpu.trace_stop"() : () -> ()
    %48 = vector.extract_strided_slice %27 {offsets = [0, 0, 8], sizes = [2, 16, 8], strides = [1, 1, 1]} : vector<2x16x32xbf16> to vector<2x16x8xbf16>
    %49 = vector.extract_strided_slice %29 {offsets = [0, 0, 8], sizes = [2, 16, 8], strides = [1, 1, 1]} : vector<2x16x32xbf16> to vector<2x16x8xbf16>
    "tpu.trace_start"() <{level = 10 : i32, message = "bnd,bmd->bnm"}> : () -> ()
    %cst_26 = arith.constant dense<0.000000e+00> : vector<2x16x16xf32>
    %50 = tpu.matmul %48, %49, %cst_26 {dimension_numbers = #tpu.dot_dimension_numbers<[2], [2], [1], [1], [0, 0, 0, 1, 1, 1], [0], [0]>} : vector<2x16x8xbf16>, vector<2x16x8xbf16>, vector<2x16x16xf32> -> vector<2x16x16xf32>
    "tpu.trace_stop"() : () -> ()
    %cst_27 = arith.constant dense<0xFF800000> : vector<2x16xf32>
    %51 = vector.multi_reduction <maximumf>, %50, %cst_27 [2] : vector<2x16x16xf32> to vector<2x16xf32>
    %52 = vector.shape_cast %51 : vector<2x16xf32> to vector<2x16x1xf32>
    %53 = vector.broadcast %52 : vector<2x16x1xf32> to vector<2x16x16xf32>
    %54 = arith.subf %50, %53 : vector<2x16x16xf32>
    %55 = math.exp %54 : vector<2x16x16xf32>
    %cst_28 = arith.constant dense<0.000000e+00> : vector<2x16xf32>
    %56 = vector.multi_reduction <add>, %55, %cst_28 [2] : vector<2x16x16xf32> to vector<2x16xf32>
    %57 = vector.shape_cast %56 : vector<2x16xf32> to vector<2x16x1xf32>
    %58 = tpu.reciprocal %57 {approx = true} : vector<2x16x1xf32> -> vector<2x16x1xf32>
    %59 = vector.broadcast %58 : vector<2x16x1xf32> to vector<2x16x16xf32>
    %60 = arith.mulf %55, %59 : vector<2x16x16xf32>
    %61 = arith.truncf %60 : vector<2x16x16xf32> to vector<2x16x16xbf16>
    %62 = vector.extract_strided_slice %31 {offsets = [0, 0, 8], sizes = [2, 16, 8], strides = [1, 1, 1]} : vector<2x16x32xbf16> to vector<2x16x8xbf16>
    "tpu.trace_start"() <{level = 10 : i32, message = "bnm,bmd->bnd"}> : () -> ()
    %cst_29 = arith.constant dense<0.000000e+00> : vector<2x16x8xf32>
    %63 = tpu.matmul %61, %62, %cst_29 {dimension_numbers = #tpu.dot_dimension_numbers<[2], [1], [1], [2], [0, 0, 0, 1, 1, 2], [0], [0]>} : vector<2x16x16xbf16>, vector<2x16x8xbf16>, vector<2x16x8xf32> -> vector<2x16x8xf32>
    "tpu.trace_stop"() : () -> ()
    %64 = vector.extract_strided_slice %27 {offsets = [0, 0, 16], sizes = [2, 16, 8], strides = [1, 1, 1]} : vector<2x16x32xbf16> to vector<2x16x8xbf16>
    %65 = vector.extract_strided_slice %29 {offsets = [0, 0, 16], sizes = [2, 16, 8], strides = [1, 1, 1]} : vector<2x16x32xbf16> to vector<2x16x8xbf16>
    "tpu.trace_start"() <{level = 10 : i32, message = "bnd,bmd->bnm"}> : () -> ()
    %cst_30 = arith.constant dense<0.000000e+00> : vector<2x16x16xf32>
    %66 = tpu.matmul %64, %65, %cst_30 {dimension_numbers = #tpu.dot_dimension_numbers<[2], [2], [1], [1], [0, 0, 0, 1, 1, 1], [0], [0]>} : vector<2x16x8xbf16>, vector<2x16x8xbf16>, vector<2x16x16xf32> -> vector<2x16x16xf32>
    "tpu.trace_stop"() : () -> ()
    %cst_31 = arith.constant dense<0xFF800000> : vector<2x16xf32>
    %67 = vector.multi_reduction <maximumf>, %66, %cst_31 [2] : vector<2x16x16xf32> to vector<2x16xf32>
    %68 = vector.shape_cast %67 : vector<2x16xf32> to vector<2x16x1xf32>
    %69 = vector.broadcast %68 : vector<2x16x1xf32> to vector<2x16x16xf32>
    %70 = arith.subf %66, %69 : vector<2x16x16xf32>
    %71 = math.exp %70 : vector<2x16x16xf32>
    %cst_32 = arith.constant dense<0.000000e+00> : vector<2x16xf32>
    %72 = vector.multi_reduction <add>, %71, %cst_32 [2] : vector<2x16x16xf32> to vector<2x16xf32>
    %73 = vector.shape_cast %72 : vector<2x16xf32> to vector<2x16x1xf32>
    %74 = tpu.reciprocal %73 {approx = true} : vector<2x16x1xf32> -> vector<2x16x1xf32>
    %75 = vector.broadcast %74 : vector<2x16x1xf32> to vector<2x16x16xf32>
    %76 = arith.mulf %71, %75 : vector<2x16x16xf32>
    %77 = arith.truncf %76 : vector<2x16x16xf32> to vector<2x16x16xbf16>
    %78 = vector.extract_strided_slice %31 {offsets = [0, 0, 16], sizes = [2, 16, 8], strides = [1, 1, 1]} : vector<2x16x32xbf16> to vector<2x16x8xbf16>
    "tpu.trace_start"() <{level = 10 : i32, message = "bnm,bmd->bnd"}> : () -> ()
    %cst_33 = arith.constant dense<0.000000e+00> : vector<2x16x8xf32>
    %79 = tpu.matmul %77, %78, %cst_33 {dimension_numbers = #tpu.dot_dimension_numbers<[2], [1], [1], [2], [0, 0, 0, 1, 1, 2], [0], [0]>} : vector<2x16x16xbf16>, vector<2x16x8xbf16>, vector<2x16x8xf32> -> vector<2x16x8xf32>
    "tpu.trace_stop"() : () -> ()
    %80 = vector.extract_strided_slice %27 {offsets = [0, 0, 24], sizes = [2, 16, 8], strides = [1, 1, 1]} : vector<2x16x32xbf16> to vector<2x16x8xbf16>
    %81 = vector.extract_strided_slice %29 {offsets = [0, 0, 24], sizes = [2, 16, 8], strides = [1, 1, 1]} : vector<2x16x32xbf16> to vector<2x16x8xbf16>
    "tpu.trace_start"() <{level = 10 : i32, message = "bnd,bmd->bnm"}> : () -> ()
    %cst_34 = arith.constant dense<0.000000e+00> : vector<2x16x16xf32>
    %82 = tpu.matmul %80, %81, %cst_34 {dimension_numbers = #tpu.dot_dimension_numbers<[2], [2], [1], [1], [0, 0, 0, 1, 1, 1], [0], [0]>} : vector<2x16x8xbf16>, vector<2x16x8xbf16>, vector<2x16x16xf32> -> vector<2x16x16xf32>
    "tpu.trace_stop"() : () -> ()
    %cst_35 = arith.constant dense<0xFF800000> : vector<2x16xf32>
    %83 = vector.multi_reduction <maximumf>, %82, %cst_35 [2] : vector<2x16x16xf32> to vector<2x16xf32>
    %84 = vector.shape_cast %83 : vector<2x16xf32> to vector<2x16x1xf32>
    %85 = vector.broadcast %84 : vector<2x16x1xf32> to vector<2x16x16xf32>
    %86 = arith.subf %82, %85 : vector<2x16x16xf32>
    %87 = math.exp %86 : vector<2x16x16xf32>
    %cst_36 = arith.constant dense<0.000000e+00> : vector<2x16xf32>
    %88 = vector.multi_reduction <add>, %87, %cst_36 [2] : vector<2x16x16xf32> to vector<2x16xf32>
    %89 = vector.shape_cast %88 : vector<2x16xf32> to vector<2x16x1xf32>
    %90 = tpu.reciprocal %89 {approx = true} : vector<2x16x1xf32> -> vector<2x16x1xf32>
    %91 = vector.broadcast %90 : vector<2x16x1xf32> to vector<2x16x16xf32>
    %92 = arith.mulf %87, %91 : vector<2x16x16xf32>
    %93 = arith.truncf %92 : vector<2x16x16xf32> to vector<2x16x16xbf16>
    %94 = vector.extract_strided_slice %31 {offsets = [0, 0, 24], sizes = [2, 16, 8], strides = [1, 1, 1]} : vector<2x16x32xbf16> to vector<2x16x8xbf16>
    "tpu.trace_start"() <{level = 10 : i32, message = "bnm,bmd->bnd"}> : () -> ()
    %cst_37 = arith.constant dense<0.000000e+00> : vector<2x16x8xf32>
    %95 = tpu.matmul %93, %94, %cst_37 {dimension_numbers = #tpu.dot_dimension_numbers<[2], [1], [1], [2], [0, 0, 0, 1, 1, 2], [0], [0]>} : vector<2x16x16xbf16>, vector<2x16x8xbf16>, vector<2x16x8xf32> -> vector<2x16x8xf32>
    "tpu.trace_stop"() : () -> ()
    %96 = tpu.concatenate %47, %63, %79, %95 in 2 : vector<2x16x8xf32>, vector<2x16x8xf32>, vector<2x16x8xf32>, vector<2x16x8xf32> -> vector<2x16x32xf32>
    %97 = vector.shape_cast %96 : vector<2x16x32xf32> to vector<32x32xf32>
    %98 = arith.truncf %97 : vector<32x32xf32> to vector<32x32xbf16>
    %c0_38 = arith.constant 0 : index
    %c0_39 = arith.constant 0 : index
    %c0_40 = arith.constant 0 : index
    %99 = vector.load %arg11[%c0_38, %c0_39, %c0_40] : memref<1x32x32xbf16, #tpu.memory_space<vmem>>, vector<1x32x32xbf16>
    %100 = vector.shape_cast %99 : vector<1x32x32xbf16> to vector<32x32xbf16>
    %cst_41 = arith.constant dense<0.000000e+00> : vector<32x32xf32>
    %101 = tpu.matmul %98, %100, %cst_41 {dimension_numbers = #tpu.dot_dimension_numbers<[1], [0], [0], [1], [0, 0, 1, 1], [], []>} : vector<32x32xbf16>, vector<32x32xbf16>, vector<32x32xf32> -> vector<32x32xf32>
    %c0_42 = arith.constant 0 : index
    %c0_43 = arith.constant 0 : index
    %c0_44 = arith.constant 0 : index
    %102 = vector.load %arg12[%c0_42, %c0_43, %c0_44] : memref<1x1x32xf32, #tpu.memory_space<vmem>>, vector<1x1x32xf32>
    %103 = vector.shape_cast %102 : vector<1x1x32xf32> to vector<1x32xf32>
    %104 = vector.broadcast %103 : vector<1x32xf32> to vector<32x32xf32>
    %105 = arith.addf %101, %104 : vector<32x32xf32>
    %106 = arith.addf %3, %105 : vector<32x32xf32>
    %c0_45 = arith.constant 0 : index
    %c0_46 = arith.constant 0 : index
    %c0_47 = arith.constant 0 : index
    %107 = vector.load %arg13[%c0_45, %c0_46, %c0_47] : memref<1x1x32xf32, #tpu.memory_space<vmem>>, vector<1x1x32xf32>
    %108 = vector.shape_cast %107 : vector<1x1x32xf32> to vector<1x32xf32>
    %c0_48 = arith.constant 0 : index
    %c0_49 = arith.constant 0 : index
    %c0_50 = arith.constant 0 : index
    %109 = vector.load %arg14[%c0_48, %c0_49, %c0_50] : memref<1x1x32xf32, #tpu.memory_space<vmem>>, vector<1x1x32xf32>
    %110 = vector.shape_cast %109 : vector<1x1x32xf32> to vector<1x32xf32>
    %cst_51 = arith.constant dense<0.000000e+00> : vector<32xf32>
    %111 = vector.multi_reduction <add>, %106, %cst_51 [1] : vector<32x32xf32> to vector<32xf32>
    %112 = vector.shape_cast %111 : vector<32xf32> to vector<32x1xf32>
    %cst_52 = arith.constant 3.200000e+01 : f32
    %113 = vector.broadcast %cst_52 : f32 to vector<32x1xf32>
    %114 = arith.divf %112, %113 : vector<32x1xf32>
    %115 = vector.broadcast %114 : vector<32x1xf32> to vector<32x32xf32>
    %116 = arith.subf %106, %115 : vector<32x32xf32>
    %117 = arith.mulf %116, %116 : vector<32x32xf32>
    %cst_53 = arith.constant dense<0.000000e+00> : vector<32xf32>
    %118 = vector.multi_reduction <add>, %117, %cst_53 [1] : vector<32x32xf32> to vector<32xf32>
    %119 = vector.shape_cast %118 : vector<32xf32> to vector<32x1xf32>
    %cst_54 = arith.constant 3.200000e+01 : f32
    %120 = vector.broadcast %cst_54 : f32 to vector<32x1xf32>
    %121 = arith.divf %119, %120 : vector<32x1xf32>
    %cst_55 = arith.constant 9.99999974E-6 : f32
    %122 = vector.broadcast %cst_55 : f32 to vector<32x1xf32>
    %123 = arith.addf %121, %122 : vector<32x1xf32>
    %124 = math.rsqrt %123 : vector<32x1xf32>
    %125 = vector.broadcast %124 : vector<32x1xf32> to vector<32x32xf32>
    %126 = arith.mulf %116, %125 : vector<32x32xf32>
    %127 = vector.broadcast %108 : vector<1x32xf32> to vector<32x32xf32>
    %128 = arith.mulf %126, %127 : vector<32x32xf32>
    %129 = vector.broadcast %110 : vector<1x32xf32> to vector<32x32xf32>
    %130 = arith.addf %128, %129 : vector<32x32xf32>
    %131 = arith.truncf %130 : vector<32x32xf32> to vector<32x32xbf16>
    %c0_56 = arith.constant 0 : index
    %c0_57 = arith.constant 0 : index
    %c0_58 = arith.constant 0 : index
    %132 = vector.load %arg15[%c0_56, %c0_57, %c0_58] : memref<1x32x64xbf16, #tpu.memory_space<vmem>>, vector<1x32x64xbf16>
    %133 = vector.shape_cast %132 : vector<1x32x64xbf16> to vector<32x64xbf16>
    %cst_59 = arith.constant dense<0.000000e+00> : vector<32x64xf32>
    %134 = tpu.matmul %131, %133, %cst_59 {dimension_numbers = #tpu.dot_dimension_numbers<[1], [0], [0], [1], [0, 0, 1, 1], [], []>} : vector<32x32xbf16>, vector<32x64xbf16>, vector<32x64xf32> -> vector<32x64xf32>
    %c0_60 = arith.constant 0 : index
    %c0_61 = arith.constant 0 : index
    %c0_62 = arith.constant 0 : index
    %135 = vector.load %arg16[%c0_60, %c0_61, %c0_62] : memref<1x1x64xf32, #tpu.memory_space<vmem>>, vector<1x1x64xf32>
    %136 = vector.shape_cast %135 : vector<1x1x64xf32> to vector<1x64xf32>
    %137 = vector.broadcast %136 : vector<1x64xf32> to vector<32x64xf32>
    %138 = arith.addf %134, %137 : vector<32x64xf32>
    %cst_63 = arith.constant 0.000000e+00 : f32
    %139 = vector.broadcast %cst_63 : f32 to vector<32x64xf32>
    %140 = arith.maximumf %138, %139 : vector<32x64xf32>
    %141 = arith.truncf %140 : vector<32x64xf32> to vector<32x64xbf16>
    %c0_64 = arith.constant 0 : index
    %c0_65 = arith.constant 0 : index
    %c0_66 = arith.constant 0 : index
    %142 = vector.load %arg17[%c0_64, %c0_65, %c0_66] : memref<1x64x32xbf16, #tpu.memory_space<vmem>>, vector<1x64x32xbf16>
    %143 = vector.shape_cast %142 : vector<1x64x32xbf16> to vector<64x32xbf16>
    %cst_67 = arith.constant dense<0.000000e+00> : vector<32x32xf32>
    %144 = tpu.matmul %141, %143, %cst_67 {dimension_numbers = #tpu.dot_dimension_numbers<[1], [0], [0], [1], [0, 0, 1, 1], [], []>} : vector<32x64xbf16>, vector<64x32xbf16>, vector<32x32xf32> -> vector<32x32xf32>
    %c0_68 = arith.constant 0 : index
    %c0_69 = arith.constant 0 : index
    %c0_70 = arith.constant 0 : index
    %145 = vector.load %arg18[%c0_68, %c0_69, %c0_70] : memref<1x1x32xf32, #tpu.memory_space<vmem>>, vector<1x1x32xf32>
    %146 = vector.shape_cast %145 : vector<1x1x32xf32> to vector<1x32xf32>
    %147 = vector.broadcast %146 : vector<1x32xf32> to vector<32x32xf32>
    %148 = arith.addf %144, %147 : vector<32x32xf32>
    %149 = arith.addf %130, %148 : vector<32x32xf32>
    %c0_71 = arith.constant 0 : index
    %c0_72 = arith.constant 0 : index
    %c0_73 = arith.constant 0 : index
    %150 = vector.load %arg19[%c0_71, %c0_72, %c0_73] : memref<1x1x32xf32, #tpu.memory_space<vmem>>, vector<1x1x32xf32>
    %151 = vector.shape_cast %150 : vector<1x1x32xf32> to vector<1x32xf32>
    %c0_74 = arith.constant 0 : index
    %c0_75 = arith.constant 0 : index
    %c0_76 = arith.constant 0 : index
    %152 = vector.load %arg20[%c0_74, %c0_75, %c0_76] : memref<1x1x32xf32, #tpu.memory_space<vmem>>, vector<1x1x32xf32>
    %153 = vector.shape_cast %152 : vector<1x1x32xf32> to vector<1x32xf32>
    %cst_77 = arith.constant dense<0.000000e+00> : vector<32xf32>
    %154 = vector.multi_reduction <add>, %149, %cst_77 [1] : vector<32x32xf32> to vector<32xf32>
    %155 = vector.shape_cast %154 : vector<32xf32> to vector<32x1xf32>
    %cst_78 = arith.constant 3.200000e+01 : f32
    %156 = vector.broadcast %cst_78 : f32 to vector<32x1xf32>
    %157 = arith.divf %155, %156 : vector<32x1xf32>
    %158 = vector.broadcast %157 : vector<32x1xf32> to vector<32x32xf32>
    %159 = arith.subf %149, %158 : vector<32x32xf32>
    %160 = arith.mulf %159, %159 : vector<32x32xf32>
    %cst_79 = arith.constant dense<0.000000e+00> : vector<32xf32>
    %161 = vector.multi_reduction <add>, %160, %cst_79 [1] : vector<32x32xf32> to vector<32xf32>
    %162 = vector.shape_cast %161 : vector<32xf32> to vector<32x1xf32>
    %cst_80 = arith.constant 3.200000e+01 : f32
    %163 = vector.broadcast %cst_80 : f32 to vector<32x1xf32>
    %164 = arith.divf %162, %163 : vector<32x1xf32>
    %cst_81 = arith.constant 9.99999974E-6 : f32
    %165 = vector.broadcast %cst_81 : f32 to vector<32x1xf32>
    %166 = arith.addf %164, %165 : vector<32x1xf32>
    %167 = math.rsqrt %166 : vector<32x1xf32>
    %168 = vector.broadcast %167 : vector<32x1xf32> to vector<32x32xf32>
    %169 = arith.mulf %159, %168 : vector<32x32xf32>
    %170 = vector.broadcast %151 : vector<1x32xf32> to vector<32x32xf32>
    %171 = arith.mulf %169, %170 : vector<32x32xf32>
    %172 = vector.broadcast %153 : vector<1x32xf32> to vector<32x32xf32>
    %173 = arith.addf %171, %172 : vector<32x32xf32>
    %c0_82 = arith.constant 0 : index
    %c0_83 = arith.constant 0 : index
    %174 = vector.load %arg24[%c0_82, %c0_83] : memref<32x32xf32, #tpu.memory_space<vmem>>, vector<32x32xf32>
    tpu.vector_store %arg24[%c0_82, %c0_83], %173 {strides = array<i32>} : memref<32x32xf32, #tpu.memory_space<vmem>>, vector<32x32xf32>,
    %c1_i32 = arith.constant 1 : i32
    %175 = arith.cmpi eq, %arg0, %c1_i32 : i32
    %176 = arith.extui %175 : i1 to i32
    %c0_i32_84 = arith.constant 0 : i32
    %177 = arith.cmpi ne, %176, %c0_i32_84 : i32
    scf.if %177 {
      %178 = arith.truncf %173 : vector<32x32xf32> to vector<32x32xbf16>
      %c0_85 = arith.constant 0 : index
      %c0_86 = arith.constant 0 : index
      %179 = vector.load %arg21[%c0_85, %c0_86] : memref<32x128xbf16, #tpu.memory_space<vmem>>, vector<32x128xbf16>
      %cst_87 = arith.constant dense<0.000000e+00> : vector<32x128xf32>
      %180 = tpu.matmul %178, %179, %cst_87 {dimension_numbers = #tpu.dot_dimension_numbers<[1], [0], [0], [1], [0, 0, 1, 1], [], []>} : vector<32x32xbf16>, vector<32x128xbf16>, vector<32x128xf32> -> vector<32x128xf32>
      %c0_88 = arith.constant 0 : index
      %c0_89 = arith.constant 0 : index
      %181 = vector.load %arg22[%c0_88, %c0_89] : memref<1x128xf32, #tpu.memory_space<vmem>>, vector<1x128xf32>
      %182 = vector.broadcast %181 : vector<1x128xf32> to vector<32x128xf32>
      %183 = arith.addf %180, %182 : vector<32x128xf32>
      %184 = vector.shape_cast %183 : vector<32x128xf32> to vector<2x16x128xf32>
      %c0_90 = arith.constant 0 : index
      %c0_91 = arith.constant 0 : index
      %c0_92 = arith.constant 0 : index
      %185 = vector.load %arg23[%c0_90, %c0_91, %c0_92] : memref<2x16x128xf32, #tpu.memory_space<vmem>>, vector<2x16x128xf32>
      tpu.vector_store %arg23[%c0_90, %c0_91, %c0_92], %184 {strides = array<i32>} : memref<2x16x128xf32, #tpu.memory_space<vmem>>, vector<2x16x128xf32>,
    } else {
    }
    return
  }
  func.func @transform_0(%arg0: i32) -> (i32, i32, i32) {
    %c0_i32 = arith.constant 0 : i32
    %c0_i32_0 = arith.constant 0 : i32
    %c0_i32_1 = arith.constant 0 : i32
    %c0_i32_2 = arith.constant 0 : i32
    return %c0_i32, %c0_i32_0, %c0_i32_1 : i32, i32, i32
  }
  func.func @transform_1(%arg0: i32) -> (i32, i32) {
    %c0_i32 = arith.constant 0 : i32
    %c0_i32_0 = arith.constant 0 : i32
    %c0_i32_1 = arith.constant 0 : i32
    return %c0_i32, %c0_i32_0 : i32, i32
  }
  func.func @transform_2(%arg0: i32) -> (i32, i32) {
    %c0_i32 = arith.constant 0 : i32
    %c0_i32_0 = arith.constant 0 : i32
    %c0_i32_1 = arith.constant 0 : i32
    return %c0_i32, %c0_i32_0 : i32, i32
  }
  func.func @transform_3(%arg0: i32) -> (i32, i32) {
    %c0_i32 = arith.constant 0 : i32
    %c0_i32_0 = arith.constant 0 : i32
    %c0_i32_1 = arith.constant 0 : i32
    return %c0_i32, %c0_i32_0 : i32, i32
  }
  func.func @transform_4(%arg0: i32) -> (i32, i32, i32) {
    %c0_i32 = arith.constant 0 : i32
    %c0_i32_0 = arith.constant 0 : i32
    %c0_i32_1 = arith.constant 0 : i32
    return %arg0, %c0_i32, %c0_i32_0 : i32, i32, i32
  }
  func.func @transform_5(%arg0: i32) -> (i32, i32, i32) {
    %c0_i32 = arith.constant 0 : i32
    %c0_i32_0 = arith.constant 0 : i32
    %c0_i32_1 = arith.constant 0 : i32
    return %arg0, %c0_i32, %c0_i32_0 : i32, i32, i32
  }
  func.func @transform_6(%arg0: i32) -> (i32, i32, i32) {
    %c0_i32 = arith.constant 0 : i32
    %c0_i32_0 = arith.constant 0 : i32
    %c0_i32_1 = arith.constant 0 : i32
    return %arg0, %c0_i32, %c0_i32_0 : i32, i32, i32
  }
  func.func @transform_7(%arg0: i32) -> (i32, i32, i32) {
    %c0_i32 = arith.constant 0 : i32
    %c0_i32_0 = arith.constant 0 : i32
    %c0_i32_1 = arith.constant 0 : i32
    return %arg0, %c0_i32, %c0_i32_0 : i32, i32, i32
  }
  func.func @transform_8(%arg0: i32) -> (i32, i32, i32) {
    %c0_i32 = arith.constant 0 : i32
    %c0_i32_0 = arith.constant 0 : i32
    %c0_i32_1 = arith.constant 0 : i32
    return %arg0, %c0_i32, %c0_i32_0 : i32, i32, i32
  }
  func.func @transform_9(%arg0: i32) -> (i32, i32, i32) {
    %c0_i32 = arith.constant 0 : i32
    %c0_i32_0 = arith.constant 0 : i32
    %c0_i32_1 = arith.constant 0 : i32
    return %arg0, %c0_i32, %c0_i32_0 : i32, i32, i32
  }
  func.func @transform_10(%arg0: i32) -> (i32, i32, i32) {
    %c0_i32 = arith.constant 0 : i32
    %c0_i32_0 = arith.constant 0 : i32
    %c0_i32_1 = arith.constant 0 : i32
    return %arg0, %c0_i32, %c0_i32_0 : i32, i32, i32
  }
  func.func @transform_11(%arg0: i32) -> (i32, i32, i32) {
    %c0_i32 = arith.constant 0 : i32
    %c0_i32_0 = arith.constant 0 : i32
    %c0_i32_1 = arith.constant 0 : i32
    return %arg0, %c0_i32, %c0_i32_0 : i32, i32, i32
  }
  func.func @transform_12(%arg0: i32) -> (i32, i32, i32) {
    %c0_i32 = arith.constant 0 : i32
    %c0_i32_0 = arith.constant 0 : i32
    %c0_i32_1 = arith.constant 0 : i32
    return %arg0, %c0_i32, %c0_i32_0 : i32, i32, i32
  }
  func.func @transform_13(%arg0: i32) -> (i32, i32, i32) {
    %c0_i32 = arith.constant 0 : i32
    %c0_i32_0 = arith.constant 0 : i32
    %c0_i32_1 = arith.constant 0 : i32
    return %arg0, %c0_i32, %c0_i32_0 : i32, i32, i32
  }
  func.func @transform_14(%arg0: i32) -> (i32, i32, i32) {
    %c0_i32 = arith.constant 0 : i32
    %c0_i32_0 = arith.constant 0 : i32
    %c0_i32_1 = arith.constant 0 : i32
    return %arg0, %c0_i32, %c0_i32_0 : i32, i32, i32
  }
  func.func @transform_15(%arg0: i32) -> (i32, i32, i32) {
    %c0_i32 = arith.constant 0 : i32
    %c0_i32_0 = arith.constant 0 : i32
    %c0_i32_1 = arith.constant 0 : i32
    return %arg0, %c0_i32, %c0_i32_0 : i32, i32, i32
  }
  func.func @transform_16(%arg0: i32) -> (i32, i32, i32) {
    %c0_i32 = arith.constant 0 : i32
    %c0_i32_0 = arith.constant 0 : i32
    %c0_i32_1 = arith.constant 0 : i32
    return %arg0, %c0_i32, %c0_i32_0 : i32, i32, i32
  }
  func.func @transform_17(%arg0: i32) -> (i32, i32, i32) {
    %c0_i32 = arith.constant 0 : i32
    %c0_i32_0 = arith.constant 0 : i32
    %c0_i32_1 = arith.constant 0 : i32
    return %arg0, %c0_i32, %c0_i32_0 : i32, i32, i32
  }
  func.func @transform_18(%arg0: i32) -> (i32, i32, i32) {
    %c0_i32 = arith.constant 0 : i32
    %c0_i32_0 = arith.constant 0 : i32
    %c0_i32_1 = arith.constant 0 : i32
    return %arg0, %c0_i32, %c0_i32_0 : i32, i32, i32
  }
  func.func @transform_19(%arg0: i32) -> (i32, i32, i32) {
    %c0_i32 = arith.constant 0 : i32
    %c0_i32_0 = arith.constant 0 : i32
    %c0_i32_1 = arith.constant 0 : i32
    return %arg0, %c0_i32, %c0_i32_0 : i32, i32, i32
  }
  func.func @transform_20(%arg0: i32) -> (i32, i32) {
    %c0_i32 = arith.constant 0 : i32
    %c0_i32_0 = arith.constant 0 : i32
    %c0_i32_1 = arith.constant 0 : i32
    return %c0_i32, %c0_i32_0 : i32, i32
  }
  func.func @transform_21(%arg0: i32) -> (i32, i32) {
    %c0_i32 = arith.constant 0 : i32
    %c0_i32_0 = arith.constant 0 : i32
    %c0_i32_1 = arith.constant 0 : i32
    return %c0_i32, %c0_i32_0 : i32, i32
  }
  func.func @transform_22(%arg0: i32) -> (i32, i32, i32) {
    %c0_i32 = arith.constant 0 : i32
    %c0_i32_0 = arith.constant 0 : i32
    %c0_i32_1 = arith.constant 0 : i32
    %c0_i32_2 = arith.constant 0 : i32
    return %c0_i32, %c0_i32_0, %c0_i32_1 : i32, i32, i32
  }
}

</mosaic_0001>

<llo_original>
// kernel: vit_segmentation_forward.1
$region0: #{vit_segmentation_forward.1}
  #allocation0 [shape = 'u32[]', space=smem, size = 0x4, offset = 0x4, fixed_abs, tag = 'smem constant byte address 0x4 - core index']
  #allocation1 [shape = 'u32[144,128]{1,0:T(1,128)}', space=vmem, size = 0x12000, scoped, tag = 'internal scratch']
  #allocation2 [shape = 'f32[32,32]{1,0:T(8,128)}', space=vmem, size = 0x4000, scoped, tag = 'scratch operand']
  %s0 = inlined_call_operand.vmem [shape: bf16[2,16,64], index: 0, kind: input, shape index: {}]
  %s1 = inlined_call_operand.vmem [shape: bf16[64,32], index: 1, kind: input, shape index: {}]
  %s2 = inlined_call_operand.vmem [shape: f32[1,32], index: 2, kind: input, shape index: {}]
  %s3 = inlined_call_operand.vmem [shape: f32[16,32], index: 3, kind: input, shape index: {}]
  %s4 = inlined_call_operand.vmem [shape: bf16[2,32,32], index: 4, kind: input, shape index: {}]
  %s5 = inlined_call_operand.vmem [shape: f32[2,1,32], index: 5, kind: input, shape index: {}]
  %s6 = inlined_call_operand.vmem [shape: bf16[2,32,32], index: 6, kind: input, shape index: {}]
  %s7 = inlined_call_operand.vmem [shape: f32[2,1,32], index: 7, kind: input, shape index: {}]
  %s8 = inlined_call_operand.vmem [shape: bf16[2,32,32], index: 8, kind: input, shape index: {}]
  %s9 = inlined_call_operand.vmem [shape: f32[2,1,32], index: 9, kind: input, shape index: {}]
  %s10 = inlined_call_operand.vmem [shape: bf16[2,32,32], index: 10, kind: input, shape index: {}]
  %s11 = inlined_call_operand.vmem [shape: f32[2,1,32], index: 11, kind: input, shape index: {}]
  %s12 = inlined_call_operand.vmem [shape: f32[2,1,32], index: 12, kind: input, shape index: {}]
  %s13 = inlined_call_operand.vmem [shape: f32[2,1,32], index: 13, kind: input, shape index: {}]
  %s14 = inlined_call_operand.vmem [shape: bf16[2,32,64], index: 14, kind: input, shape index: {}]
  %s15 = inlined_call_operand.vmem [shape: f32[2,1,64], index: 15, kind: input, shape index: {}]
  %s16 = inlined_call_operand.vmem [shape: bf16[2,64,32], index: 16, kind: input, shape index: {}]
  %s17 = inlined_call_operand.vmem [shape: f32[2,1,32], index: 17, kind: input, shape index: {}]
  %s18 = inlined_call_operand.vmem [shape: f32[2,1,32], index: 18, kind: input, shape index: {}]
  %s19 = inlined_call_operand.vmem [shape: f32[2,1,32], index: 19, kind: input, shape index: {}]
  %s20 = inlined_call_operand.vmem [shape: bf16[32,128], index: 20, kind: input, shape index: {}]
  %s21 = inlined_call_operand.vmem [shape: f32[1,128], index: 21, kind: input, shape index: {}]
  %s22 = inlined_call_operand.vmem [shape: f32[2,16,128], index: 22, kind: output, shape index: {}]
  %s23 = sld [smem:[#allocation0]]
  $region129: #{vit_segmentation_forward.1} parent=0
    _
  %s25 = ssub.s32 1, %s23
  %s26 = scalar_select 0, %s25, %s23
  loop: start=0, step=1, limit=4
  $region2: #{vit_segmentation_forward.1} parent=0 // loop_pre_header
    _
  $region3: #{vit_segmentation_forward.1} parent=0 // loop_header
    %s28 = sphi 0, %s32
    %p29 = scmp.ge.s32.totalorder %s28, 4
    %s36 = sphi 0, %s36
    %s38 = sphi 0, %s36
    %s39 = sphi 0, %s38
    %s53 = sphi 0, %s39
    %s57 = sphi 0, %s57
    %s59 = sphi 0, %s57
    %s60 = sphi 0, %s59
    %s74 = sphi 0, %s60
    %s78 = sphi 0, %s78
    %s80 = sphi 0, %s78
    %s81 = sphi 0, %s80
    %s95 = sphi 0, %s81
    %s99 = sphi 0, %s99
    %s101 = sphi 0, %s99
    %s102 = sphi 0, %s101
    %s116 = sphi 0, %s102
    %s122 = sphi 0, %s124
    %s125 = sphi 0, %s122
    %s126 = sphi 0, %s125
    %s142 = sphi 0, %s126
    %s148 = sphi 0, %s150
    %s151 = sphi 0, %s148
    %s152 = sphi 0, %s151
    %s168 = sphi 0, %s152
    %s174 = sphi 0, %s176
    %s177 = sphi 0, %s174
    %s178 = sphi 0, %s177
    %s194 = sphi 0, %s178
    %s200 = sphi 0, %s202
    %s203 = sphi 0, %s200
    %s204 = sphi 0, %s203
    %s220 = sphi 0, %s204
    %s226 = sphi 0, %s228
    %s229 = sphi 0, %s226
    %s230 = sphi 0, %s229
    %s246 = sphi 0, %s230
    %s252 = sphi 0, %s254
    %s255 = sphi 0, %s252
    %s256 = sphi 0, %s255
    %s272 = sphi 0, %s256
    %s278 = sphi 0, %s280
    %s281 = sphi 0, %s278
    %s282 = sphi 0, %s281
    %s298 = sphi 0, %s282
    %s304 = sphi 0, %s306
    %s307 = sphi 0, %s304
    %s308 = sphi 0, %s307
    %s324 = sphi 0, %s308
    %s330 = sphi 0, %s332
    %s333 = sphi 0, %s330
    %s334 = sphi 0, %s333
    %s350 = sphi 0, %s334
    %s356 = sphi 0, %s358
    %s359 = sphi 0, %s356
    %s360 = sphi 0, %s359
    %s376 = sphi 0, %s360
    %s382 = sphi 0, %s384
    %s385 = sphi 0, %s382
    %s386 = sphi 0, %s385
    %s402 = sphi 0, %s386
    %s408 = sphi 0, %s410
    %s411 = sphi 0, %s408
    %s412 = sphi 0, %s411
    %s428 = sphi 0, %s412
    %s434 = sphi 0, %s436
    %s437 = sphi 0, %s434
    %s438 = sphi 0, %s437
    %s454 = sphi 0, %s438
    %s460 = sphi 0, %s462
    %s463 = sphi 0, %s460
    %s464 = sphi 0, %s463
    %s480 = sphi 0, %s464
    %s486 = sphi 0, %s488
    %s489 = sphi 0, %s486
    %s490 = sphi 0, %s489
    %s506 = sphi 0, %s490
    %s512 = sphi 0, %s514
    %s515 = sphi 0, %s512
    %s516 = sphi 0, %s515
    %s532 = sphi 0, %s516
    %s536 = sphi 0, %s536
    %s538 = sphi 0, %s536
    %s539 = sphi 0, %s538
    %s553 = sphi 0, %s539
    %s557 = sphi 0, %s557
    %s559 = sphi 0, %s557
    %s560 = sphi 0, %s559
    %s574 = sphi 0, %s560
    %s578 = sphi 0, %s578
    %s580 = sphi 0, %s578
    %s581 = sphi 0, %s580
    %s595 = sphi 0, %s581
  $region4: #{vit_segmentation_forward.1} parent=0 // loop_header_branch
    %31 = sbr.rel (%p29) target = $region8
  $region5: #{vit_segmentation_forward.1} parent=0 // loop_body
    %s33 = ssub.s32 %s28, 1
    %s34 = ssub.s32 %s28, 2
    %s35 = sadd.s32 %s28, 1
    %s37 = sadd.s32 %s36, 1
    %p40 = scmp.eq.s32.totalorder %s28, 1
    %p41 = scmp.ne.s32.totalorder %s36, %s38
    %p42 = scmp.eq.s32.totalorder %s28, 0
    %p43 = por %p41, %p42
    %p44 = scmp.ne.s32.totalorder %s36, %s38
    %p45 = scmp.eq.s32.totalorder %s33, 1
    %p46 = por %p44, %p45
    %p47 = scmp.ne.s32.totalorder %s38, %s39
    %p48 = scmp.eq.s32.totalorder %s33, 0
    %p49 = por %p47, %p48
    %p50 = scmp.ne.s32.totalorder %s38, %s39
    %p51 = scmp.eq.s32.totalorder %s34, 1
    %p52 = por %p50, %p51
    %p54 = scmp.ne.s32.totalorder %s39, %s53
    %p55 = scmp.eq.s32.totalorder %s34, 0
    %p56 = por %p54, %p55
    %s58 = sadd.s32 %s57, 1
    %p61 = scmp.eq.s32.totalorder %s28, 1
    %p62 = scmp.ne.s32.totalorder %s57, %s59
    %p63 = scmp.eq.s32.totalorder %s28, 0
    %p64 = por %p62, %p63
    %p65 = scmp.ne.s32.totalorder %s57, %s59
    %p66 = scmp.eq.s32.totalorder %s33, 1
    %p67 = por %p65, %p66
    %p68 = scmp.ne.s32.totalorder %s59, %s60
    %p69 = scmp.eq.s32.totalorder %s33, 0
    %p70 = por %p68, %p69
    %p71 = scmp.ne.s32.totalorder %s59, %s60
    %p72 = scmp.eq.s32.totalorder %s34, 1
    %p73 = por %p71, %p72
    %p75 = scmp.ne.s32.totalorder %s60, %s74
    %p76 = scmp.eq.s32.totalorder %s34, 0
    %p77 = por %p75, %p76
    %s79 = sadd.s32 %s78, 1
    %p82 = scmp.eq.s32.totalorder %s28, 1
    %p83 = scmp.ne.s32.totalorder %s78, %s80
    %p84 = scmp.eq.s32.totalorder %s28, 0
    %p85 = por %p83, %p84
    %p86 = scmp.ne.s32.totalorder %s78, %s80
    %p87 = scmp.eq.s32.totalorder %s33, 1
    %p88 = por %p86, %p87
    %p89 = scmp.ne.s32.totalorder %s80, %s81
    %p90 = scmp.eq.s32.totalorder %s33, 0
    %p91 = por %p89, %p90
    %p92 = scmp.ne.s32.totalorder %s80, %s81
    %p93 = scmp.eq.s32.totalorder %s34, 1
    %p94 = por %p92, %p93
    %p96 = scmp.ne.s32.totalorder %s81, %s95
    %p97 = scmp.eq.s32.totalorder %s34, 0
    %p98 = por %p96, %p97
    %s100 = sadd.s32 %s99, 1
    %p103 = scmp.eq.s32.totalorder %s28, 1
    %p104 = scmp.ne.s32.totalorder %s99, %s101
    %p105 = scmp.eq.s32.totalorder %s28, 0
    %p106 = por %p104, %p105
    %p107 = scmp.ne.s32.totalorder %s99, %s101
    %p108 = scmp.eq.s32.totalorder %s33, 1
    %p109 = por %p107, %p108
    %p110 = scmp.ne.s32.totalorder %s101, %s102
    %p111 = scmp.eq.s32.totalorder %s33, 0
    %p112 = por %p110, %p111
    %p113 = scmp.ne.s32.totalorder %s101, %s102
    %p114 = scmp.eq.s32.totalorder %s34, 1
    %p115 = por %p113, %p114
    %p117 = scmp.ne.s32.totalorder %s102, %s116
    %p118 = scmp.eq.s32.totalorder %s34, 0
    %p119 = por %p117, %p118
    %s120 = ssub.s32 %s28, %s35
    %p121 = scmp.eq.s32.totalorder %s120, 0
    %s123 = sadd.s32 %s122, 1
    %s124 = scalar_select %p121, %s122, %s123
    %p127 = pneg %p121
    %p128 = scmp.eq.s32.totalorder %s28, 1
    %p129 = por %p127, %p128
    %p130 = scmp.ne.s32.totalorder %s122, %s125
    %p131 = scmp.eq.s32.totalorder %s28, 0
    %p132 = por %p130, %p131
    %p133 = scmp.ne.s32.totalorder %s122, %s125
    %p134 = scmp.eq.s32.totalorder %s33, 1
    %p135 = por %p133, %p134
    %p136 = scmp.ne.s32.totalorder %s125, %s126
    %p137 = scmp.eq.s32.totalorder %s33, 0
    %p138 = por %p136, %p137
    %p139 = scmp.ne.s32.totalorder %s125, %s126
    %p140 = scmp.eq.s32.totalorder %s34, 1
    %p141 = por %p139, %p140
    %p143 = scmp.ne.s32.totalorder %s126, %s142
    %p144 = scmp.eq.s32.totalorder %s34, 0
    %p145 = por %p143, %p144
    %s146 = ssub.s32 %s28, %s35
    %p147 = scmp.eq.s32.totalorder %s146, 0
    %s149 = sadd.s32 %s148, 1
    %s150 = scalar_select %p147, %s148, %s149
    %p153 = pneg %p147
    %p154 = scmp.eq.s32.totalorder %s28, 1
    %p155 = por %p153, %p154
    %p156 = scmp.ne.s32.totalorder %s148, %s151
    %p157 = scmp.eq.s32.totalorder %s28, 0
    %p158 = por %p156, %p157
    %p159 = scmp.ne.s32.totalorder %s148, %s151
    %p160 = scmp.eq.s32.totalorder %s33, 1
    %p161 = por %p159, %p160
    %p162 = scmp.ne.s32.totalorder %s151, %s152
    %p163 = scmp.eq.s32.totalorder %s33, 0
    %p164 = por %p162, %p163
    %p165 = scmp.ne.s32.totalorder %s151, %s152
    %p166 = scmp.eq.s32.totalorder %s34, 1
    %p167 = por %p165, %p166
    %p169 = scmp.ne.s32.totalorder %s152, %s168
    %p170 = scmp.eq.s32.totalorder %s34, 0
    %p171 = por %p169, %p170
    %s172 = ssub.s32 %s28, %s35
    %p173 = scmp.eq.s32.totalorder %s172, 0
    %s175 = sadd.s32 %s174, 1
    %s176 = scalar_select %p173, %s174, %s175
    %p179 = pneg %p173
    %p180 = scmp.eq.s32.totalorder %s28, 1
    %p181 = por %p179, %p180
    %p182 = scmp.ne.s32.totalorder %s174, %s177
    %p183 = scmp.eq.s32.totalorder %s28, 0
    %p184 = por %p182, %p183
    %p185 = scmp.ne.s32.totalorder %s174, %s177
    %p186 = scmp.eq.s32.totalorder %s33, 1
    %p187 = por %p185, %p186
    %p188 = scmp.ne.s32.totalorder %s177, %s178
    %p189 = scmp.eq.s32.totalorder %s33, 0
    %p190 = por %p188, %p189
    %p191 = scmp.ne.s32.totalorder %s177, %s178
    %p192 = scmp.eq.s32.totalorder %s34, 1
    %p193 = por %p191, %p192
    %p195 = scmp.ne.s32.totalorder %s178, %s194
    %p196 = scmp.eq.s32.totalorder %s34, 0
    %p197 = por %p195, %p196
    %s198 = ssub.s32 %s28, %s35
    %p199 = scmp.eq.s32.totalorder %s198, 0
    %s201 = sadd.s32 %s200, 1
    %s202 = scalar_select %p199, %s200, %s201
    %p205 = pneg %p199
    %p206 = scmp.eq.s32.totalorder %s28, 1
    %p207 = por %p205, %p206
    %p208 = scmp.ne.s32.totalorder %s200, %s203
    %p209 = scmp.eq.s32.totalorder %s28, 0
    %p210 = por %p208, %p209
    %p211 = scmp.ne.s32.totalorder %s200, %s203
    %p212 = scmp.eq.s32.totalorder %s33, 1
    %p213 = por %p211, %p212
    %p214 = scmp.ne.s32.totalorder %s203, %s204
    %p215 = scmp.eq.s32.totalorder %s33, 0
    %p216 = por %p214, %p215
    %p217 = scmp.ne.s32.totalorder %s203, %s204
    %p218 = scmp.eq.s32.totalorder %s34, 1
    %p219 = por %p217, %p218
    %p221 = scmp.ne.s32.totalorder %s204, %s220
    %p222 = scmp.eq.s32.totalorder %s34, 0
    %p223 = por %p221, %p222
    %s224 = ssub.s32 %s28, %s35
    %p225 = scmp.eq.s32.totalorder %s224, 0
    %s227 = sadd.s32 %s226, 1
    %s228 = scalar_select %p225, %s226, %s227
    %p231 = pneg %p225
    %p232 = scmp.eq.s32.totalorder %s28, 1
    %p233 = por %p231, %p232
    %p234 = scmp.ne.s32.totalorder %s226, %s229
    %p235 = scmp.eq.s32.totalorder %s28, 0
    %p236 = por %p234, %p235
    %p237 = scmp.ne.s32.totalorder %s226, %s229
    %p238 = scmp.eq.s32.totalorder %s33, 1
    %p239 = por %p237, %p238
    %p240 = scmp.ne.s32.totalorder %s229, %s230
    %p241 = scmp.eq.s32.totalorder %s33, 0
    %p242 = por %p240, %p241
    %p243 = scmp.ne.s32.totalorder %s229, %s230
    %p244 = scmp.eq.s32.totalorder %s34, 1
    %p245 = por %p243, %p244
    %p247 = scmp.ne.s32.totalorder %s230, %s246
    %p248 = scmp.eq.s32.totalorder %s34, 0
    %p249 = por %p247, %p248
    %s250 = ssub.s32 %s28, %s35
    %p251 = scmp.eq.s32.totalorder %s250, 0
    %s253 = sadd.s32 %s252, 1
    %s254 = scalar_select %p251, %s252, %s253
    %p257 = pneg %p251
    %p258 = scmp.eq.s32.totalorder %s28, 1
    %p259 = por %p257, %p258
    %p260 = scmp.ne.s32.totalorder %s252, %s255
    %p261 = scmp.eq.s32.totalorder %s28, 0
    %p262 = por %p260, %p261
    %p263 = scmp.ne.s32.totalorder %s252, %s255
    %p264 = scmp.eq.s32.totalorder %s33, 1
    %p265 = por %p263, %p264
    %p266 = scmp.ne.s32.totalorder %s255, %s256
    %p267 = scmp.eq.s32.totalorder %s33, 0
    %p268 = por %p266, %p267
    %p269 = scmp.ne.s32.totalorder %s255, %s256
    %p270 = scmp.eq.s32.totalorder %s34, 1
    %p271 = por %p269, %p270
    %p273 = scmp.ne.s32.totalorder %s256, %s272
    %p274 = scmp.eq.s32.totalorder %s34, 0
    %p275 = por %p273, %p274
    %s276 = ssub.s32 %s28, %s35
    %p277 = scmp.eq.s32.totalorder %s276, 0
    %s279 = sadd.s32 %s278, 1
    %s280 = scalar_select %p277, %s278, %s279
    %p283 = pneg %p277
    %p284 = scmp.eq.s32.totalorder %s28, 1
    %p285 = por %p283, %p284
    %p286 = scmp.ne.s32.totalorder %s278, %s281
    %p287 = scmp.eq.s32.totalorder %s28, 0
    %p288 = por %p286, %p287
    %p289 = scmp.ne.s32.totalorder %s278, %s281
    %p290 = scmp.eq.s32.totalorder %s33, 1
    %p291 = por %p289, %p290
    %p292 = scmp.ne.s32.totalorder %s281, %s282
    %p293 = scmp.eq.s32.totalorder %s33, 0
    %p294 = por %p292, %p293
    %p295 = scmp.ne.s32.totalorder %s281, %s282
    %p296 = scmp.eq.s32.totalorder %s34, 1
    %p297 = por %p295, %p296
    %p299 = scmp.ne.s32.totalorder %s282, %s298
    %p300 = scmp.eq.s32.totalorder %s34, 0
    %p301 = por %p299, %p300
    %s302 = ssub.s32 %s28, %s35
    %p303 = scmp.eq.s32.totalorder %s302, 0
    %s305 = sadd.s32 %s304, 1
    %s306 = scalar_select %p303, %s304, %s305
    %p309 = pneg %p303
    %p310 = scmp.eq.s32.totalorder %s28, 1
    %p311 = por %p309, %p310
    %p312 = scmp.ne.s32.totalorder %s304, %s307
    %p313 = scmp.eq.s32.totalorder %s28, 0
    %p314 = por %p312, %p313
    %p315 = scmp.ne.s32.totalorder %s304, %s307
    %p316 = scmp.eq.s32.totalorder %s33, 1
    %p317 = por %p315, %p316
    %p318 = scmp.ne.s32.totalorder %s307, %s308
    %p319 = scmp.eq.s32.totalorder %s33, 0
    %p320 = por %p318, %p319
    %p321 = scmp.ne.s32.totalorder %s307, %s308
    %p322 = scmp.eq.s32.totalorder %s34, 1
    %p323 = por %p321, %p322
    %p325 = scmp.ne.s32.totalorder %s308, %s324
    %p326 = scmp.eq.s32.totalorder %s34, 0
    %p327 = por %p325, %p326
    %s328 = ssub.s32 %s28, %s35
    %p329 = scmp.eq.s32.totalorder %s328, 0
    %s331 = sadd.s32 %s330, 1
    %s332 = scalar_select %p329, %s330, %s331
    %p335 = pneg %p329
    %p336 = scmp.eq.s32.totalorder %s28, 1
    %p337 = por %p335, %p336
    %p338 = scmp.ne.s32.totalorder %s330, %s333
    %p339 = scmp.eq.s32.totalorder %s28, 0
    %p340 = por %p338, %p339
    %p341 = scmp.ne.s32.totalorder %s330, %s333
    %p342 = scmp.eq.s32.totalorder %s33, 1
    %p343 = por %p341, %p342
    %p344 = scmp.ne.s32.totalorder %s333, %s334
    %p345 = scmp.eq.s32.totalorder %s33, 0
    %p346 = por %p344, %p345
    %p347 = scmp.ne.s32.totalorder %s333, %s334
    %p348 = scmp.eq.s32.totalorder %s34, 1
    %p349 = por %p347, %p348
    %p351 = scmp.ne.s32.totalorder %s334, %s350
    %p352 = scmp.eq.s32.totalorder %s34, 0
    %p353 = por %p351, %p352
    %s354 = ssub.s32 %s28, %s35
    %p355 = scmp.eq.s32.totalorder %s354, 0
    %s357 = sadd.s32 %s356, 1
    %s358 = scalar_select %p355, %s356, %s357
    %p361 = pneg %p355
    %p362 = scmp.eq.s32.totalorder %s28, 1
    %p363 = por %p361, %p362
    %p364 = scmp.ne.s32.totalorder %s356, %s359
    %p365 = scmp.eq.s32.totalorder %s28, 0
    %p366 = por %p364, %p365
    %p367 = scmp.ne.s32.totalorder %s356, %s359
    %p368 = scmp.eq.s32.totalorder %s33, 1
    %p369 = por %p367, %p368
    %p370 = scmp.ne.s32.totalorder %s359, %s360
    %p371 = scmp.eq.s32.totalorder %s33, 0
    %p372 = por %p370, %p371
    %p373 = scmp.ne.s32.totalorder %s359, %s360
    %p374 = scmp.eq.s32.totalorder %s34, 1
    %p375 = por %p373, %p374
    %p377 = scmp.ne.s32.totalorder %s360, %s376
    %p378 = scmp.eq.s32.totalorder %s34, 0
    %p379 = por %p377, %p378
    %s380 = ssub.s32 %s28, %s35
    %p381 = scmp.eq.s32.totalorder %s380, 0
    %s383 = sadd.s32 %s382, 1
    %s384 = scalar_select %p381, %s382, %s383
    %p387 = pneg %p381
    %p388 = scmp.eq.s32.totalorder %s28, 1
    %p389 = por %p387, %p388
    %p390 = scmp.ne.s32.totalorder %s382, %s385
    %p391 = scmp.eq.s32.totalorder %s28, 0
    %p392 = por %p390, %p391
    %p393 = scmp.ne.s32.totalorder %s382, %s385
    %p394 = scmp.eq.s32.totalorder %s33, 1
    %p395 = por %p393, %p394
    %p396 = scmp.ne.s32.totalorder %s385, %s386
    %p397 = scmp.eq.s32.totalorder %s33, 0
    %p398 = por %p396, %p397
    %p399 = scmp.ne.s32.totalorder %s385, %s386
    %p400 = scmp.eq.s32.totalorder %s34, 1
    %p401 = por %p399, %p400
    %p403 = scmp.ne.s32.totalorder %s386, %s402
    %p404 = scmp.eq.s32.totalorder %s34, 0
    %p405 = por %p403, %p404
    %s406 = ssub.s32 %s28, %s35
    %p407 = scmp.eq.s32.totalorder %s406, 0
    %s409 = sadd.s32 %s408, 1
    %s410 = scalar_select %p407, %s408, %s409
    %p413 = pneg %p407
    %p414 = scmp.eq.s32.totalorder %s28, 1
    %p415 = por %p413, %p414
    %p416 = scmp.ne.s32.totalorder %s408, %s411
    %p417 = scmp.eq.s32.totalorder %s28, 0
    %p418 = por %p416, %p417
    %p419 = scmp.ne.s32.totalorder %s408, %s411
    %p420 = scmp.eq.s32.totalorder %s33, 1
    %p421 = por %p419, %p420
    %p422 = scmp.ne.s32.totalorder %s411, %s412
    %p423 = scmp.eq.s32.totalorder %s33, 0
    %p424 = por %p422, %p423
    %p425 = scmp.ne.s32.totalorder %s411, %s412
    %p426 = scmp.eq.s32.totalorder %s34, 1
    %p427 = por %p425, %p426
    %p429 = scmp.ne.s32.totalorder %s412, %s428
    %p430 = scmp.eq.s32.totalorder %s34, 0
    %p431 = por %p429, %p430
    %s432 = ssub.s32 %s28, %s35
    %p433 = scmp.eq.s32.totalorder %s432, 0
    %s435 = sadd.s32 %s434, 1
    %s436 = scalar_select %p433, %s434, %s435
    %p439 = pneg %p433
    %p440 = scmp.eq.s32.totalorder %s28, 1
    %p441 = por %p439, %p440
    %p442 = scmp.ne.s32.totalorder %s434, %s437
    %p443 = scmp.eq.s32.totalorder %s28, 0
    %p444 = por %p442, %p443
    %p445 = scmp.ne.s32.totalorder %s434, %s437
    %p446 = scmp.eq.s32.totalorder %s33, 1
    %p447 = por %p445, %p446
    %p448 = scmp.ne.s32.totalorder %s437, %s438
    %p449 = scmp.eq.s32.totalorder %s33, 0
    %p450 = por %p448, %p449
    %p451 = scmp.ne.s32.totalorder %s437, %s438
    %p452 = scmp.eq.s32.totalorder %s34, 1
    %p453 = por %p451, %p452
    %p455 = scmp.ne.s32.totalorder %s438, %s454
    %p456 = scmp.eq.s32.totalorder %s34, 0
    %p457 = por %p455, %p456
    %s458 = ssub.s32 %s28, %s35
    %p459 = scmp.eq.s32.totalorder %s458, 0
    %s461 = sadd.s32 %s460, 1
    %s462 = scalar_select %p459, %s460, %s461
    %p465 = pneg %p459
    %p466 = scmp.eq.s32.totalorder %s28, 1
    %p467 = por %p465, %p466
    %p468 = scmp.ne.s32.totalorder %s460, %s463
    %p469 = scmp.eq.s32.totalorder %s28, 0
    %p470 = por %p468, %p469
    %p471 = scmp.ne.s32.totalorder %s460, %s463
    %p472 = scmp.eq.s32.totalorder %s33, 1
    %p473 = por %p471, %p472
    %p474 = scmp.ne.s32.totalorder %s463, %s464
    %p475 = scmp.eq.s32.totalorder %s33, 0
    %p476 = por %p474, %p475
    %p477 = scmp.ne.s32.totalorder %s463, %s464
    %p478 = scmp.eq.s32.totalorder %s34, 1
    %p479 = por %p477, %p478
    %p481 = scmp.ne.s32.totalorder %s464, %s480
    %p482 = scmp.eq.s32.totalorder %s34, 0
    %p483 = por %p481, %p482
    %s484 = ssub.s32 %s28, %s35
    %p485 = scmp.eq.s32.totalorder %s484, 0
    %s487 = sadd.s32 %s486, 1
    %s488 = scalar_select %p485, %s486, %s487
    %p491 = pneg %p485
    %p492 = scmp.eq.s32.totalorder %s28, 1
    %p493 = por %p491, %p492
    %p494 = scmp.ne.s32.totalorder %s486, %s489
    %p495 = scmp.eq.s32.totalorder %s28, 0
    %p496 = por %p494, %p495
    %p497 = scmp.ne.s32.totalorder %s486, %s489
    %p498 = scmp.eq.s32.totalorder %s33, 1
    %p499 = por %p497, %p498
    %p500 = scmp.ne.s32.totalorder %s489, %s490
    %p501 = scmp.eq.s32.totalorder %s33, 0
    %p502 = por %p500, %p501
    %p503 = scmp.ne.s32.totalorder %s489, %s490
    %p504 = scmp.eq.s32.totalorder %s34, 1
    %p505 = por %p503, %p504
    %p507 = scmp.ne.s32.totalorder %s490, %s506
    %p508 = scmp.eq.s32.totalorder %s34, 0
    %p509 = por %p507, %p508
    %s510 = ssub.s32 %s28, %s35
    %p511 = scmp.eq.s32.totalorder %s510, 0
    %s513 = sadd.s32 %s512, 1
    %s514 = scalar_select %p511, %s512, %s513
    %p517 = pneg %p511
    %p518 = scmp.eq.s32.totalorder %s28, 1
    %p519 = por %p517, %p518
    %p520 = scmp.ne.s32.totalorder %s512, %s515
    %p521 = scmp.eq.s32.totalorder %s28, 0
    %p522 = por %p520, %p521
    %p523 = scmp.ne.s32.totalorder %s512, %s515
    %p524 = scmp.eq.s32.totalorder %s33, 1
    %p525 = por %p523, %p524
    %p526 = scmp.ne.s32.totalorder %s515, %s516
    %p527 = scmp.eq.s32.totalorder %s33, 0
    %p528 = por %p526, %p527
    %p529 = scmp.ne.s32.totalorder %s515, %s516
    %p530 = scmp.eq.s32.totalorder %s34, 1
    %p531 = por %p529, %p530
    %p533 = scmp.ne.s32.totalorder %s516, %s532
    %p534 = scmp.eq.s32.totalorder %s34, 0
    %p535 = por %p533, %p534
    %s537 = sadd.s32 %s536, 1
    %p540 = scmp.eq.s32.totalorder %s28, 1
    %p541 = scmp.ne.s32.totalorder %s536, %s538
    %p542 = scmp.eq.s32.totalorder %s28, 0
    %p543 = por %p541, %p542
    %p544 = scmp.ne.s32.totalorder %s536, %s538
    %p545 = scmp.eq.s32.totalorder %s33, 1
    %p546 = por %p544, %p545
    %p547 = scmp.ne.s32.totalorder %s538, %s539
    %p548 = scmp.eq.s32.totalorder %s33, 0
    %p549 = por %p547, %p548
    %p550 = scmp.ne.s32.totalorder %s538, %s539
    %p551 = scmp.eq.s32.totalorder %s34, 1
    %p552 = por %p550, %p551
    %p554 = scmp.ne.s32.totalorder %s539, %s553
    %p555 = scmp.eq.s32.totalorder %s34, 0
    %p556 = por %p554, %p555
    %s558 = sadd.s32 %s557, 1
    %p561 = scmp.eq.s32.totalorder %s28, 1
    %p562 = scmp.ne.s32.totalorder %s557, %s559
    %p563 = scmp.eq.s32.totalorder %s28, 0
    %p564 = por %p562, %p563
    %p565 = scmp.ne.s32.totalorder %s557, %s559
    %p566 = scmp.eq.s32.totalorder %s33, 1
    %p567 = por %p565, %p566
    %p568 = scmp.ne.s32.totalorder %s559, %s560
    %p569 = scmp.eq.s32.totalorder %s33, 0
    %p570 = por %p568, %p569
    %p571 = scmp.ne.s32.totalorder %s559, %s560
    %p572 = scmp.eq.s32.totalorder %s34, 1
    %p573 = por %p571, %p572
    %p575 = scmp.ne.s32.totalorder %s560, %s574
    %p576 = scmp.eq.s32.totalorder %s34, 0
    %p577 = por %p575, %p576
    %s579 = sadd.s32 %s578, 1
    %p582 = scmp.eq.s32.totalorder %s28, 1
    %p583 = scmp.ne.s32.totalorder %s578, %s580
    %p584 = scmp.eq.s32.totalorder %s28, 0
    %p585 = por %p583, %p584
    %p586 = scmp.ne.s32.totalorder %s578, %s580
    %p587 = scmp.eq.s32.totalorder %s33, 1
    %p588 = por %p586, %p587
    %p589 = scmp.ne.s32.totalorder %s580, %s581
    %p590 = scmp.eq.s32.totalorder %s33, 0
    %p591 = por %p589, %p590
    %p592 = scmp.ne.s32.totalorder %s580, %s581
    %p593 = scmp.eq.s32.totalorder %s34, 1
    %p594 = por %p592, %p593
    %p596 = scmp.ne.s32.totalorder %s581, %s595
    %p597 = scmp.eq.s32.totalorder %s34, 0
    %p598 = por %p596, %p597
    %p599 = scmp.le.s32.totalorder 1, %s28
    %p600 = scmp.lt.s32.totalorder %s28, 3
    %p601 = pnand %p599, %p600
    %p602 = pneg %p601
    // Predicated region
    $region9: #{vit_segmentation_forward.1} parent=5 // pred_check
      _
    $region10: #{vit_segmentation_forward.1} parent=5 // pred_check_branch
      %604 = sbr.rel (%p601) target = $region12
    $region11: #{vit_segmentation_forward.1} parent=5 // pred_region
      %s605 = ssub.s32 %s28, 1
      // Predicated region
      $region13: #{vit_segmentation_forward.1} parent=11 // pred_check
        %p606 = pneg %p49
      $region14: #{vit_segmentation_forward.1} parent=11 // pred_check_branch
        %608 = sbr.rel (%p606) target = $region16
      $region15: #{vit_segmentation_forward.1} parent=11 // pred_region
        _
      $region16: #{vit_segmentation_forward.1} parent=11 // pred_fallthru
        _
      // Predicated region
      $region17: #{vit_segmentation_forward.1} parent=11 // pred_check
        %p609 = pneg %p70
      $region18: #{vit_segmentation_forward.1} parent=11 // pred_check_branch
        %611 = sbr.rel (%p609) target = $region20
      $region19: #{vit_segmentation_forward.1} parent=11 // pred_region
        _
      $region20: #{vit_segmentation_forward.1} parent=11 // pred_fallthru
        _
      // Predicated region
      $region21: #{vit_segmentation_forward.1} parent=11 // pred_check
        %p612 = pneg %p91
      $region22: #{vit_segmentation_forward.1} parent=11 // pred_check_branch
        %614 = sbr.rel (%p612) target = $region24
      $region23: #{vit_segmentation_forward.1} parent=11 // pred_region
        _
      $region24: #{vit_segmentation_forward.1} parent=11 // pred_fallthru
        _
      // Predicated region
      $region25: #{vit_segmentation_forward.1} parent=11 // pred_check
        %p615 = pneg %p112
      $region26: #{vit_segmentation_forward.1} parent=11 // pred_check_branch
        %617 = sbr.rel (%p615) target = $region28
      $region27: #{vit_segmentation_forward.1} parent=11 // pred_region
        _
      $region28: #{vit_segmentation_forward.1} parent=11 // pred_fallthru
        _
      // Predicated region
      $region29: #{vit_segmentation_forward.1} parent=11 // pred_check
        %p618 = pneg %p549
      $region30: #{vit_segmentation_forward.1} parent=11 // pred_check_branch
        %620 = sbr.rel (%p618) target = $region32
      $region31: #{vit_segmentation_forward.1} parent=11 // pred_region
        _
      $region32: #{vit_segmentation_forward.1} parent=11 // pred_fallthru
        _
      // Predicated region
      $region33: #{vit_segmentation_forward.1} parent=11 // pred_check
        %p621 = pneg %p570
      $region34: #{vit_segmentation_forward.1} parent=11 // pred_check_branch
        %623 = sbr.rel (%p621) target = $region36
      $region35: #{vit_segmentation_forward.1} parent=11 // pred_region
        _
      $region36: #{vit_segmentation_forward.1} parent=11 // pred_fallthru
        _
    $region12: #{vit_segmentation_forward.1} parent=5 // pred_fallthru
      _
    %p624 = scmp.lt.s32.totalorder %s28, 2
    // Predicated region
    $region37: #{vit_segmentation_forward.1} parent=5 // pred_check
      %p625 = pneg %p624
    $region38: #{vit_segmentation_forward.1} parent=5 // pred_check_branch
      %627 = sbr.rel (%p625) target = $region40
    $region39: #{vit_segmentation_forward.1} parent=5 // pred_region
      // Predicated region
      $region41: #{vit_segmentation_forward.1} parent=39 // pred_check
        %p628 = pneg %p132
      $region42: #{vit_segmentation_forward.1} parent=39 // pred_check_branch
        %630 = sbr.rel (%p628) target = $region44
      $region43: #{vit_segmentation_forward.1} parent=39 // pred_region
        %p631 = scmp.lt.s32.totalorder %s28, 1
        %s632 = scalar_select %p631, %s28, 1
        %s633 = smul.addr %s632, 4
        %s634 = smul.addr %s633, 4
        %s635 = scalar_lea.vmem %s4, %s634
      $region44: #{vit_segmentation_forward.1} parent=39 // pred_fallthru
        _
      // Predicated region
      $region45: #{vit_segmentation_forward.1} parent=39 // pred_check
        %p636 = pneg %p158
      $region46: #{vit_segmentation_forward.1} parent=39 // pred_check_branch
        %638 = sbr.rel (%p636) target = $region48
      $region47: #{vit_segmentation_forward.1} parent=39 // pred_region
        %p639 = scmp.lt.s32.totalorder %s28, 1
        %s640 = scalar_select %p639, %s28, 1
        %s641 = scalar_lea.vmem %s5, %s640
      $region48: #{vit_segmentation_forward.1} parent=39 // pred_fallthru
        _
      // Predicated region
      $region49: #{vit_segmentation_forward.1} parent=39 // pred_check
        %p642 = pneg %p184
      $region50: #{vit_segmentation_forward.1} parent=39 // pred_check_branch
        %644 = sbr.rel (%p642) target = $region52
      $region51: #{vit_segmentation_forward.1} parent=39 // pred_region
        %p645 = scmp.lt.s32.totalorder %s28, 1
        %s646 = scalar_select %p645, %s28, 1
        %s647 = smul.addr %s646, 4
        %s648 = smul.addr %s647, 4
        %s649 = scalar_lea.vmem %s6, %s648
      $region52: #{vit_segmentation_forward.1} parent=39 // pred_fallthru
        _
      // Predicated region
      $region53: #{vit_segmentation_forward.1} parent=39 // pred_check
        %p650 = pneg %p210
      $region54: #{vit_segmentation_forward.1} parent=39 // pred_check_branch
        %652 = sbr.rel (%p650) target = $region56
      $region55: #{vit_segmentation_forward.1} parent=39 // pred_region
        %p653 = scmp.lt.s32.totalorder %s28, 1
        %s654 = scalar_select %p653, %s28, 1
        %s655 = scalar_lea.vmem %s7, %s654
      $region56: #{vit_segmentation_forward.1} parent=39 // pred_fallthru
        _
      // Predicated region
      $region57: #{vit_segmentation_forward.1} parent=39 // pred_check
        %p656 = pneg %p236
      $region58: #{vit_segmentation_forward.1} parent=39 // pred_check_branch
        %658 = sbr.rel (%p656) target = $region60
      $region59: #{vit_segmentation_forward.1} parent=39 // pred_region
        %p659 = scmp.lt.s32.totalorder %s28, 1
        %s660 = scalar_select %p659, %s28, 1
        %s661 = smul.addr %s660, 4
        %s662 = smul.addr %s661, 4
        %s663 = scalar_lea.vmem %s8, %s662
      $region60: #{vit_segmentation_forward.1} parent=39 // pred_fallthru
        _
      // Predicated region
      $region61: #{vit_segmentation_forward.1} parent=39 // pred_check
        %p664 = pneg %p262
      $region62: #{vit_segmentation_forward.1} parent=39 // pred_check_branch
        %666 = sbr.rel (%p664) target = $region64
      $region63: #{vit_segmentation_forward.1} parent=39 // pred_region
        %p667 = scmp.lt.s32.totalorder %s28, 1
        %s668 = scalar_select %p667, %s28, 1
        %s669 = scalar_lea.vmem %s9, %s668
      $region64: #{vit_segmentation_forward.1} parent=39 // pred_fallthru
        _
      // Predicated region
      $region65: #{vit_segmentation_forward.1} parent=39 // pred_check
        %p670 = pneg %p288
      $region66: #{vit_segmentation_forward.1} parent=39 // pred_check_branch
        %672 = sbr.rel (%p670) target = $region68
      $region67: #{vit_segmentation_forward.1} parent=39 // pred_region
        %p673 = scmp.lt.s32.totalorder %s28, 1
        %s674 = scalar_select %p673, %s28, 1
        %s675 = smul.addr %s674, 4
        %s676 = smul.addr %s675, 4
        %s677 = scalar_lea.vmem %s10, %s676
      $region68: #{vit_segmentation_forward.1} parent=39 // pred_fallthru
        _
      // Predicated region
      $region69: #{vit_segmentation_forward.1} parent=39 // pred_check
        %p678 = pneg %p314
      $region70: #{vit_segmentation_forward.1} parent=39 // pred_check_branch
        %680 = sbr.rel (%p678) target = $region72
      $region71: #{vit_segmentation_forward.1} parent=39 // pred_region
        %p681 = scmp.lt.s32.totalorder %s28, 1
        %s682 = scalar_select %p681, %s28, 1
        %s683 = scalar_lea.vmem %s11, %s682
      $region72: #{vit_segmentation_forward.1} parent=39 // pred_fallthru
        _
      // Predicated region
      $region73: #{vit_segmentation_forward.1} parent=39 // pred_check
        %p684 = pneg %p340
      $region74: #{vit_segmentation_forward.1} parent=39 // pred_check_branch
        %686 = sbr.rel (%p684) target = $region76
      $region75: #{vit_segmentation_forward.1} parent=39 // pred_region
        %p687 = scmp.lt.s32.totalorder %s28, 1
        %s688 = scalar_select %p687, %s28, 1
        %s689 = scalar_lea.vmem %s12, %s688
      $region76: #{vit_segmentation_forward.1} parent=39 // pred_fallthru
        _
      // Predicated region
      $region77: #{vit_segmentation_forward.1} parent=39 // pred_check
        %p690 = pneg %p366
      $region78: #{vit_segmentation_forward.1} parent=39 // pred_check_branch
        %692 = sbr.rel (%p690) target = $region80
      $region79: #{vit_segmentation_forward.1} parent=39 // pred_region
        %p693 = scmp.lt.s32.totalorder %s28, 1
        %s694 = scalar_select %p693, %s28, 1
        %s695 = scalar_lea.vmem %s13, %s694
      $region80: #{vit_segmentation_forward.1} parent=39 // pred_fallthru
        _
      // Predicated region
      $region81: #{vit_segmentation_forward.1} parent=39 // pred_check
        %p696 = pneg %p392
      $region82: #{vit_segmentation_forward.1} parent=39 // pred_check_branch
        %698 = sbr.rel (%p696) target = $region84
      $region83: #{vit_segmentation_forward.1} parent=39 // pred_region
        %p699 = scmp.lt.s32.totalorder %s28, 1
        %s700 = scalar_select %p699, %s28, 1
        %s701 = smul.addr %s700, 4
        %s702 = smul.addr %s701, 4
        %s703 = scalar_lea.vmem %s14, %s702
      $region84: #{vit_segmentation_forward.1} parent=39 // pred_fallthru
        _
      // Predicated region
      $region85: #{vit_segmentation_forward.1} parent=39 // pred_check
        %p704 = pneg %p418
      $region86: #{vit_segmentation_forward.1} parent=39 // pred_check_branch
        %706 = sbr.rel (%p704) target = $region88
      $region87: #{vit_segmentation_forward.1} parent=39 // pred_region
        %p707 = scmp.lt.s32.totalorder %s28, 1
        %s708 = scalar_select %p707, %s28, 1
        %s709 = scalar_lea.vmem %s15, %s708
      $region88: #{vit_segmentation_forward.1} parent=39 // pred_fallthru
        _
      // Predicated region
      $region89: #{vit_segmentation_forward.1} parent=39 // pred_check
        %p710 = pneg %p444
      $region90: #{vit_segmentation_forward.1} parent=39 // pred_check_branch
        %712 = sbr.rel (%p710) target = $region92
      $region91: #{vit_segmentation_forward.1} parent=39 // pred_region
        %p713 = scmp.lt.s32.totalorder %s28, 1
        %s714 = scalar_select %p713, %s28, 1
        %s715 = smul.addr %s714, 8
        %s716 = smul.addr %s715, 4
        %s717 = scalar_lea.vmem %s16, %s716
      $region92: #{vit_segmentation_forward.1} parent=39 // pred_fallthru
        _
      // Predicated region
      $region93: #{vit_segmentation_forward.1} parent=39 // pred_check
        %p718 = pneg %p470
      $region94: #{vit_segmentation_forward.1} parent=39 // pred_check_branch
        %720 = sbr.rel (%p718) target = $region96
      $region95: #{vit_segmentation_forward.1} parent=39 // pred_region
        %p721 = scmp.lt.s32.totalorder %s28, 1
        %s722 = scalar_select %p721, %s28, 1
        %s723 = scalar_lea.vmem %s17, %s722
      $region96: #{vit_segmentation_forward.1} parent=39 // pred_fallthru
        _
      // Predicated region
      $region97: #{vit_segmentation_forward.1} parent=39 // pred_check
        %p724 = pneg %p496
      $region98: #{vit_segmentation_forward.1} parent=39 // pred_check_branch
        %726 = sbr.rel (%p724) target = $region100
      $region99: #{vit_segmentation_forward.1} parent=39 // pred_region
        %p727 = scmp.lt.s32.totalorder %s28, 1
        %s728 = scalar_select %p727, %s28, 1
        %s729 = scalar_lea.vmem %s18, %s728
      $region100: #{vit_segmentation_forward.1} parent=39 // pred_fallthru
        _
      // Predicated region
      $region101: #{vit_segmentation_forward.1} parent=39 // pred_check
        %p730 = pneg %p522
      $region102: #{vit_segmentation_forward.1} parent=39 // pred_check_branch
        %732 = sbr.rel (%p730) target = $region104
      $region103: #{vit_segmentation_forward.1} parent=39 // pred_region
        %p733 = scmp.lt.s32.totalorder %s28, 1
        %s734 = scalar_select %p733, %s28, 1
        %s735 = scalar_lea.vmem %s19, %s734
      $region104: #{vit_segmentation_forward.1} parent=39 // pred_fallthru
        _
    $region40: #{vit_segmentation_forward.1} parent=5 // pred_fallthru
      _
    %p736 = scmp.le.s32.totalorder 1, %s28
    %p737 = scmp.lt.s32.totalorder %s28, 3
    %p738 = pnand %p736, %p737
    %p739 = pneg %p738
    // Predicated region
    $region105: #{vit_segmentation_forward.1} parent=5 // pred_check
      _
    $region106: #{vit_segmentation_forward.1} parent=5 // pred_check_branch
      %741 = sbr.rel (%p738) target = $region108
    $region107: #{vit_segmentation_forward.1} parent=5 // pred_region
      %s742 = ssub.s32 %s28, 1
      %p743 = pneg %p49
      %p744 = pneg %p46
      %p745 = pneg %p70
      %p746 = pneg %p67
      %p747 = pneg %p91
      %p748 = pneg %p88
      %p749 = pneg %p112
      %p750 = pneg %p109
      %p751 = scmp.lt.s32.totalorder %s33, 1
      %s752 = scalar_select %p751, %s33, 1
      %s753 = smul.addr %s752, 4
      %s754 = smul.addr %s753, 4
      %s755 = scalar_lea.vmem %s4, %s754
      %p756 = pneg %p138
      %p757 = pneg %p135
      %p758 = scmp.lt.s32.totalorder %s33, 1
      %s759 = scalar_select %p758, %s33, 1
      %s760 = scalar_lea.vmem %s5, %s759
      %p761 = pneg %p164
      %p762 = pneg %p161
      %p763 = scmp.lt.s32.totalorder %s33, 1
      %s764 = scalar_select %p763, %s33, 1
      %s765 = smul.addr %s764, 4
      %s766 = smul.addr %s765, 4
      %s767 = scalar_lea.vmem %s6, %s766
      %p768 = pneg %p190
      %p769 = pneg %p187
      %p770 = scmp.lt.s32.totalorder %s33, 1
      %s771 = scalar_select %p770, %s33, 1
      %s772 = scalar_lea.vmem %s7, %s771
      %p773 = pneg %p216
      %p774 = pneg %p213
      %p775 = scmp.lt.s32.totalorder %s33, 1
      %s776 = scalar_select %p775, %s33, 1
      %s777 = smul.addr %s776, 4
      %s778 = smul.addr %s777, 4
      %s779 = scalar_lea.vmem %s8, %s778
      %p780 = pneg %p242
      %p781 = pneg %p239
      %p782 = scmp.lt.s32.totalorder %s33, 1
      %s783 = scalar_select %p782, %s33, 1
      %s784 = scalar_lea.vmem %s9, %s783
      %p785 = pneg %p268
      %p786 = pneg %p265
      %p787 = scmp.lt.s32.totalorder %s33, 1
      %s788 = scalar_select %p787, %s33, 1
      %s789 = smul.addr %s788, 4
      %s790 = smul.addr %s789, 4
      %s791 = scalar_lea.vmem %s10, %s790
      %p792 = pneg %p294
      %p793 = pneg %p291
      %p794 = scmp.lt.s32.totalorder %s33, 1
      %s795 = scalar_select %p794, %s33, 1
      %s796 = scalar_lea.vmem %s11, %s795
      %p797 = pneg %p320
      %p798 = pneg %p317
      %p799 = scmp.lt.s32.totalorder %s33, 1
      %s800 = scalar_select %p799, %s33, 1
      %s801 = scalar_lea.vmem %s12, %s800
      %p802 = pneg %p346
      %p803 = pneg %p343
      %p804 = scmp.lt.s32.totalorder %s33, 1
      %s805 = scalar_select %p804, %s33, 1
      %s806 = scalar_lea.vmem %s13, %s805
      %p807 = pneg %p372
      %p808 = pneg %p369
      %p809 = scmp.lt.s32.totalorder %s33, 1
      %s810 = scalar_select %p809, %s33, 1
      %s811 = smul.addr %s810, 4
      %s812 = smul.addr %s811, 4
      %s813 = scalar_lea.vmem %s14, %s812
      %p814 = pneg %p398
      %p815 = pneg %p395
      %p816 = scmp.lt.s32.totalorder %s33, 1
      %s817 = scalar_select %p816, %s33, 1
      %s818 = scalar_lea.vmem %s15, %s817
      %p819 = pneg %p424
      %p820 = pneg %p421
      %p821 = scmp.lt.s32.totalorder %s33, 1
      %s822 = scalar_select %p821, %s33, 1
      %s823 = smul.addr %s822, 8
      %s824 = smul.addr %s823, 4
      %s825 = scalar_lea.vmem %s16, %s824
      %p826 = pneg %p450
      %p827 = pneg %p447
      %p828 = scmp.lt.s32.totalorder %s33, 1
      %s829 = scalar_select %p828, %s33, 1
      %s830 = scalar_lea.vmem %s17, %s829
      %p831 = pneg %p476
      %p832 = pneg %p473
      %p833 = scmp.lt.s32.totalorder %s33, 1
      %s834 = scalar_select %p833, %s33, 1
      %s835 = scalar_lea.vmem %s18, %s834
      %p836 = pneg %p502
      %p837 = pneg %p499
      %p838 = scmp.lt.s32.totalorder %s33, 1
      %s839 = scalar_select %p838, %s33, 1
      %s840 = scalar_lea.vmem %s19, %s839
      %p841 = pneg %p528
      %p842 = pneg %p525
      %p843 = pneg %p549
      %p844 = pneg %p546
      %p845 = pneg %p570
      %p846 = pneg %p567
      %p847 = pneg %p591
      %p848 = pneg %p588
      %p849 = scmp.lt.s32.totalorder %s33, 1
      %s850 = scalar_select %p849, %s33, 1
      %s851 = smul.addr %s850, 4
      %s852 = smul.addr %s851, 4
      %s853 = scalar_lea.vmem %s4, %s852
      %p854 = scmp.lt.s32.totalorder %s33, 1
      %s855 = scalar_select %p854, %s33, 1
      %s856 = scalar_lea.vmem %s5, %s855
      %p857 = scmp.lt.s32.totalorder %s33, 1
      %s858 = scalar_select %p857, %s33, 1
      %s859 = smul.addr %s858, 4
      %s860 = smul.addr %s859, 4
      %s861 = scalar_lea.vmem %s6, %s860
      %p862 = scmp.lt.s32.totalorder %s33, 1
      %s863 = scalar_select %p862, %s33, 1
      %s864 = scalar_lea.vmem %s7, %s863
      %p865 = scmp.lt.s32.totalorder %s33, 1
      %s866 = scalar_select %p865, %s33, 1
      %s867 = smul.addr %s866, 4
      %s868 = smul.addr %s867, 4
      %s869 = scalar_lea.vmem %s8, %s868
      %p870 = scmp.lt.s32.totalorder %s33, 1
      %s871 = scalar_select %p870, %s33, 1
      %s872 = scalar_lea.vmem %s9, %s871
      %p873 = scmp.lt.s32.totalorder %s33, 1
      %s874 = scalar_select %p873, %s33, 1
      %s875 = smul.addr %s874, 4
      %s876 = smul.addr %s875, 4
      %s877 = scalar_lea.vmem %s10, %s876
      %p878 = scmp.lt.s32.totalorder %s33, 1
      %s879 = scalar_select %p878, %s33, 1
      %s880 = scalar_lea.vmem %s11, %s879
      %p881 = scmp.lt.s32.totalorder %s33, 1
      %s882 = scalar_select %p881, %s33, 1
      %s883 = scalar_lea.vmem %s12, %s882
      %p884 = scmp.lt.s32.totalorder %s33, 1
      %s885 = scalar_select %p884, %s33, 1
      %s886 = scalar_lea.vmem %s13, %s885
      %p887 = scmp.lt.s32.totalorder %s33, 1
      %s888 = scalar_select %p887, %s33, 1
      %s889 = smul.addr %s888, 4
      %s890 = smul.addr %s889, 4
      %s891 = scalar_lea.vmem %s14, %s890
      %p892 = scmp.lt.s32.totalorder %s33, 1
      %s893 = scalar_select %p892, %s33, 1
      %s894 = scalar_lea.vmem %s15, %s893
      %p895 = scmp.lt.s32.totalorder %s33, 1
      %s896 = scalar_select %p895, %s33, 1
      %s897 = smul.addr %s896, 8
      %s898 = smul.addr %s897, 4
      %s899 = scalar_lea.vmem %s16, %s898
      %p900 = scmp.lt.s32.totalorder %s33, 1
      %s901 = scalar_select %p900, %s33, 1
      %s902 = scalar_lea.vmem %s17, %s901
      %p903 = scmp.lt.s32.totalorder %s33, 1
      %s904 = scalar_select %p903, %s33, 1
      %s905 = scalar_lea.vmem %s18, %s904
      %p906 = scmp.lt.s32.totalorder %s33, 1
      %s907 = scalar_select %p906, %s33, 1
      %s908 = scalar_lea.vmem %s19, %s907
      %p910 = scmp.eq.s32.totalorder %s33, 0
      // Predicated region
      $region109: #{vit_segmentation_forward.1} parent=107 // pred_check
        %p911 = pneg %p910
      $region110: #{vit_segmentation_forward.1} parent=107 // pred_check_branch
        %913 = sbr.rel (%p911) target = $region112
      $region111: #{vit_segmentation_forward.1} parent=107 // pred_region
        %v914 = vld [vmem:[%s0] sm:$0xf]
        %v915 = vld [vmem:[%s0 + $0x4] sm:$0xf]
        %v916 = vld [vmem:[%s0 + $0x8] sm:$0xf]
        %v917 = vld [vmem:[%s0 + $0xc] sm:$0xf]
        %v918 = vld [vmem:[%s1] sm:$0xf]
        %v919 = vld [vmem:[%s1 + $0x4] sm:$0xf]
        %v920 = vld [vmem:[%s1 + $0x8] sm:$0xf]
        %v921 = vld [vmem:[%s1 + $0xc] sm:$0xf]
        %v922 = vld [vmem:[%s1 + $0x10] sm:$0xf]
        %v923 = vld [vmem:[%s1 + $0x14] sm:$0xf]
        %v924 = vld [vmem:[%s1 + $0x18] sm:$0xf]
        %v925 = vld [vmem:[%s1 + $0x1c] sm:$0xf]
        %v926 = vld [vmem:[%s2] sm:$0x1]
        %v928 = vlaneseq
        %v929 = vshrl.u32 %v928, 7
        %v930 = vsub.s32 0, %v929
        %v931 = vrot.slane %v926, %v930
        %v937 = vunpack.c.l.b16 %v914
        %v938 = vunpack.c.l.b16 %v915
        %v939 = vunpack.c.l.b16 %v916
        %v940 = vunpack.c.l.b16 %v917
        %v941 = vpack.c.b16 %v938, %v937
        %v942 = vpack.c.b16 %v940, %v939
        %v951 = vunpack.c.l.b16 %v918
        %v952 = vunpack.c.l.b16 %v919
        %v953 = vunpack.c.l.b16 %v920
        %v954 = vunpack.c.l.b16 %v921
        %v955 = vunpack.c.l.b16 %v922
        %v956 = vunpack.c.l.b16 %v923
        %v957 = vunpack.c.l.b16 %v924
        %v958 = vunpack.c.l.b16 %v925
        %v959 = vpack.c.b16 %v952, %v951
        %v960 = vpack.c.b16 %v954, %v953
        %v961 = vpack.c.b16 %v956, %v955
        %v962 = vpack.c.b16 %v958, %v957
        %vm967 = vcmask 523264
        %v969 = vsel %vm967, %v941, 0
        %v972 = vsel %vm967, %v942, 0
        %974 = vmatprep.subr.bf16.mxu0 0
        %975 = vmatpush1.bf16.msra.mxu0 %v959
        %976 = vmatprep.subr.bf16.mxu0 0
        %977 = vmatpush1.bf16.msra.mxu0 %v960
        %978 = vmatprep.subr.bf16.mxu0 0
        %979 = vmatpush1.bf16.msra.mxu0 %v961
        %980 = vmatprep.subr.bf16.mxu0 0
        %981 = vmatpush1.bf16.msra.mxu0 %v962
        %982 = vmatprep.subr.bf16.mxu0 0
        %983 = vmatpush1.bf16.msra.mxu0 0
        %984 = vmatprep.subr.bf16.mxu0 0
        %985 = vmatpush1.bf16.msra.mxu0 0
        %986 = vmatprep.subr.bf16.mxu0 0
        %987 = vmatpush1.bf16.msra.mxu0 0
        %988 = vmatprep.subr.bf16.mxu0 0
        %989 = vmatpush1.bf16.msra.mxu0 0
        %990 = vmatprep.subr.bf16.mxu0 0
        %991 = vmatpush1.bf16.msra.mxu0 0
        %992 = vmatprep.subr.bf16.mxu0 0
        %993 = vmatpush1.bf16.msra.mxu0 0
        %994 = vmatprep.subr.bf16.mxu0 0
        %995 = vmatpush1.bf16.msra.mxu0 0
        %996 = vmatprep.subr.bf16.mxu0 0
        %997 = vmatpush1.bf16.msra.mxu0 0
        %998 = vmatprep.subr.bf16.mxu0 0
        %999 = vmatpush1.bf16.msra.mxu0 0
        %1000 = vmatprep.subr.bf16.mxu0 0
        %1001 = vmatpush1.bf16.msra.mxu0 0
        %1002 = vmatprep.subr.bf16.mxu0 0
        %1003 = vmatpush1.bf16.msra.mxu0 0
        %1004 = vmatprep.subr.bf16.mxu0 0
        %1005 = vmatpush1.bf16.msra.mxu0 0
        %1006 = vmatprep.mubr.bf16.mxu0 0
        %1007 = vmatmul.mubr.bf16.gmra.mrb[0].mxu0 %v969
        %v1008 = vpop.f32.mrb[0].mxu0
        %v1009 = vadd.f32 %v931, %v1008
        %v1010 = vpop.f32.mrb[0].mxu0
        %v1011 = vpop.f32.mrb[0].mxu0
        %v1012 = vadd.f32 %v931, %v1011
        %v1013 = vpop.f32.mrb[0].mxu0
        %1014 = vmatprep.mubr.bf16.mxu0 0
        %1015 = vmatmul.mubr.bf16.gmra.mrb[0].mxu0 %v972
        %v1016 = vpop.f32.mrb[0].mxu0
        %v1017 = vadd.f32 %v931, %v1016
        %v1018 = vpop.f32.mrb[0].mxu0
        %v1019 = vpop.f32.mrb[0].mxu0
        %v1020 = vadd.f32 %v931, %v1019
        %v1021 = vpop.f32.mrb[0].mxu0
        %1022 = vdwg.mxu0
        %v1023 = vld [vmem:[%s3] sm:$0xff]
        %v1024 = vld [vmem:[%s3 + $0x8] sm:$0xff]
        %v1025 = vadd.f32 %v1009, %v1023
        %v1026 = vadd.f32 %v1012, %v1024
        %v1027 = vadd.f32 %v1017, %v1023
        %v1028 = vadd.f32 %v1020, %v1024
        %vm1029 = vcmask 261120
        %1030 = vst.msk [vmem:[#allocation2] sm:$0xff] %vm1029, %v1025
        %1031 = vst.msk [vmem:[#allocation2 + $0x8] sm:$0xff] %vm1029, %v1026
        %1032 = vst.msk [vmem:[#allocation2 + $0x10] sm:$0xff] %vm1029, %v1027
        %1033 = vst.msk [vmem:[#allocation2 + $0x18] sm:$0xff] %vm1029, %v1028
      $region112: #{vit_segmentation_forward.1} parent=107 // pred_fallthru
        _
      %v1034 = vld [vmem:[#allocation2] sm:$0xff]
      %v1035 = vld [vmem:[#allocation2 + $0x8] sm:$0xff]
      %v1036 = vld [vmem:[#allocation2 + $0x10] sm:$0xff]
      %v1037 = vld [vmem:[#allocation2 + $0x18] sm:$0xff]
      %v1038 = vpack.c.bf16 %v1035, %v1034
      %v1039 = vpack.c.bf16 %v1037, %v1036
      %v1040 = vld [vmem:[%s853] sm:$0xf]
      %v1041 = vld [vmem:[%s853 + $0x4] sm:$0xf]
      %v1042 = vld [vmem:[%s853 + $0x8] sm:$0xf]
      %v1043 = vld [vmem:[%s853 + $0xc] sm:$0xf]
      %v1044 = vld [vmem:[%s856] sm:$0x1]
      %v1046 = vlaneseq
      %v1047 = vshrl.u32 %v1046, 7
      %v1048 = vsub.s32 0, %v1047
      %v1049 = vrot.slane %v1044, %v1048
      %v1055 = vunpack.c.l.b16 %v1040
      %v1056 = vunpack.c.l.b16 %v1041
      %v1057 = vunpack.c.l.b16 %v1042
      %v1058 = vunpack.c.l.b16 %v1043
      %v1059 = vpack.c.b16 %v1056, %v1055
      %v1060 = vpack.c.b16 %v1058, %v1057
      %vm1063 = vcmask 261120
      %v1065 = vsel %vm1063, %v1038, 0
      %v1068 = vsel %vm1063, %v1039, 0
      %1070 = vmatprep.subr.bf16.mxu0 0
      %1071 = vmatpush1.bf16.msra.mxu0 %v1059
      %1072 = vmatprep.subr.bf16.mxu0 0
      %1073 = vmatpush1.bf16.msra.mxu0 %v1060
      %1074 = vmatprep.subr.bf16.mxu0 0
      %1075 = vmatpush1.bf16.msra.mxu0 0
      %1076 = vmatprep.subr.bf16.mxu0 0
      %1077 = vmatpush1.bf16.msra.mxu0 0
      %1078 = vmatprep.subr.bf16.mxu0 0
      %1079 = vmatpush1.bf16.msra.mxu0 0
      %1080 = vmatprep.subr.bf16.mxu0 0
      %1081 = vmatpush1.bf16.msra.mxu0 0
      %1082 = vmatprep.subr.bf16.mxu0 0
      %1083 = vmatpush1.bf16.msra.mxu0 0
      %1084 = vmatprep.subr.bf16.mxu0 0
      %1085 = vmatpush1.bf16.msra.mxu0 0
      %1086 = vmatprep.subr.bf16.mxu0 0
      %1087 = vmatpush1.bf16.msra.mxu0 0
      %1088 = vmatprep.subr.bf16.mxu0 0
      %1089 = vmatpush1.bf16.msra.mxu0 0
      %1090 = vmatprep.subr.bf16.mxu0 0
      %1091 = vmatpush1.bf16.msra.mxu0 0
      %1092 = vmatprep.subr.bf16.mxu0 0
      %1093 = vmatpush1.bf16.msra.mxu0 0
      %1094 = vmatprep.subr.bf16.mxu0 0
      %1095 = vmatpush1.bf16.msra.mxu0 0
      %1096 = vmatprep.subr.bf16.mxu0 0
      %1097 = vmatpush1.bf16.msra.mxu0 0
      %1098 = vmatprep.subr.bf16.mxu0 0
      %1099 = vmatpush1.bf16.msra.mxu0 0
      %1100 = vmatprep.subr.bf16.mxu0 0
      %1101 = vmatpush1.bf16.msra.mxu0 0
      %1102 = vmatprep.mubr.bf16.mxu0 0
      %1103 = vmatmul.mubr.bf16.gmra.mrb[0].mxu0 %v1065
      %v1104 = vpop.f32.mrb[0].mxu0
      %v1105 = vadd.f32 %v1049, %v1104
      %v1106 = vpop.f32.mrb[0].mxu0
      %v1107 = vpop.f32.mrb[0].mxu0
      %v1108 = vadd.f32 %v1049, %v1107
      %v1109 = vpop.f32.mrb[0].mxu0
      %1110 = vmatprep.mubr.bf16.mxu0 0
      %1111 = vmatmul.mubr.bf16.gmra.mrb[0].mxu0 %v1068
      %v1112 = vpop.f32.mrb[0].mxu0
      %v1113 = vadd.f32 %v1049, %v1112
      %v1114 = vpop.f32.mrb[0].mxu0
      %v1115 = vpop.f32.mrb[0].mxu0
      %v1116 = vadd.f32 %v1049, %v1115
      %v1117 = vpop.f32.mrb[0].mxu0
      %1118 = vdwg.mxu0
      %v1119 = vld [vmem:[%s861] sm:$0xf]
      %v1120 = vld [vmem:[%s861 + $0x4] sm:$0xf]
      %v1121 = vld [vmem:[%s861 + $0x8] sm:$0xf]
      %v1122 = vld [vmem:[%s861 + $0xc] sm:$0xf]
      %v1123 = vld [vmem:[%s864] sm:$0x1]
      %v1125 = vlaneseq
      %v1126 = vshrl.u32 %v1125, 7
      %v1127 = vsub.s32 0, %v1126
      %v1128 = vrot.slane %v1123, %v1127
      %v1134 = vunpack.c.l.b16 %v1119
      %v1135 = vunpack.c.l.b16 %v1120
      %v1136 = vunpack.c.l.b16 %v1121
      %v1137 = vunpack.c.l.b16 %v1122
      %v1138 = vpack.c.b16 %v1135, %v1134
      %v1139 = vpack.c.b16 %v1137, %v1136
      %1142 = vmatprep.subr.bf16.mxu0 0
      %1143 = vmatpush1.bf16.msra.mxu0 %v1138
      %1144 = vmatprep.subr.bf16.mxu0 0
      %1145 = vmatpush1.bf16.msra.mxu0 %v1139
      %1146 = vmatprep.subr.bf16.mxu0 0
      %1147 = vmatpush1.bf16.msra.mxu0 0
      %1148 = vmatprep.subr.bf16.mxu0 0
      %1149 = vmatpush1.bf16.msra.mxu0 0
      %1150 = vmatprep.subr.bf16.mxu0 0
      %1151 = vmatpush1.bf16.msra.mxu0 0
      %1152 = vmatprep.subr.bf16.mxu0 0
      %1153 = vmatpush1.bf16.msra.mxu0 0
      %1154 = vmatprep.subr.bf16.mxu0 0
      %1155 = vmatpush1.bf16.msra.mxu0 0
      %1156 = vmatprep.subr.bf16.mxu0 0
      %1157 = vmatpush1.bf16.msra.mxu0 0
      %1158 = vmatprep.subr.bf16.mxu0 0
      %1159 = vmatpush1.bf16.msra.mxu0 0
      %1160 = vmatprep.subr.bf16.mxu0 0
      %1161 = vmatpush1.bf16.msra.mxu0 0
      %1162 = vmatprep.subr.bf16.mxu0 0
      %1163 = vmatpush1.bf16.msra.mxu0 0
      %1164 = vmatprep.subr.bf16.mxu0 0
      %1165 = vmatpush1.bf16.msra.mxu0 0
      %1166 = vmatprep.subr.bf16.mxu0 0
      %1167 = vmatpush1.bf16.msra.mxu0 0
      %1168 = vmatprep.subr.bf16.mxu0 0
      %1169 = vmatpush1.bf16.msra.mxu0 0
      %1170 = vmatprep.subr.bf16.mxu0 0
      %1171 = vmatpush1.bf16.msra.mxu0 0
      %1172 = vmatprep.subr.bf16.mxu0 0
      %1173 = vmatpush1.bf16.msra.mxu0 0
      %1174 = vmatprep.mubr.bf16.mxu0 0
      %1175 = vmatmul.mubr.bf16.gmra.mrb[0].mxu0 %v1065
      %v1176 = vpop.f32.mrb[0].mxu0
      %v1177 = vadd.f32 %v1128, %v1176
      %v1178 = vpop.f32.mrb[0].mxu0
      %v1179 = vpop.f32.mrb[0].mxu0
      %v1180 = vadd.f32 %v1128, %v1179
      %v1181 = vpop.f32.mrb[0].mxu0
      %1182 = vmatprep.mubr.bf16.mxu0 0
      %1183 = vmatmul.mubr.bf16.gmra.mrb[0].mxu0 %v1068
      %v1184 = vpop.f32.mrb[0].mxu0
      %v1185 = vadd.f32 %v1128, %v1184
      %v1186 = vpop.f32.mrb[0].mxu0
      %v1187 = vpop.f32.mrb[0].mxu0
      %v1188 = vadd.f32 %v1128, %v1187
      %v1189 = vpop.f32.mrb[0].mxu0
      %1190 = vdwg.mxu0
      %v1191 = vld [vmem:[%s869] sm:$0xf]
      %v1192 = vld [vmem:[%s869 + $0x4] sm:$0xf]
      %v1193 = vld [vmem:[%s869 + $0x8] sm:$0xf]
      %v1194 = vld [vmem:[%s869 + $0xc] sm:$0xf]
      %v1195 = vld [vmem:[%s872] sm:$0x1]
      %v1197 = vlaneseq
      %v1198 = vshrl.u32 %v1197, 7
      %v1199 = vsub.s32 0, %v1198
      %v1200 = vrot.slane %v1195, %v1199
      %v1206 = vunpack.c.l.b16 %v1191
      %v1207 = vunpack.c.l.b16 %v1192
      %v1208 = vunpack.c.l.b16 %v1193
      %v1209 = vunpack.c.l.b16 %v1194
      %v1210 = vpack.c.b16 %v1207, %v1206
      %v1211 = vpack.c.b16 %v1209, %v1208
      %1214 = vmatprep.subr.bf16.mxu0 0
      %1215 = vmatpush1.bf16.msra.mxu0 %v1210
      %1216 = vmatprep.subr.bf16.mxu0 0
      %1217 = vmatpush1.bf16.msra.mxu0 %v1211
      %1218 = vmatprep.subr.bf16.mxu0 0
      %1219 = vmatpush1.bf16.msra.mxu0 0
      %1220 = vmatprep.subr.bf16.mxu0 0
      %1221 = vmatpush1.bf16.msra.mxu0 0
      %1222 = vmatprep.subr.bf16.mxu0 0
      %1223 = vmatpush1.bf16.msra.mxu0 0
      %1224 = vmatprep.subr.bf16.mxu0 0
      %1225 = vmatpush1.bf16.msra.mxu0 0
      %1226 = vmatprep.subr.bf16.mxu0 0
      %1227 = vmatpush1.bf16.msra.mxu0 0
      %1228 = vmatprep.subr.bf16.mxu0 0
      %1229 = vmatpush1.bf16.msra.mxu0 0
      %1230 = vmatprep.subr.bf16.mxu0 0
      %1231 = vmatpush1.bf16.msra.mxu0 0
      %1232 = vmatprep.subr.bf16.mxu0 0
      %1233 = vmatpush1.bf16.msra.mxu0 0
      %1234 = vmatprep.subr.bf16.mxu0 0
      %1235 = vmatpush1.bf16.msra.mxu0 0
      %1236 = vmatprep.subr.bf16.mxu0 0
      %1237 = vmatpush1.bf16.msra.mxu0 0
      %1238 = vmatprep.subr.bf16.mxu0 0
      %1239 = vmatpush1.bf16.msra.mxu0 0
      %1240 = vmatprep.subr.bf16.mxu0 0
      %1241 = vmatpush1.bf16.msra.mxu0 0
      %1242 = vmatprep.subr.bf16.mxu0 0
      %1243 = vmatpush1.bf16.msra.mxu0 0
      %1244 = vmatprep.subr.bf16.mxu0 0
      %1245 = vmatpush1.bf16.msra.mxu0 0
      %1246 = vmatprep.mubr.bf16.mxu0 0
      %1247 = vmatmul.mubr.bf16.gmra.mrb[0].mxu0 %v1065
      %v1248 = vpop.f32.mrb[0].mxu0
      %v1249 = vadd.f32 %v1200, %v1248
      %v1250 = vpop.f32.mrb[0].mxu0
      %v1251 = vpop.f32.mrb[0].mxu0
      %v1252 = vadd.f32 %v1200, %v1251
      %v1253 = vpop.f32.mrb[0].mxu0
      %1254 = vmatprep.mubr.bf16.mxu0 0
      %1255 = vmatmul.mubr.bf16.gmra.mrb[0].mxu0 %v1068
      %v1256 = vpop.f32.mrb[0].mxu0
      %v1257 = vadd.f32 %v1200, %v1256
      %v1258 = vpop.f32.mrb[0].mxu0
      %v1259 = vpop.f32.mrb[0].mxu0
      %v1260 = vadd.f32 %v1200, %v1259
      %v1261 = vpop.f32.mrb[0].mxu0
      %1262 = vdwg.mxu0
      %v1263 = vpack.c.bf16 %v1108, %v1105
      %v1264 = vpack.c.bf16 %v1116, %v1113
      %v1265 = vpack.c.bf16 %v1180, %v1177
      %v1266 = vpack.c.bf16 %v1188, %v1185
      %v1267 = vpack.c.bf16 %v1252, %v1249
      %v1268 = vpack.c.bf16 %v1260, %v1257
      %vm1269 = vcmask 64512
      %v1271 = vsel %vm1269, %v1263, 0
      %v1274 = vsel %vm1269, %v1265, 0
      %1276 = vmatprep.subr.bf16.mxu0 0
      %1277 = vmatpush1.bf16.xpose.msra.mxu0 %v1274
      %1278 = vmatprep.subr.bf16.mxu0 0
      %1279 = vmatpush1.bf16.xpose.msra.mxu0 0
      %1280 = vmatprep.subr.bf16.mxu0 0
      %1281 = vmatpush1.bf16.xpose.msra.mxu0 0
      %1282 = vmatprep.subr.bf16.mxu0 0
      %1283 = vmatpush1.bf16.xpose.msra.mxu0 0
      %1284 = vmatprep.subr.bf16.mxu0 0
      %1285 = vmatpush1.bf16.xpose.msra.mxu0 0
      %1286 = vmatprep.subr.bf16.mxu0 0
      %1287 = vmatpush1.bf16.xpose.msra.mxu0 0
      %1288 = vmatprep.subr.bf16.mxu0 0
      %1289 = vmatpush1.bf16.xpose.msra.mxu0 0
      %1290 = vmatprep.subr.bf16.mxu0 0
      %1291 = vmatpush1.bf16.xpose.msra.mxu0 0
      %1292 = vmatprep.subr.bf16.mxu0 0
      %1293 = vmatpush1.bf16.xpose.msra.mxu0 0
      %1294 = vmatprep.subr.bf16.mxu0 0
      %1295 = vmatpush1.bf16.xpose.msra.mxu0 0
      %1296 = vmatprep.subr.bf16.mxu0 0
      %1297 = vmatpush1.bf16.xpose.msra.mxu0 0
      %1298 = vmatprep.subr.bf16.mxu0 0
      %1299 = vmatpush1.bf16.xpose.msra.mxu0 0
      %1300 = vmatprep.subr.bf16.mxu0 0
      %1301 = vmatpush1.bf16.xpose.msra.mxu0 0
      %1302 = vmatprep.subr.bf16.mxu0 0
      %1303 = vmatpush1.bf16.xpose.msra.mxu0 0
      %1304 = vmatprep.subr.bf16.mxu0 0
      %1305 = vmatpush1.bf16.xpose.msra.mxu0 0
      %1306 = vmatprep.subr.bf16.mxu0 0
      %1307 = vmatpush1.bf16.xpose.msra.mxu0 0
      %1308 = vmatprep.mubr.bf16.mxu0 0
      %1309 = vmatmul.mubr.bf16.gmra.mrb[0].mxu0 %v1271
      %v1310 = vpop.f32.mrb[0].mxu0
      %v1311 = vadd.f32 0.0, %v1310
      %v1312 = vpop.f32.mrb[0].mxu0
      %v1313 = vpop.f32.mrb[0].mxu0
      %v1314 = vadd.f32 0.0, %v1313
      %v1315 = vpop.f32.mrb[0].mxu0
      %1316 = vdwg.mxu0
      %v1318 = vsel %vm1269, %v1264, 0
      %v1321 = vsel %vm1269, %v1266, 0
      %1323 = vmatprep.subr.bf16.mxu0 0
      %1324 = vmatpush1.bf16.xpose.msra.mxu0 %v1321
      %1325 = vmatprep.subr.bf16.mxu0 0
      %1326 = vmatpush1.bf16.xpose.msra.mxu0 0
      %1327 = vmatprep.subr.bf16.mxu0 0
      %1328 = vmatpush1.bf16.xpose.msra.mxu0 0
      %1329 = vmatprep.subr.bf16.mxu0 0
      %1330 = vmatpush1.bf16.xpose.msra.mxu0 0
      %1331 = vmatprep.subr.bf16.mxu0 0
      %1332 = vmatpush1.bf16.xpose.msra.mxu0 0
      %1333 = vmatprep.subr.bf16.mxu0 0
      %1334 = vmatpush1.bf16.xpose.msra.mxu0 0
      %1335 = vmatprep.subr.bf16.mxu0 0
      %1336 = vmatpush1.bf16.xpose.msra.mxu0 0
      %1337 = vmatprep.subr.bf16.mxu0 0
      %1338 = vmatpush1.bf16.xpose.msra.mxu0 0
      %1339 = vmatprep.subr.bf16.mxu0 0
      %1340 = vmatpush1.bf16.xpose.msra.mxu0 0
      %1341 = vmatprep.subr.bf16.mxu0 0
      %1342 = vmatpush1.bf16.xpose.msra.mxu0 0
      %1343 = vmatprep.subr.bf16.mxu0 0
      %1344 = vmatpush1.bf16.xpose.msra.mxu0 0
      %1345 = vmatprep.subr.bf16.mxu0 0
      %1346 = vmatpush1.bf16.xpose.msra.mxu0 0
      %1347 = vmatprep.subr.bf16.mxu0 0
      %1348 = vmatpush1.bf16.xpose.msra.mxu0 0
      %1349 = vmatprep.subr.bf16.mxu0 0
      %1350 = vmatpush1.bf16.xpose.msra.mxu0 0
      %1351 = vmatprep.subr.bf16.mxu0 0
      %1352 = vmatpush1.bf16.xpose.msra.mxu0 0
      %1353 = vmatprep.subr.bf16.mxu0 0
      %1354 = vmatpush1.bf16.xpose.msra.mxu0 0
      %1355 = vmatprep.mubr.bf16.mxu0 0
      %1356 = vmatmul.mubr.bf16.gmra.mrb[0].mxu0 %v1318
      %v1357 = vpop.f32.mrb[0].mxu0
      %v1358 = vadd.f32 0.0, %v1357
      %v1359 = vpop.f32.mrb[0].mxu0
      %v1360 = vpop.f32.mrb[0].mxu0
      %v1361 = vadd.f32 0.0, %v1360
      %v1362 = vpop.f32.mrb[0].mxu0
      %1363 = vdwg.mxu0
      %vm1364 = vcmask 130048
      %v1365 = vsel %vm1364, %v1311, -inf
      %1366 = vmax.xlane.f32.xlu0 %v1365
      %v1367 = vpop.xlane.xlu0 %1366
      %v1368 = vsel %vm1364, %v1314, -inf
      %1369 = vmax.xlane.f32.xlu0 %v1368
      %v1370 = vpop.xlane.xlu0 %1369
      %v1371 = vsel %vm1364, %v1358, -inf
      %1372 = vmax.xlane.f32.xlu0 %v1371
      %v1373 = vpop.xlane.xlu0 %1372
      %v1374 = vsel %vm1364, %v1361, -inf
      %1375 = vmax.xlane.f32.xlu0 %v1374
      %v1376 = vpop.xlane.xlu0 %1375
      %v1377 = vsub.f32 %v1311, %v1367
      %v1378 = vsub.f32 %v1314, %v1370
      %v1379 = vsub.f32 %v1358, %v1373
      %v1380 = vsub.f32 %v1361, %v1376
      %v1381 = vmul.f32 %v1377, 1.442695
      %v1382 = vpow.pop %v1381
      %v1383 = vmul.f32 %v1378, 1.442695
      %v1384 = vpow.pop %v1383
      %v1385 = vmul.f32 %v1379, 1.442695
      %v1386 = vpow.pop %v1385
      %v1387 = vmul.f32 %v1380, 1.442695
      %v1388 = vpow.pop %v1387
      %v1389 = vsel %vm1364, %v1382, 0.0
      %1390 = vadd.xlane.f32.xlu0 %v1389
      %v1391 = vpop.xlane.xlu0 %1390
      %v1392 = vsel %vm1364, %v1384, 0.0
      %1393 = vadd.xlane.f32.xlu0 %v1392
      %v1394 = vpop.xlane.xlu0 %1393
      %v1395 = vsel %vm1364, %v1386, 0.0
      %1396 = vadd.xlane.f32.xlu0 %v1395
      %v1397 = vpop.xlane.xlu0 %1396
      %v1398 = vsel %vm1364, %v1388, 0.0
      %1399 = vadd.xlane.f32.xlu0 %v1398
      %v1400 = vpop.xlane.xlu0 %1399
      %v1401 = vrcp.pop %v1391
      %v1402 = vrcp.pop %v1394
      %v1403 = vrcp.pop %v1397
      %v1404 = vrcp.pop %v1400
      %v1405 = vmul.f32 %v1382, %v1401
      %v1406 = vmul.f32 %v1384, %v1402
      %v1407 = vmul.f32 %v1386, %v1403
      %v1408 = vmul.f32 %v1388, %v1404
      %v1409 = vpack.c.bf16 %v1406, %v1405
      %v1410 = vpack.c.bf16 %v1408, %v1407
      %v1412 = vsel %vm1364, %v1409, 0
      %1414 = vmatprep.subr.bf16.mxu0 0
      %1415 = vmatpush1.bf16.msra.mxu0 %v1267
      %1416 = vmatprep.subr.bf16.mxu0 0
      %1417 = vmatpush1.bf16.msra.mxu0 0
      %1418 = vmatprep.subr.bf16.mxu0 0
      %1419 = vmatpush1.bf16.msra.mxu0 0
      %1420 = vmatprep.subr.bf16.mxu0 0
      %1421 = vmatpush1.bf16.msra.mxu0 0
      %1422 = vmatprep.subr.bf16.mxu0 0
      %1423 = vmatpush1.bf16.msra.mxu0 0
      %1424 = vmatprep.subr.bf16.mxu0 0
      %1425 = vmatpush1.bf16.msra.mxu0 0
      %1426 = vmatprep.subr.bf16.mxu0 0
      %1427 = vmatpush1.bf16.msra.mxu0 0
      %1428 = vmatprep.subr.bf16.mxu0 0
      %1429 = vmatpush1.bf16.msra.mxu0 0
      %1430 = vmatprep.subr.bf16.mxu0 0
      %1431 = vmatpush1.bf16.msra.mxu0 0
      %1432 = vmatprep.subr.bf16.mxu0 0
      %1433 = vmatpush1.bf16.msra.mxu0 0
      %1434 = vmatprep.subr.bf16.mxu0 0
      %1435 = vmatpush1.bf16.msra.mxu0 0
      %1436 = vmatprep.subr.bf16.mxu0 0
      %1437 = vmatpush1.bf16.msra.mxu0 0
      %1438 = vmatprep.subr.bf16.mxu0 0
      %1439 = vmatpush1.bf16.msra.mxu0 0
      %1440 = vmatprep.subr.bf16.mxu0 0
      %1441 = vmatpush1.bf16.msra.mxu0 0
      %1442 = vmatprep.subr.bf16.mxu0 0
      %1443 = vmatpush1.bf16.msra.mxu0 0
      %1444 = vmatprep.subr.bf16.mxu0 0
      %1445 = vmatpush1.bf16.msra.mxu0 0
      %1446 = vmatprep.mubr.bf16.mxu0 0
      %1447 = vmatmul.mubr.bf16.gmra.mrb[0].mxu0 %v1412
      %v1448 = vpop.f32.mrb[0].mxu0
      %v1449 = vadd.f32 0.0, %v1448
      %v1450 = vpop.f32.mrb[0].mxu0
      %v1451 = vpop.f32.mrb[0].mxu0
      %v1452 = vadd.f32 0.0, %v1451
      %v1453 = vpop.f32.mrb[0].mxu0
      %1454 = vdwg.mxu0
      %v1456 = vsel %vm1364, %v1410, 0
      %1458 = vmatprep.subr.bf16.mxu0 0
      %1459 = vmatpush1.bf16.msra.mxu0 %v1268
      %1460 = vmatprep.subr.bf16.mxu0 0
      %1461 = vmatpush1.bf16.msra.mxu0 0
      %1462 = vmatprep.subr.bf16.mxu0 0
      %1463 = vmatpush1.bf16.msra.mxu0 0
      %1464 = vmatprep.subr.bf16.mxu0 0
      %1465 = vmatpush1.bf16.msra.mxu0 0
      %1466 = vmatprep.subr.bf16.mxu0 0
      %1467 = vmatpush1.bf16.msra.mxu0 0
      %1468 = vmatprep.subr.bf16.mxu0 0
      %1469 = vmatpush1.bf16.msra.mxu0 0
      %1470 = vmatprep.subr.bf16.mxu0 0
      %1471 = vmatpush1.bf16.msra.mxu0 0
      %1472 = vmatprep.subr.bf16.mxu0 0
      %1473 = vmatpush1.bf16.msra.mxu0 0
      %1474 = vmatprep.subr.bf16.mxu0 0
      %1475 = vmatpush1.bf16.msra.mxu0 0
      %1476 = vmatprep.subr.bf16.mxu0 0
      %1477 = vmatpush1.bf16.msra.mxu0 0
      %1478 = vmatprep.subr.bf16.mxu0 0
      %1479 = vmatpush1.bf16.msra.mxu0 0
      %1480 = vmatprep.subr.bf16.mxu0 0
      %1481 = vmatpush1.bf16.msra.mxu0 0
      %1482 = vmatprep.subr.bf16.mxu0 0
      %1483 = vmatpush1.bf16.msra.mxu0 0
      %1484 = vmatprep.subr.bf16.mxu0 0
      %1485 = vmatpush1.bf16.msra.mxu0 0
      %1486 = vmatprep.subr.bf16.mxu0 0
      %1487 = vmatpush1.bf16.msra.mxu0 0
      %1488 = vmatprep.subr.bf16.mxu0 0
      %1489 = vmatpush1.bf16.msra.mxu0 0
      %1490 = vmatprep.mubr.bf16.mxu0 0
      %1491 = vmatmul.mubr.bf16.gmra.mrb[0].mxu0 %v1456
      %v1492 = vpop.f32.mrb[0].mxu0
      %v1493 = vadd.f32 0.0, %v1492
      %v1494 = vpop.f32.mrb[0].mxu0
      %v1495 = vpop.f32.mrb[0].mxu0
      %v1496 = vadd.f32 0.0, %v1495
      %v1497 = vpop.f32.mrb[0].mxu0
      %1498 = vdwg.mxu0
      %1500 = vrot.lane.b32.xlu0 %v1263, 120
      %v1501 = vpop.permute.xlu0 %1500
      %1503 = vrot.lane.b32.xlu0 %v1265, 120
      %v1504 = vpop.permute.xlu0 %1503
      %v1506 = vsel %vm1269, %v1501, 0
      %v1509 = vsel %vm1269, %v1504, 0
      %1511 = vmatprep.subr.bf16.mxu0 0
      %1512 = vmatpush1.bf16.xpose.msra.mxu0 %v1509
      %1513 = vmatprep.subr.bf16.mxu0 0
      %1514 = vmatpush1.bf16.xpose.msra.mxu0 0
      %1515 = vmatprep.subr.bf16.mxu0 0
      %1516 = vmatpush1.bf16.xpose.msra.mxu0 0
      %1517 = vmatprep.subr.bf16.mxu0 0
      %1518 = vmatpush1.bf16.xpose.msra.mxu0 0
      %1519 = vmatprep.subr.bf16.mxu0 0
      %1520 = vmatpush1.bf16.xpose.msra.mxu0 0
      %1521 = vmatprep.subr.bf16.mxu0 0
      %1522 = vmatpush1.bf16.xpose.msra.mxu0 0
      %1523 = vmatprep.subr.bf16.mxu0 0
      %1524 = vmatpush1.bf16.xpose.msra.mxu0 0
      %1525 = vmatprep.subr.bf16.mxu0 0
      %1526 = vmatpush1.bf16.xpose.msra.mxu0 0
      %1527 = vmatprep.subr.bf16.mxu0 0
      %1528 = vmatpush1.bf16.xpose.msra.mxu0 0
      %1529 = vmatprep.subr.bf16.mxu0 0
      %1530 = vmatpush1.bf16.xpose.msra.mxu0 0
      %1531 = vmatprep.subr.bf16.mxu0 0
      %1532 = vmatpush1.bf16.xpose.msra.mxu0 0
      %1533 = vmatprep.subr.bf16.mxu0 0
      %1534 = vmatpush1.bf16.xpose.msra.mxu0 0
      %1535 = vmatprep.subr.bf16.mxu0 0
      %1536 = vmatpush1.bf16.xpose.msra.mxu0 0
      %1537 = vmatprep.subr.bf16.mxu0 0
      %1538 = vmatpush1.bf16.xpose.msra.mxu0 0
      %1539 = vmatprep.subr.bf16.mxu0 0
      %1540 = vmatpush1.bf16.xpose.msra.mxu0 0
      %1541 = vmatprep.subr.bf16.mxu0 0
      %1542 = vmatpush1.bf16.xpose.msra.mxu0 0
      %1543 = vmatprep.mubr.bf16.mxu0 0
      %1544 = vmatmul.mubr.bf16.gmra.mrb[0].mxu0 %v1506
      %v1545 = vpop.f32.mrb[0].mxu0
      %v1546 = vadd.f32 0.0, %v1545
      %v1547 = vpop.f32.mrb[0].mxu0
      %v1548 = vpop.f32.mrb[0].mxu0
      %v1549 = vadd.f32 0.0, %v1548
      %v1550 = vpop.f32.mrb[0].mxu0
      %1551 = vdwg.mxu0
      %1553 = vrot.lane.b32.xlu0 %v1264, 120
      %v1554 = vpop.permute.xlu0 %1553
      %1556 = vrot.lane.b32.xlu0 %v1266, 120
      %v1557 = vpop.permute.xlu0 %1556
      %v1559 = vsel %vm1269, %v1554, 0
      %v1562 = vsel %vm1269, %v1557, 0
      %1564 = vmatprep.subr.bf16.mxu0 0
      %1565 = vmatpush1.bf16.xpose.msra.mxu0 %v1562
      %1566 = vmatprep.subr.bf16.mxu0 0
      %1567 = vmatpush1.bf16.xpose.msra.mxu0 0
      %1568 = vmatprep.subr.bf16.mxu0 0
      %1569 = vmatpush1.bf16.xpose.msra.mxu0 0
      %1570 = vmatprep.subr.bf16.mxu0 0
      %1571 = vmatpush1.bf16.xpose.msra.mxu0 0
      %1572 = vmatprep.subr.bf16.mxu0 0
      %1573 = vmatpush1.bf16.xpose.msra.mxu0 0
      %1574 = vmatprep.subr.bf16.mxu0 0
      %1575 = vmatpush1.bf16.xpose.msra.mxu0 0
      %1576 = vmatprep.subr.bf16.mxu0 0
      %1577 = vmatpush1.bf16.xpose.msra.mxu0 0
      %1578 = vmatprep.subr.bf16.mxu0 0
      %1579 = vmatpush1.bf16.xpose.msra.mxu0 0
      %1580 = vmatprep.subr.bf16.mxu0 0
      %1581 = vmatpush1.bf16.xpose.msra.mxu0 0
      %1582 = vmatprep.subr.bf16.mxu0 0
      %1583 = vmatpush1.bf16.xpose.msra.mxu0 0
      %1584 = vmatprep.subr.bf16.mxu0 0
      %1585 = vmatpush1.bf16.xpose.msra.mxu0 0
      %1586 = vmatprep.subr.bf16.mxu0 0
      %1587 = vmatpush1.bf16.xpose.msra.mxu0 0
      %1588 = vmatprep.subr.bf16.mxu0 0
      %1589 = vmatpush1.bf16.xpose.msra.mxu0 0
      %1590 = vmatprep.subr.bf16.mxu0 0
      %1591 = vmatpush1.bf16.xpose.msra.mxu0 0
      %1592 = vmatprep.subr.bf16.mxu0 0
      %1593 = vmatpush1.bf16.xpose.msra.mxu0 0
      %1594 = vmatprep.subr.bf16.mxu0 0
      %1595 = vmatpush1.bf16.xpose.msra.mxu0 0
      %1596 = vmatprep.mubr.bf16.mxu0 0
      %1597 = vmatmul.mubr.bf16.gmra.mrb[0].mxu0 %v1559
      %v1598 = vpop.f32.mrb[0].mxu0
      %v1599 = vadd.f32 0.0, %v1598
      %v1600 = vpop.f32.mrb[0].mxu0
      %v1601 = vpop.f32.mrb[0].mxu0
      %v1602 = vadd.f32 0.0, %v1601
      %v1603 = vpop.f32.mrb[0].mxu0
      %1604 = vdwg.mxu0
      %v1605 = vsel %vm1364, %v1546, -inf
      %1606 = vmax.xlane.f32.xlu0 %v1605
      %v1607 = vpop.xlane.xlu0 %1606
      %v1608 = vsel %vm1364, %v1549, -inf
      %1609 = vmax.xlane.f32.xlu0 %v1608
      %v1610 = vpop.xlane.xlu0 %1609
      %v1611 = vsel %vm1364, %v1599, -inf
      %1612 = vmax.xlane.f32.xlu0 %v1611
      %v1613 = vpop.xlane.xlu0 %1612
      %v1614 = vsel %vm1364, %v1602, -inf
      %1615 = vmax.xlane.f32.xlu0 %v1614
      %v1616 = vpop.xlane.xlu0 %1615
      %v1617 = vsub.f32 %v1546, %v1607
      %v1618 = vsub.f32 %v1549, %v1610
      %v1619 = vsub.f32 %v1599, %v1613
      %v1620 = vsub.f32 %v1602, %v1616
      %v1621 = vmul.f32 %v1617, 1.442695
      %v1622 = vpow.pop %v1621
      %v1623 = vmul.f32 %v1618, 1.442695
      %v1624 = vpow.pop %v1623
      %v1625 = vmul.f32 %v1619, 1.442695
      %v1626 = vpow.pop %v1625
      %v1627 = vmul.f32 %v1620, 1.442695
      %v1628 = vpow.pop %v1627
      %v1629 = vsel %vm1364, %v1622, 0.0
      %1630 = vadd.xlane.f32.xlu0 %v1629
      %v1631 = vpop.xlane.xlu0 %1630
      %v1632 = vsel %vm1364, %v1624, 0.0
      %1633 = vadd.xlane.f32.xlu0 %v1632
      %v1634 = vpop.xlane.xlu0 %1633
      %v1635 = vsel %vm1364, %v1626, 0.0
      %1636 = vadd.xlane.f32.xlu0 %v1635
      %v1637 = vpop.xlane.xlu0 %1636
      %v1638 = vsel %vm1364, %v1628, 0.0
      %1639 = vadd.xlane.f32.xlu0 %v1638
      %v1640 = vpop.xlane.xlu0 %1639
      %v1641 = vrcp.pop %v1631
      %v1642 = vrcp.pop %v1634
      %v1643 = vrcp.pop %v1637
      %v1644 = vrcp.pop %v1640
      %v1645 = vmul.f32 %v1622, %v1641
      %v1646 = vmul.f32 %v1624, %v1642
      %v1647 = vmul.f32 %v1626, %v1643
      %v1648 = vmul.f32 %v1628, %v1644
      %v1649 = vpack.c.bf16 %v1646, %v1645
      %v1650 = vpack.c.bf16 %v1648, %v1647
      %1652 = vrot.lane.b32.xlu0 %v1267, 120
      %v1653 = vpop.permute.xlu0 %1652
      %v1656 = vsel %vm1364, %v1649, 0
      %1658 = vmatprep.subr.bf16.mxu0 0
      %1659 = vmatpush1.bf16.msra.mxu0 %v1653
      %1660 = vmatprep.subr.bf16.mxu0 0
      %1661 = vmatpush1.bf16.msra.mxu0 0
      %1662 = vmatprep.subr.bf16.mxu0 0
      %1663 = vmatpush1.bf16.msra.mxu0 0
      %1664 = vmatprep.subr.bf16.mxu0 0
      %1665 = vmatpush1.bf16.msra.mxu0 0
      %1666 = vmatprep.subr.bf16.mxu0 0
      %1667 = vmatpush1.bf16.msra.mxu0 0
      %1668 = vmatprep.subr.bf16.mxu0 0
      %1669 = vmatpush1.bf16.msra.mxu0 0
      %1670 = vmatprep.subr.bf16.mxu0 0
      %1671 = vmatpush1.bf16.msra.mxu0 0
      %1672 = vmatprep.subr.bf16.mxu0 0
      %1673 = vmatpush1.bf16.msra.mxu0 0
      %1674 = vmatprep.subr.bf16.mxu0 0
      %1675 = vmatpush1.bf16.msra.mxu0 0
      %1676 = vmatprep.subr.bf16.mxu0 0
      %1677 = vmatpush1.bf16.msra.mxu0 0
      %1678 = vmatprep.subr.bf16.mxu0 0
      %1679 = vmatpush1.bf16.msra.mxu0 0
      %1680 = vmatprep.subr.bf16.mxu0 0
      %1681 = vmatpush1.bf16.msra.mxu0 0
      %1682 = vmatprep.subr.bf16.mxu0 0
      %1683 = vmatpush1.bf16.msra.mxu0 0
      %1684 = vmatprep.subr.bf16.mxu0 0
      %1685 = vmatpush1.bf16.msra.mxu0 0
      %1686 = vmatprep.subr.bf16.mxu0 0
      %1687 = vmatpush1.bf16.msra.mxu0 0
      %1688 = vmatprep.subr.bf16.mxu0 0
      %1689 = vmatpush1.bf16.msra.mxu0 0
      %1690 = vmatprep.mubr.bf16.mxu0 0
      %1691 = vmatmul.mubr.bf16.gmra.mrb[0].mxu0 %v1656
      %v1692 = vpop.f32.mrb[0].mxu0
      %v1693 = vadd.f32 0.0, %v1692
      %v1694 = vpop.f32.mrb[0].mxu0
      %v1695 = vpop.f32.mrb[0].mxu0
      %v1696 = vadd.f32 0.0, %v1695
      %v1697 = vpop.f32.mrb[0].mxu0
      %1698 = vdwg.mxu0
      %1700 = vrot.lane.b32.xlu0 %v1268, 120
      %v1701 = vpop.permute.xlu0 %1700
      %v1704 = vsel %vm1364, %v1650, 0
      %1706 = vmatprep.subr.bf16.mxu0 0
      %1707 = vmatpush1.bf16.msra.mxu0 %v1701
      %1708 = vmatprep.subr.bf16.mxu0 0
      %1709 = vmatpush1.bf16.msra.mxu0 0
      %1710 = vmatprep.subr.bf16.mxu0 0
      %1711 = vmatpush1.bf16.msra.mxu0 0
      %1712 = vmatprep.subr.bf16.mxu0 0
      %1713 = vmatpush1.bf16.msra.mxu0 0
      %1714 = vmatprep.subr.bf16.mxu0 0
      %1715 = vmatpush1.bf16.msra.mxu0 0
      %1716 = vmatprep.subr.bf16.mxu0 0
      %1717 = vmatpush1.bf16.msra.mxu0 0
      %1718 = vmatprep.subr.bf16.mxu0 0
      %1719 = vmatpush1.bf16.msra.mxu0 0
      %1720 = vmatprep.subr.bf16.mxu0 0
      %1721 = vmatpush1.bf16.msra.mxu0 0
      %1722 = vmatprep.subr.bf16.mxu0 0
      %1723 = vmatpush1.bf16.msra.mxu0 0
      %1724 = vmatprep.subr.bf16.mxu0 0
      %1725 = vmatpush1.bf16.msra.mxu0 0
      %1726 = vmatprep.subr.bf16.mxu0 0
      %1727 = vmatpush1.bf16.msra.mxu0 0
      %1728 = vmatprep.subr.bf16.mxu0 0
      %1729 = vmatpush1.bf16.msra.mxu0 0
      %1730 = vmatprep.subr.bf16.mxu0 0
      %1731 = vmatpush1.bf16.msra.mxu0 0
      %1732 = vmatprep.subr.bf16.mxu0 0
      %1733 = vmatpush1.bf16.msra.mxu0 0
      %1734 = vmatprep.subr.bf16.mxu0 0
      %1735 = vmatpush1.bf16.msra.mxu0 0
      %1736 = vmatprep.subr.bf16.mxu0 0
      %1737 = vmatpush1.bf16.msra.mxu0 0
      %1738 = vmatprep.mubr.bf16.mxu0 0
      %1739 = vmatmul.mubr.bf16.gmra.mrb[0].mxu0 %v1704
      %v1740 = vpop.f32.mrb[0].mxu0
      %v1741 = vadd.f32 0.0, %v1740
      %v1742 = vpop.f32.mrb[0].mxu0
      %v1743 = vpop.f32.mrb[0].mxu0
      %v1744 = vadd.f32 0.0, %v1743
      %v1745 = vpop.f32.mrb[0].mxu0
      %1746 = vdwg.mxu0
      %1747 = vrot.lane.b32.xlu0 %v1263, 112
      %v1748 = vpop.permute.xlu0 %1747
      %1749 = vrot.lane.b32.xlu0 %v1265, 112
      %v1750 = vpop.permute.xlu0 %1749
      %v1752 = vsel %vm1269, %v1748, 0
      %v1755 = vsel %vm1269, %v1750, 0
      %1757 = vmatprep.subr.bf16.mxu0 0
      %1758 = vmatpush1.bf16.xpose.msra.mxu0 %v1755
      %1759 = vmatprep.subr.bf16.mxu0 0
      %1760 = vmatpush1.bf16.xpose.msra.mxu0 0
      %1761 = vmatprep.subr.bf16.mxu0 0
      %1762 = vmatpush1.bf16.xpose.msra.mxu0 0
      %1763 = vmatprep.subr.bf16.mxu0 0
      %1764 = vmatpush1.bf16.xpose.msra.mxu0 0
      %1765 = vmatprep.subr.bf16.mxu0 0
      %1766 = vmatpush1.bf16.xpose.msra.mxu0 0
      %1767 = vmatprep.subr.bf16.mxu0 0
      %1768 = vmatpush1.bf16.xpose.msra.mxu0 0
      %1769 = vmatprep.subr.bf16.mxu0 0
      %1770 = vmatpush1.bf16.xpose.msra.mxu0 0
      %1771 = vmatprep.subr.bf16.mxu0 0
      %1772 = vmatpush1.bf16.xpose.msra.mxu0 0
      %1773 = vmatprep.subr.bf16.mxu0 0
      %1774 = vmatpush1.bf16.xpose.msra.mxu0 0
      %1775 = vmatprep.subr.bf16.mxu0 0
      %1776 = vmatpush1.bf16.xpose.msra.mxu0 0
      %1777 = vmatprep.subr.bf16.mxu0 0
      %1778 = vmatpush1.bf16.xpose.msra.mxu0 0
      %1779 = vmatprep.subr.bf16.mxu0 0
      %1780 = vmatpush1.bf16.xpose.msra.mxu0 0
      %1781 = vmatprep.subr.bf16.mxu0 0
      %1782 = vmatpush1.bf16.xpose.msra.mxu0 0
      %1783 = vmatprep.subr.bf16.mxu0 0
      %1784 = vmatpush1.bf16.xpose.msra.mxu0 0
      %1785 = vmatprep.subr.bf16.mxu0 0
      %1786 = vmatpush1.bf16.xpose.msra.mxu0 0
      %1787 = vmatprep.subr.bf16.mxu0 0
      %1788 = vmatpush1.bf16.xpose.msra.mxu0 0
      %1789 = vmatprep.mubr.bf16.mxu0 0
      %1790 = vmatmul.mubr.bf16.gmra.mrb[0].mxu0 %v1752
      %v1791 = vpop.f32.mrb[0].mxu0
      %v1792 = vadd.f32 0.0, %v1791
      %v1793 = vpop.f32.mrb[0].mxu0
      %v1794 = vpop.f32.mrb[0].mxu0
      %v1795 = vadd.f32 0.0, %v1794
      %v1796 = vpop.f32.mrb[0].mxu0
      %1797 = vdwg.mxu0
      %1798 = vrot.lane.b32.xlu0 %v1264, 112
      %v1799 = vpop.permute.xlu0 %1798
      %1800 = vrot.lane.b32.xlu0 %v1266, 112
      %v1801 = vpop.permute.xlu0 %1800
      %v1803 = vsel %vm1269, %v1799, 0
      %v1806 = vsel %vm1269, %v1801, 0
      %1808 = vmatprep.subr.bf16.mxu0 0
      %1809 = vmatpush1.bf16.xpose.msra.mxu0 %v1806
      %1810 = vmatprep.subr.bf16.mxu0 0
      %1811 = vmatpush1.bf16.xpose.msra.mxu0 0
      %1812 = vmatprep.subr.bf16.mxu0 0
      %1813 = vmatpush1.bf16.xpose.msra.mxu0 0
      %1814 = vmatprep.subr.bf16.mxu0 0
      %1815 = vmatpush1.bf16.xpose.msra.mxu0 0
      %1816 = vmatprep.subr.bf16.mxu0 0
      %1817 = vmatpush1.bf16.xpose.msra.mxu0 0
      %1818 = vmatprep.subr.bf16.mxu0 0
      %1819 = vmatpush1.bf16.xpose.msra.mxu0 0
      %1820 = vmatprep.subr.bf16.mxu0 0
      %1821 = vmatpush1.bf16.xpose.msra.mxu0 0
      %1822 = vmatprep.subr.bf16.mxu0 0
      %1823 = vmatpush1.bf16.xpose.msra.mxu0 0
      %1824 = vmatprep.subr.bf16.mxu0 0
      %1825 = vmatpush1.bf16.xpose.msra.mxu0 0
      %1826 = vmatprep.subr.bf16.mxu0 0
      %1827 = vmatpush1.bf16.xpose.msra.mxu0 0
      %1828 = vmatprep.subr.bf16.mxu0 0
      %1829 = vmatpush1.bf16.xpose.msra.mxu0 0
      %1830 = vmatprep.subr.bf16.mxu0 0
      %1831 = vmatpush1.bf16.xpose.msra.mxu0 0
      %1832 = vmatprep.subr.bf16.mxu0 0
      %1833 = vmatpush1.bf16.xpose.msra.mxu0 0
      %1834 = vmatprep.subr.bf16.mxu0 0
      %1835 = vmatpush1.bf16.xpose.msra.mxu0 0
      %1836 = vmatprep.subr.bf16.mxu0 0
      %1837 = vmatpush1.bf16.xpose.msra.mxu0 0
      %1838 = vmatprep.subr.bf16.mxu0 0
      %1839 = vmatpush1.bf16.xpose.msra.mxu0 0
      %1840 = vmatprep.mubr.bf16.mxu0 0
      %1841 = vmatmul.mubr.bf16.gmra.mrb[0].mxu0 %v1803
      %v1842 = vpop.f32.mrb[0].mxu0
      %v1843 = vadd.f32 0.0, %v1842
      %v1844 = vpop.f32.mrb[0].mxu0
      %v1845 = vpop.f32.mrb[0].mxu0
      %v1846 = vadd.f32 0.0, %v1845
      %v1847 = vpop.f32.mrb[0].mxu0
      %1848 = vdwg.mxu0
      %v1849 = vsel %vm1364, %v1792, -inf
      %1850 = vmax.xlane.f32.xlu0 %v1849
      %v1851 = vpop.xlane.xlu0 %1850
      %v1852 = vsel %vm1364, %v1795, -inf
      %1853 = vmax.xlane.f32.xlu0 %v1852
      %v1854 = vpop.xlane.xlu0 %1853
      %v1855 = vsel %vm1364, %v1843, -inf
      %1856 = vmax.xlane.f32.xlu0 %v1855
      %v1857 = vpop.xlane.xlu0 %1856
      %v1858 = vsel %vm1364, %v1846, -inf
      %1859 = vmax.xlane.f32.xlu0 %v1858
      %v1860 = vpop.xlane.xlu0 %1859
      %v1861 = vsub.f32 %v1792, %v1851
      %v1862 = vsub.f32 %v1795, %v1854
      %v1863 = vsub.f32 %v1843, %v1857
      %v1864 = vsub.f32 %v1846, %v1860
      %v1865 = vmul.f32 %v1861, 1.442695
      %v1866 = vpow.pop %v1865
      %v1867 = vmul.f32 %v1862, 1.442695
      %v1868 = vpow.pop %v1867
      %v1869 = vmul.f32 %v1863, 1.442695
      %v1870 = vpow.pop %v1869
      %v1871 = vmul.f32 %v1864, 1.442695
      %v1872 = vpow.pop %v1871
      %v1873 = vsel %vm1364, %v1866, 0.0
      %1874 = vadd.xlane.f32.xlu0 %v1873
      %v1875 = vpop.xlane.xlu0 %1874
      %v1876 = vsel %vm1364, %v1868, 0.0
      %1877 = vadd.xlane.f32.xlu0 %v1876
      %v1878 = vpop.xlane.xlu0 %1877
      %v1879 = vsel %vm1364, %v1870, 0.0
      %1880 = vadd.xlane.f32.xlu0 %v1879
      %v1881 = vpop.xlane.xlu0 %1880
      %v1882 = vsel %vm1364, %v1872, 0.0
      %1883 = vadd.xlane.f32.xlu0 %v1882
      %v1884 = vpop.xlane.xlu0 %1883
      %v1885 = vrcp.pop %v1875
      %v1886 = vrcp.pop %v1878
      %v1887 = vrcp.pop %v1881
      %v1888 = vrcp.pop %v1884
      %v1889 = vmul.f32 %v1866, %v1885
      %v1890 = vmul.f32 %v1868, %v1886
      %v1891 = vmul.f32 %v1870, %v1887
      %v1892 = vmul.f32 %v1872, %v1888
      %v1893 = vpack.c.bf16 %v1890, %v1889
      %v1894 = vpack.c.bf16 %v1892, %v1891
      %1895 = vrot.lane.b32.xlu0 %v1267, 112
      %v1896 = vpop.permute.xlu0 %1895
      %v1899 = vsel %vm1364, %v1893, 0
      %1901 = vmatprep.subr.bf16.mxu0 0
      %1902 = vmatpush1.bf16.msra.mxu0 %v1896
      %1903 = vmatprep.subr.bf16.mxu0 0
      %1904 = vmatpush1.bf16.msra.mxu0 0
      %1905 = vmatprep.subr.bf16.mxu0 0
      %1906 = vmatpush1.bf16.msra.mxu0 0
      %1907 = vmatprep.subr.bf16.mxu0 0
      %1908 = vmatpush1.bf16.msra.mxu0 0
      %1909 = vmatprep.subr.bf16.mxu0 0
      %1910 = vmatpush1.bf16.msra.mxu0 0
      %1911 = vmatprep.subr.bf16.mxu0 0
      %1912 = vmatpush1.bf16.msra.mxu0 0
      %1913 = vmatprep.subr.bf16.mxu0 0
      %1914 = vmatpush1.bf16.msra.mxu0 0
      %1915 = vmatprep.subr.bf16.mxu0 0
      %1916 = vmatpush1.bf16.msra.mxu0 0
      %1917 = vmatprep.subr.bf16.mxu0 0
      %1918 = vmatpush1.bf16.msra.mxu0 0
      %1919 = vmatprep.subr.bf16.mxu0 0
      %1920 = vmatpush1.bf16.msra.mxu0 0
      %1921 = vmatprep.subr.bf16.mxu0 0
      %1922 = vmatpush1.bf16.msra.mxu0 0
      %1923 = vmatprep.subr.bf16.mxu0 0
      %1924 = vmatpush1.bf16.msra.mxu0 0
      %1925 = vmatprep.subr.bf16.mxu0 0
      %1926 = vmatpush1.bf16.msra.mxu0 0
      %1927 = vmatprep.subr.bf16.mxu0 0
      %1928 = vmatpush1.bf16.msra.mxu0 0
      %1929 = vmatprep.subr.bf16.mxu0 0
      %1930 = vmatpush1.bf16.msra.mxu0 0
      %1931 = vmatprep.subr.bf16.mxu0 0
      %1932 = vmatpush1.bf16.msra.mxu0 0
      %1933 = vmatprep.mubr.bf16.mxu0 0
      %1934 = vmatmul.mubr.bf16.gmra.mrb[0].mxu0 %v1899
      %v1935 = vpop.f32.mrb[0].mxu0
      %v1936 = vadd.f32 0.0, %v1935
      %v1937 = vpop.f32.mrb[0].mxu0
      %v1938 = vpop.f32.mrb[0].mxu0
      %v1939 = vadd.f32 0.0, %v1938
      %v1940 = vpop.f32.mrb[0].mxu0
      %1941 = vdwg.mxu0
      %1942 = vrot.lane.b32.xlu0 %v1268, 112
      %v1943 = vpop.permute.xlu0 %1942
      %v1946 = vsel %vm1364, %v1894, 0
      %1948 = vmatprep.subr.bf16.mxu0 0
      %1949 = vmatpush1.bf16.msra.mxu0 %v1943
      %1950 = vmatprep.subr.bf16.mxu0 0
      %1951 = vmatpush1.bf16.msra.mxu0 0
      %1952 = vmatprep.subr.bf16.mxu0 0
      %1953 = vmatpush1.bf16.msra.mxu0 0
      %1954 = vmatprep.subr.bf16.mxu0 0
      %1955 = vmatpush1.bf16.msra.mxu0 0
      %1956 = vmatprep.subr.bf16.mxu0 0
      %1957 = vmatpush1.bf16.msra.mxu0 0
      %1958 = vmatprep.subr.bf16.mxu0 0
      %1959 = vmatpush1.bf16.msra.mxu0 0
      %1960 = vmatprep.subr.bf16.mxu0 0
      %1961 = vmatpush1.bf16.msra.mxu0 0
      %1962 = vmatprep.subr.bf16.mxu0 0
      %1963 = vmatpush1.bf16.msra.mxu0 0
      %1964 = vmatprep.subr.bf16.mxu0 0
      %1965 = vmatpush1.bf16.msra.mxu0 0
      %1966 = vmatprep.subr.bf16.mxu0 0
      %1967 = vmatpush1.bf16.msra.mxu0 0
      %1968 = vmatprep.subr.bf16.mxu0 0
      %1969 = vmatpush1.bf16.msra.mxu0 0
      %1970 = vmatprep.subr.bf16.mxu0 0
      %1971 = vmatpush1.bf16.msra.mxu0 0
      %1972 = vmatprep.subr.bf16.mxu0 0
      %1973 = vmatpush1.bf16.msra.mxu0 0
      %1974 = vmatprep.subr.bf16.mxu0 0
      %1975 = vmatpush1.bf16.msra.mxu0 0
      %1976 = vmatprep.subr.bf16.mxu0 0
      %1977 = vmatpush1.bf16.msra.mxu0 0
      %1978 = vmatprep.subr.bf16.mxu0 0
      %1979 = vmatpush1.bf16.msra.mxu0 0
      %1980 = vmatprep.mubr.bf16.mxu0 0
      %1981 = vmatmul.mubr.bf16.gmra.mrb[0].mxu0 %v1946
      %v1982 = vpop.f32.mrb[0].mxu0
      %v1983 = vadd.f32 0.0, %v1982
      %v1984 = vpop.f32.mrb[0].mxu0
      %v1985 = vpop.f32.mrb[0].mxu0
      %v1986 = vadd.f32 0.0, %v1985
      %v1987 = vpop.f32.mrb[0].mxu0
      %1988 = vdwg.mxu0
      %1989 = vrot.lane.b32.xlu0 %v1263, 104
      %v1990 = vpop.permute.xlu0 %1989
      %1991 = vrot.lane.b32.xlu0 %v1265, 104
      %v1992 = vpop.permute.xlu0 %1991
      %v1994 = vsel %vm1269, %v1990, 0
      %v1997 = vsel %vm1269, %v1992, 0
      %1999 = vmatprep.subr.bf16.mxu0 0
      %2000 = vmatpush1.bf16.xpose.msra.mxu0 %v1997
      %2001 = vmatprep.subr.bf16.mxu0 0
      %2002 = vmatpush1.bf16.xpose.msra.mxu0 0
      %2003 = vmatprep.subr.bf16.mxu0 0
      %2004 = vmatpush1.bf16.xpose.msra.mxu0 0
      %2005 = vmatprep.subr.bf16.mxu0 0
      %2006 = vmatpush1.bf16.xpose.msra.mxu0 0
      %2007 = vmatprep.subr.bf16.mxu0 0
      %2008 = vmatpush1.bf16.xpose.msra.mxu0 0
      %2009 = vmatprep.subr.bf16.mxu0 0
      %2010 = vmatpush1.bf16.xpose.msra.mxu0 0
      %2011 = vmatprep.subr.bf16.mxu0 0
      %2012 = vmatpush1.bf16.xpose.msra.mxu0 0
      %2013 = vmatprep.subr.bf16.mxu0 0
      %2014 = vmatpush1.bf16.xpose.msra.mxu0 0
      %2015 = vmatprep.subr.bf16.mxu0 0
      %2016 = vmatpush1.bf16.xpose.msra.mxu0 0
      %2017 = vmatprep.subr.bf16.mxu0 0
      %2018 = vmatpush1.bf16.xpose.msra.mxu0 0
      %2019 = vmatprep.subr.bf16.mxu0 0
      %2020 = vmatpush1.bf16.xpose.msra.mxu0 0
      %2021 = vmatprep.subr.bf16.mxu0 0
      %2022 = vmatpush1.bf16.xpose.msra.mxu0 0
      %2023 = vmatprep.subr.bf16.mxu0 0
      %2024 = vmatpush1.bf16.xpose.msra.mxu0 0
      %2025 = vmatprep.subr.bf16.mxu0 0
      %2026 = vmatpush1.bf16.xpose.msra.mxu0 0
      %2027 = vmatprep.subr.bf16.mxu0 0
      %2028 = vmatpush1.bf16.xpose.msra.mxu0 0
      %2029 = vmatprep.subr.bf16.mxu0 0
      %2030 = vmatpush1.bf16.xpose.msra.mxu0 0
      %2031 = vmatprep.mubr.bf16.mxu0 0
      %2032 = vmatmul.mubr.bf16.gmra.mrb[0].mxu0 %v1994
      %v2033 = vpop.f32.mrb[0].mxu0
      %v2034 = vadd.f32 0.0, %v2033
      %v2035 = vpop.f32.mrb[0].mxu0
      %v2036 = vpop.f32.mrb[0].mxu0
      %v2037 = vadd.f32 0.0, %v2036
      %v2038 = vpop.f32.mrb[0].mxu0
      %2039 = vdwg.mxu0
      %2040 = vrot.lane.b32.xlu0 %v1264, 104
      %v2041 = vpop.permute.xlu0 %2040
      %2042 = vrot.lane.b32.xlu0 %v1266, 104
      %v2043 = vpop.permute.xlu0 %2042
      %v2045 = vsel %vm1269, %v2041, 0
      %v2048 = vsel %vm1269, %v2043, 0
      %2050 = vmatprep.subr.bf16.mxu0 0
      %2051 = vmatpush1.bf16.xpose.msra.mxu0 %v2048
      %2052 = vmatprep.subr.bf16.mxu0 0
      %2053 = vmatpush1.bf16.xpose.msra.mxu0 0
      %2054 = vmatprep.subr.bf16.mxu0 0
      %2055 = vmatpush1.bf16.xpose.msra.mxu0 0
      %2056 = vmatprep.subr.bf16.mxu0 0
      %2057 = vmatpush1.bf16.xpose.msra.mxu0 0
      %2058 = vmatprep.subr.bf16.mxu0 0
      %2059 = vmatpush1.bf16.xpose.msra.mxu0 0
      %2060 = vmatprep.subr.bf16.mxu0 0
      %2061 = vmatpush1.bf16.xpose.msra.mxu0 0
      %2062 = vmatprep.subr.bf16.mxu0 0
      %2063 = vmatpush1.bf16.xpose.msra.mxu0 0
      %2064 = vmatprep.subr.bf16.mxu0 0
      %2065 = vmatpush1.bf16.xpose.msra.mxu0 0
      %2066 = vmatprep.subr.bf16.mxu0 0
      %2067 = vmatpush1.bf16.xpose.msra.mxu0 0
      %2068 = vmatprep.subr.bf16.mxu0 0
      %2069 = vmatpush1.bf16.xpose.msra.mxu0 0
      %2070 = vmatprep.subr.bf16.mxu0 0
      %2071 = vmatpush1.bf16.xpose.msra.mxu0 0
      %2072 = vmatprep.subr.bf16.mxu0 0
      %2073 = vmatpush1.bf16.xpose.msra.mxu0 0
      %2074 = vmatprep.subr.bf16.mxu0 0
      %2075 = vmatpush1.bf16.xpose.msra.mxu0 0
      %2076 = vmatprep.subr.bf16.mxu0 0
      %2077 = vmatpush1.bf16.xpose.msra.mxu0 0
      %2078 = vmatprep.subr.bf16.mxu0 0
      %2079 = vmatpush1.bf16.xpose.msra.mxu0 0
      %2080 = vmatprep.subr.bf16.mxu0 0
      %2081 = vmatpush1.bf16.xpose.msra.mxu0 0
      %2082 = vmatprep.mubr.bf16.mxu0 0
      %2083 = vmatmul.mubr.bf16.gmra.mrb[0].mxu0 %v2045
      %v2084 = vpop.f32.mrb[0].mxu0
      %v2085 = vadd.f32 0.0, %v2084
      %v2086 = vpop.f32.mrb[0].mxu0
      %v2087 = vpop.f32.mrb[0].mxu0
      %v2088 = vadd.f32 0.0, %v2087
      %v2089 = vpop.f32.mrb[0].mxu0
      %2090 = vdwg.mxu0
      %v2091 = vsel %vm1364, %v2034, -inf
      %2092 = vmax.xlane.f32.xlu0 %v2091
      %v2093 = vpop.xlane.xlu0 %2092
      %v2094 = vsel %vm1364, %v2037, -inf
      %2095 = vmax.xlane.f32.xlu0 %v2094
      %v2096 = vpop.xlane.xlu0 %2095
      %v2097 = vsel %vm1364, %v2085, -inf
      %2098 = vmax.xlane.f32.xlu0 %v2097
      %v2099 = vpop.xlane.xlu0 %2098
      %v2100 = vsel %vm1364, %v2088, -inf
      %2101 = vmax.xlane.f32.xlu0 %v2100
      %v2102 = vpop.xlane.xlu0 %2101
      %v2103 = vsub.f32 %v2034, %v2093
      %v2104 = vsub.f32 %v2037, %v2096
      %v2105 = vsub.f32 %v2085, %v2099
      %v2106 = vsub.f32 %v2088, %v2102
      %v2107 = vmul.f32 %v2103, 1.442695
      %v2108 = vpow.pop %v2107
      %v2109 = vmul.f32 %v2104, 1.442695
      %v2110 = vpow.pop %v2109
      %v2111 = vmul.f32 %v2105, 1.442695
      %v2112 = vpow.pop %v2111
      %v2113 = vmul.f32 %v2106, 1.442695
      %v2114 = vpow.pop %v2113
      %v2115 = vsel %vm1364, %v2108, 0.0
      %2116 = vadd.xlane.f32.xlu0 %v2115
      %v2117 = vpop.xlane.xlu0 %2116
      %v2118 = vsel %vm1364, %v2110, 0.0
      %2119 = vadd.xlane.f32.xlu0 %v2118
      %v2120 = vpop.xlane.xlu0 %2119
      %v2121 = vsel %vm1364, %v2112, 0.0
      %2122 = vadd.xlane.f32.xlu0 %v2121
      %v2123 = vpop.xlane.xlu0 %2122
      %v2124 = vsel %vm1364, %v2114, 0.0
      %2125 = vadd.xlane.f32.xlu0 %v2124
      %v2126 = vpop.xlane.xlu0 %2125
      %v2127 = vrcp.pop %v2117
      %v2128 = vrcp.pop %v2120
      %v2129 = vrcp.pop %v2123
      %v2130 = vrcp.pop %v2126
      %v2131 = vmul.f32 %v2108, %v2127
      %v2132 = vmul.f32 %v2110, %v2128
      %v2133 = vmul.f32 %v2112, %v2129
      %v2134 = vmul.f32 %v2114, %v2130
      %v2135 = vpack.c.bf16 %v2132, %v2131
      %v2136 = vpack.c.bf16 %v2134, %v2133
      %2137 = vrot.lane.b32.xlu0 %v1267, 104
      %v2138 = vpop.permute.xlu0 %2137
      %v2141 = vsel %vm1364, %v2135, 0
      %2143 = vmatprep.subr.bf16.mxu0 0
      %2144 = vmatpush1.bf16.msra.mxu0 %v2138
      %2145 = vmatprep.subr.bf16.mxu0 0
      %2146 = vmatpush1.bf16.msra.mxu0 0
      %2147 = vmatprep.subr.bf16.mxu0 0
      %2148 = vmatpush1.bf16.msra.mxu0 0
      %2149 = vmatprep.subr.bf16.mxu0 0
      %2150 = vmatpush1.bf16.msra.mxu0 0
      %2151 = vmatprep.subr.bf16.mxu0 0
      %2152 = vmatpush1.bf16.msra.mxu0 0
      %2153 = vmatprep.subr.bf16.mxu0 0
      %2154 = vmatpush1.bf16.msra.mxu0 0
      %2155 = vmatprep.subr.bf16.mxu0 0
      %2156 = vmatpush1.bf16.msra.mxu0 0
      %2157 = vmatprep.subr.bf16.mxu0 0
      %2158 = vmatpush1.bf16.msra.mxu0 0
      %2159 = vmatprep.subr.bf16.mxu0 0
      %2160 = vmatpush1.bf16.msra.mxu0 0
      %2161 = vmatprep.subr.bf16.mxu0 0
      %2162 = vmatpush1.bf16.msra.mxu0 0
      %2163 = vmatprep.subr.bf16.mxu0 0
      %2164 = vmatpush1.bf16.msra.mxu0 0
      %2165 = vmatprep.subr.bf16.mxu0 0
      %2166 = vmatpush1.bf16.msra.mxu0 0
      %2167 = vmatprep.subr.bf16.mxu0 0
      %2168 = vmatpush1.bf16.msra.mxu0 0
      %2169 = vmatprep.subr.bf16.mxu0 0
      %2170 = vmatpush1.bf16.msra.mxu0 0
      %2171 = vmatprep.subr.bf16.mxu0 0
      %2172 = vmatpush1.bf16.msra.mxu0 0
      %2173 = vmatprep.subr.bf16.mxu0 0
      %2174 = vmatpush1.bf16.msra.mxu0 0
      %2175 = vmatprep.mubr.bf16.mxu0 0
      %2176 = vmatmul.mubr.bf16.gmra.mrb[0].mxu0 %v2141
      %v2177 = vpop.f32.mrb[0].mxu0
      %v2178 = vadd.f32 0.0, %v2177
      %v2179 = vpop.f32.mrb[0].mxu0
      %v2180 = vpop.f32.mrb[0].mxu0
      %v2181 = vadd.f32 0.0, %v2180
      %v2182 = vpop.f32.mrb[0].mxu0
      %2183 = vdwg.mxu0
      %2184 = vrot.lane.b32.xlu0 %v1268, 104
      %v2185 = vpop.permute.xlu0 %2184
      %v2188 = vsel %vm1364, %v2136, 0
      %2190 = vmatprep.subr.bf16.mxu0 0
      %2191 = vmatpush1.bf16.msra.mxu0 %v2185
      %2192 = vmatprep.subr.bf16.mxu0 0
      %2193 = vmatpush1.bf16.msra.mxu0 0
      %2194 = vmatprep.subr.bf16.mxu0 0
      %2195 = vmatpush1.bf16.msra.mxu0 0
      %2196 = vmatprep.subr.bf16.mxu0 0
      %2197 = vmatpush1.bf16.msra.mxu0 0
      %2198 = vmatprep.subr.bf16.mxu0 0
      %2199 = vmatpush1.bf16.msra.mxu0 0
      %2200 = vmatprep.subr.bf16.mxu0 0
      %2201 = vmatpush1.bf16.msra.mxu0 0
      %2202 = vmatprep.subr.bf16.mxu0 0
      %2203 = vmatpush1.bf16.msra.mxu0 0
      %2204 = vmatprep.subr.bf16.mxu0 0
      %2205 = vmatpush1.bf16.msra.mxu0 0
      %2206 = vmatprep.subr.bf16.mxu0 0
      %2207 = vmatpush1.bf16.msra.mxu0 0
      %2208 = vmatprep.subr.bf16.mxu0 0
      %2209 = vmatpush1.bf16.msra.mxu0 0
      %2210 = vmatprep.subr.bf16.mxu0 0
      %2211 = vmatpush1.bf16.msra.mxu0 0
      %2212 = vmatprep.subr.bf16.mxu0 0
      %2213 = vmatpush1.bf16.msra.mxu0 0
      %2214 = vmatprep.subr.bf16.mxu0 0
      %2215 = vmatpush1.bf16.msra.mxu0 0
      %2216 = vmatprep.subr.bf16.mxu0 0
      %2217 = vmatpush1.bf16.msra.mxu0 0
      %2218 = vmatprep.subr.bf16.mxu0 0
      %2219 = vmatpush1.bf16.msra.mxu0 0
      %2220 = vmatprep.subr.bf16.mxu0 0
      %2221 = vmatpush1.bf16.msra.mxu0 0
      %2222 = vmatprep.mubr.bf16.mxu0 0
      %2223 = vmatmul.mubr.bf16.gmra.mrb[0].mxu0 %v2188
      %v2224 = vpop.f32.mrb[0].mxu0
      %v2225 = vadd.f32 0.0, %v2224
      %v2226 = vpop.f32.mrb[0].mxu0
      %v2227 = vpop.f32.mrb[0].mxu0
      %v2228 = vadd.f32 0.0, %v2227
      %v2229 = vpop.f32.mrb[0].mxu0
      %2230 = vdwg.mxu0
      %2235 = vrot.lane.b32.xlu0 %v1693, 8
      %v2236 = vpop.permute.xlu0 %2235
      %2237 = vrot.lane.b32.xlu0 %v1696, 8
      %v2238 = vpop.permute.xlu0 %2237
      %2239 = vrot.lane.b32.xlu0 %v1741, 8
      %v2240 = vpop.permute.xlu0 %2239
      %2241 = vrot.lane.b32.xlu0 %v1744, 8
      %v2242 = vpop.permute.xlu0 %2241
      %2251 = vrot.lane.b32.xlu0 %v1936, 16
      %v2252 = vpop.permute.xlu0 %2251
      %2253 = vrot.lane.b32.xlu0 %v1939, 16
      %v2254 = vpop.permute.xlu0 %2253
      %2255 = vrot.lane.b32.xlu0 %v1983, 16
      %v2256 = vpop.permute.xlu0 %2255
      %2257 = vrot.lane.b32.xlu0 %v1986, 16
      %v2258 = vpop.permute.xlu0 %2257
      %2267 = vrot.lane.b32.xlu0 %v2178, 24
      %v2268 = vpop.permute.xlu0 %2267
      %2269 = vrot.lane.b32.xlu0 %v2181, 24
      %v2270 = vpop.permute.xlu0 %2269
      %2271 = vrot.lane.b32.xlu0 %v2225, 24
      %v2272 = vpop.permute.xlu0 %2271
      %2273 = vrot.lane.b32.xlu0 %v2228, 24
      %v2274 = vpop.permute.xlu0 %2273
      %v2279 = vsel %vm1269, %v1449, %v2236
      %v2280 = vsel %vm1269, %v1452, %v2238
      %v2281 = vsel %vm1269, %v1493, %v2240
      %v2282 = vsel %vm1269, %v1496, %v2242
      %v2283 = vsel %vm1364, %v2279, %v2252
      %v2284 = vsel %vm1364, %v2280, %v2254
      %v2285 = vsel %vm1364, %v2281, %v2256
      %v2286 = vsel %vm1364, %v2282, %v2258
      %vm2287 = vcmask 195584
      %v2288 = vsel %vm2287, %v2283, %v2268
      %v2289 = vsel %vm2287, %v2284, %v2270
      %v2290 = vsel %vm2287, %v2285, %v2272
      %v2291 = vsel %vm2287, %v2286, %v2274
      %v2292 = vpack.c.bf16 %v2289, %v2288
      %v2293 = vpack.c.bf16 %v2291, %v2290
      %v2294 = vld [vmem:[%s877] sm:$0xf]
      %v2295 = vld [vmem:[%s877 + $0x4] sm:$0xf]
      %v2296 = vld [vmem:[%s877 + $0x8] sm:$0xf]
      %v2297 = vld [vmem:[%s877 + $0xc] sm:$0xf]
      %v2298 = vld [vmem:[%s880] sm:$0x1]
      %v2300 = vlaneseq
      %v2301 = vshrl.u32 %v2300, 7
      %v2302 = vsub.s32 0, %v2301
      %v2303 = vrot.slane %v2298, %v2302
      %v2309 = vunpack.c.l.b16 %v2294
      %v2310 = vunpack.c.l.b16 %v2295
      %v2311 = vunpack.c.l.b16 %v2296
      %v2312 = vunpack.c.l.b16 %v2297
      %v2313 = vpack.c.b16 %v2310, %v2309
      %v2314 = vpack.c.b16 %v2312, %v2311
      %v2318 = vsel %vm1063, %v2292, 0
      %v2321 = vsel %vm1063, %v2293, 0
      %2323 = vmatprep.subr.bf16.mxu0 0
      %2324 = vmatpush1.bf16.msra.mxu0 %v2313
      %2325 = vmatprep.subr.bf16.mxu0 0
      %2326 = vmatpush1.bf16.msra.mxu0 %v2314
      %2327 = vmatprep.subr.bf16.mxu0 0
      %2328 = vmatpush1.bf16.msra.mxu0 0
      %2329 = vmatprep.subr.bf16.mxu0 0
      %2330 = vmatpush1.bf16.msra.mxu0 0
      %2331 = vmatprep.subr.bf16.mxu0 0
      %2332 = vmatpush1.bf16.msra.mxu0 0
      %2333 = vmatprep.subr.bf16.mxu0 0
      %2334 = vmatpush1.bf16.msra.mxu0 0
      %2335 = vmatprep.subr.bf16.mxu0 0
      %2336 = vmatpush1.bf16.msra.mxu0 0
      %2337 = vmatprep.subr.bf16.mxu0 0
      %2338 = vmatpush1.bf16.msra.mxu0 0
      %2339 = vmatprep.subr.bf16.mxu0 0
      %2340 = vmatpush1.bf16.msra.mxu0 0
      %2341 = vmatprep.subr.bf16.mxu0 0
      %2342 = vmatpush1.bf16.msra.mxu0 0
      %2343 = vmatprep.subr.bf16.mxu0 0
      %2344 = vmatpush1.bf16.msra.mxu0 0
      %2345 = vmatprep.subr.bf16.mxu0 0
      %2346 = vmatpush1.bf16.msra.mxu0 0
      %2347 = vmatprep.subr.bf16.mxu0 0
      %2348 = vmatpush1.bf16.msra.mxu0 0
      %2349 = vmatprep.subr.bf16.mxu0 0
      %2350 = vmatpush1.bf16.msra.mxu0 0
      %2351 = vmatprep.subr.bf16.mxu0 0
      %2352 = vmatpush1.bf16.msra.mxu0 0
      %2353 = vmatprep.subr.bf16.mxu0 0
      %2354 = vmatpush1.bf16.msra.mxu0 0
      %2355 = vmatprep.mubr.bf16.mxu0 0
      %2356 = vmatmul.mubr.bf16.gmra.mrb[0].mxu0 %v2318
      %v2357 = vpop.f32.mrb[0].mxu0
      %v2358 = vadd.f32 %v2303, %v2357
      %v2359 = vpop.f32.mrb[0].mxu0
      %v2360 = vpop.f32.mrb[0].mxu0
      %v2361 = vadd.f32 %v2303, %v2360
      %v2362 = vpop.f32.mrb[0].mxu0
      %2363 = vmatprep.mubr.bf16.mxu0 0
      %2364 = vmatmul.mubr.bf16.gmra.mrb[0].mxu0 %v2321
      %v2365 = vpop.f32.mrb[0].mxu0
      %v2366 = vadd.f32 %v2303, %v2365
      %v2367 = vpop.f32.mrb[0].mxu0
      %v2368 = vpop.f32.mrb[0].mxu0
      %v2369 = vadd.f32 %v2303, %v2368
      %v2370 = vpop.f32.mrb[0].mxu0
      %2371 = vdwg.mxu0
      %v2372 = vadd.f32 %v1034, %v2358
      %v2373 = vadd.f32 %v1035, %v2361
      %v2374 = vadd.f32 %v1036, %v2366
      %v2375 = vadd.f32 %v1037, %v2369
      %v2376 = vld [vmem:[%s883] sm:$0x1]
      %v2377 = vld [vmem:[%s886] sm:$0x1]
      %v2378 = vsel %vm1063, %v2372, 0.0
      %2379 = vadd.xlane.f32.xlu0 %v2378
      %v2380 = vpop.xlane.xlu0 %2379
      %v2381 = vsel %vm1063, %v2373, 0.0
      %2382 = vadd.xlane.f32.xlu0 %v2381
      %v2383 = vpop.xlane.xlu0 %2382
      %v2384 = vsel %vm1063, %v2374, 0.0
      %2385 = vadd.xlane.f32.xlu0 %v2384
      %v2386 = vpop.xlane.xlu0 %2385
      %v2387 = vsel %vm1063, %v2375, 0.0
      %2388 = vadd.xlane.f32.xlu0 %v2387
      %v2389 = vpop.xlane.xlu0 %2388
      %v2390 = vrcp.pop 32.0
      %v2391 = vmul.f32 %v2380, %v2390
      %v2392 = vmul.f32 %v2383, %v2390
      %v2393 = vmul.f32 %v2386, %v2390
      %v2394 = vmul.f32 %v2389, %v2390
      %v2395 = vsub.f32 %v2372, %v2391
      %v2396 = vsub.f32 %v2373, %v2392
      %v2397 = vsub.f32 %v2374, %v2393
      %v2398 = vsub.f32 %v2375, %v2394
      %v2399 = vmul.f32 %v2395, %v2395
      %v2400 = vmul.f32 %v2396, %v2396
      %v2401 = vmul.f32 %v2397, %v2397
      %v2402 = vmul.f32 %v2398, %v2398
      %v2403 = vsel %vm1063, %v2399, 0.0
      %2404 = vadd.xlane.f32.xlu0 %v2403
      %v2405 = vpop.xlane.xlu0 %2404
      %v2406 = vsel %vm1063, %v2400, 0.0
      %2407 = vadd.xlane.f32.xlu0 %v2406
      %v2408 = vpop.xlane.xlu0 %2407
      %v2409 = vsel %vm1063, %v2401, 0.0
      %2410 = vadd.xlane.f32.xlu0 %v2409
      %v2411 = vpop.xlane.xlu0 %2410
      %v2412 = vsel %vm1063, %v2402, 0.0
      %2413 = vadd.xlane.f32.xlu0 %v2412
      %v2414 = vpop.xlane.xlu0 %2413
      %v2415 = vmul.f32 %v2405, %v2390
      %v2416 = vmul.f32 %v2408, %v2390
      %v2417 = vmul.f32 %v2411, %v2390
      %v2418 = vmul.f32 %v2414, %v2390
      %v2419 = vadd.f32 %v2415, 1e-05
      %v2420 = vadd.f32 %v2416, 1e-05
      %v2421 = vadd.f32 %v2417, 1e-05
      %v2422 = vadd.f32 %v2418, 1e-05
      %v2423 = vrsqrt.pop %v2419
      %v2424 = vrsqrt.pop %v2420
      %v2425 = vrsqrt.pop %v2421
      %v2426 = vrsqrt.pop %v2422
      %v2427 = vmul.f32 %v2395, %v2423
      %v2428 = vmul.f32 %v2396, %v2424
      %v2429 = vmul.f32 %v2397, %v2425
      %v2430 = vmul.f32 %v2398, %v2426
      %v2432 = vlaneseq
      %v2433 = vshrl.u32 %v2432, 7
      %v2434 = vsub.s32 0, %v2433
      %v2435 = vrot.slane %v2376, %v2434
      %v2437 = vmul.f32 %v2427, %v2435
      %v2438 = vmul.f32 %v2428, %v2435
      %v2439 = vmul.f32 %v2429, %v2435
      %v2440 = vmul.f32 %v2430, %v2435
      %v2442 = vlaneseq
      %v2443 = vshrl.u32 %v2442, 7
      %v2444 = vsub.s32 0, %v2443
      %v2445 = vrot.slane %v2377, %v2444
      %v2447 = vadd.f32 %v2437, %v2445
      %v2448 = vadd.f32 %v2438, %v2445
      %v2449 = vadd.f32 %v2439, %v2445
      %v2450 = vadd.f32 %v2440, %v2445
      %v2451 = vpack.c.bf16 %v2448, %v2447
      %v2452 = vpack.c.bf16 %v2450, %v2449
      %v2453 = vld [vmem:[%s891] sm:$0xf]
      %v2454 = vld [vmem:[%s891 + $0x4] sm:$0xf]
      %v2455 = vld [vmem:[%s891 + $0x8] sm:$0xf]
      %v2456 = vld [vmem:[%s891 + $0xc] sm:$0xf]
      %v2457 = vld [vmem:[%s894] sm:$0x1]
      %v2459 = vlaneseq
      %v2460 = vshrl.u32 %v2459, 7
      %v2461 = vsub.s32 0, %v2460
      %v2462 = vrot.slane %v2457, %v2461
      %v2468 = vunpack.c.l.b16 %v2453
      %v2469 = vunpack.c.l.b16 %v2454
      %v2470 = vunpack.c.l.b16 %v2455
      %v2471 = vunpack.c.l.b16 %v2456
      %v2472 = vpack.c.b16 %v2469, %v2468
      %v2473 = vpack.c.b16 %v2471, %v2470
      %v2477 = vsel %vm1063, %v2451, 0
      %v2480 = vsel %vm1063, %v2452, 0
      %2482 = vmatprep.subr.bf16.mxu0 0
      %2483 = vmatpush1.bf16.msra.mxu0 %v2472
      %2484 = vmatprep.subr.bf16.mxu0 0
      %2485 = vmatpush1.bf16.msra.mxu0 %v2473
      %2486 = vmatprep.subr.bf16.mxu0 0
      %2487 = vmatpush1.bf16.msra.mxu0 0
      %2488 = vmatprep.subr.bf16.mxu0 0
      %2489 = vmatpush1.bf16.msra.mxu0 0
      %2490 = vmatprep.subr.bf16.mxu0 0
      %2491 = vmatpush1.bf16.msra.mxu0 0
      %2492 = vmatprep.subr.bf16.mxu0 0
      %2493 = vmatpush1.bf16.msra.mxu0 0
      %2494 = vmatprep.subr.bf16.mxu0 0
      %2495 = vmatpush1.bf16.msra.mxu0 0
      %2496 = vmatprep.subr.bf16.mxu0 0
      %2497 = vmatpush1.bf16.msra.mxu0 0
      %2498 = vmatprep.subr.bf16.mxu0 0
      %2499 = vmatpush1.bf16.msra.mxu0 0
      %2500 = vmatprep.subr.bf16.mxu0 0
      %2501 = vmatpush1.bf16.msra.mxu0 0
      %2502 = vmatprep.subr.bf16.mxu0 0
      %2503 = vmatpush1.bf16.msra.mxu0 0
      %2504 = vmatprep.subr.bf16.mxu0 0
      %2505 = vmatpush1.bf16.msra.mxu0 0
      %2506 = vmatprep.subr.bf16.mxu0 0
      %2507 = vmatpush1.bf16.msra.mxu0 0
      %2508 = vmatprep.subr.bf16.mxu0 0
      %2509 = vmatpush1.bf16.msra.mxu0 0
      %2510 = vmatprep.subr.bf16.mxu0 0
      %2511 = vmatpush1.bf16.msra.mxu0 0
      %2512 = vmatprep.subr.bf16.mxu0 0
      %2513 = vmatpush1.bf16.msra.mxu0 0
      %2514 = vmatprep.mubr.bf16.mxu0 0
      %2515 = vmatmul.mubr.bf16.gmra.mrb[0].mxu0 %v2477
      %v2516 = vpop.f32.mrb[0].mxu0
      %v2517 = vadd.f32 %v2462, %v2516
      %v2518 = vpop.f32.mrb[0].mxu0
      %v2519 = vpop.f32.mrb[0].mxu0
      %v2520 = vadd.f32 %v2462, %v2519
      %v2521 = vpop.f32.mrb[0].mxu0
      %2522 = vmatprep.mubr.bf16.mxu0 0
      %2523 = vmatmul.mubr.bf16.gmra.mrb[0].mxu0 %v2480
      %v2524 = vpop.f32.mrb[0].mxu0
      %v2525 = vadd.f32 %v2462, %v2524
      %v2526 = vpop.f32.mrb[0].mxu0
      %v2527 = vpop.f32.mrb[0].mxu0
      %v2528 = vadd.f32 %v2462, %v2527
      %v2529 = vpop.f32.mrb[0].mxu0
      %2530 = vdwg.mxu0
      %v2531 = vmax.f32 %v2517, 0.0
      %v2532 = vmax.f32 %v2520, 0.0
      %v2533 = vmax.f32 %v2525, 0.0
      %v2534 = vmax.f32 %v2528, 0.0
      %v2535 = vpack.c.bf16 %v2532, %v2531
      %v2536 = vpack.c.bf16 %v2534, %v2533
      %v2537 = vld [vmem:[%s899] sm:$0xf]
      %v2538 = vld [vmem:[%s899 + $0x4] sm:$0xf]
      %v2539 = vld [vmem:[%s899 + $0x8] sm:$0xf]
      %v2540 = vld [vmem:[%s899 + $0xc] sm:$0xf]
      %v2541 = vld [vmem:[%s899 + $0x10] sm:$0xf]
      %v2542 = vld [vmem:[%s899 + $0x14] sm:$0xf]
      %v2543 = vld [vmem:[%s899 + $0x18] sm:$0xf]
      %v2544 = vld [vmem:[%s899 + $0x1c] sm:$0xf]
      %v2545 = vld [vmem:[%s902] sm:$0x1]
      %v2547 = vlaneseq
      %v2548 = vshrl.u32 %v2547, 7
      %v2549 = vsub.s32 0, %v2548
      %v2550 = vrot.slane %v2545, %v2549
      %v2560 = vunpack.c.l.b16 %v2537
      %v2561 = vunpack.c.l.b16 %v2538
      %v2562 = vunpack.c.l.b16 %v2539
      %v2563 = vunpack.c.l.b16 %v2540
      %v2564 = vunpack.c.l.b16 %v2541
      %v2565 = vunpack.c.l.b16 %v2542
      %v2566 = vunpack.c.l.b16 %v2543
      %v2567 = vunpack.c.l.b16 %v2544
      %v2568 = vpack.c.b16 %v2561, %v2560
      %v2569 = vpack.c.b16 %v2563, %v2562
      %v2570 = vpack.c.b16 %v2565, %v2564
      %v2571 = vpack.c.b16 %v2567, %v2566
      %vm2576 = vcmask 523264
      %v2578 = vsel %vm2576, %v2535, 0
      %v2581 = vsel %vm2576, %v2536, 0
      %2583 = vmatprep.subr.bf16.mxu0 0
      %2584 = vmatpush1.bf16.msra.mxu0 %v2568
      %2585 = vmatprep.subr.bf16.mxu0 0
      %2586 = vmatpush1.bf16.msra.mxu0 %v2569
      %2587 = vmatprep.subr.bf16.mxu0 0
      %2588 = vmatpush1.bf16.msra.mxu0 %v2570
      %2589 = vmatprep.subr.bf16.mxu0 0
      %2590 = vmatpush1.bf16.msra.mxu0 %v2571
      %2591 = vmatprep.subr.bf16.mxu0 0
      %2592 = vmatpush1.bf16.msra.mxu0 0
      %2593 = vmatprep.subr.bf16.mxu0 0
      %2594 = vmatpush1.bf16.msra.mxu0 0
      %2595 = vmatprep.subr.bf16.mxu0 0
      %2596 = vmatpush1.bf16.msra.mxu0 0
      %2597 = vmatprep.subr.bf16.mxu0 0
      %2598 = vmatpush1.bf16.msra.mxu0 0
      %2599 = vmatprep.subr.bf16.mxu0 0
      %2600 = vmatpush1.bf16.msra.mxu0 0
      %2601 = vmatprep.subr.bf16.mxu0 0
      %2602 = vmatpush1.bf16.msra.mxu0 0
      %2603 = vmatprep.subr.bf16.mxu0 0
      %2604 = vmatpush1.bf16.msra.mxu0 0
      %2605 = vmatprep.subr.bf16.mxu0 0
      %2606 = vmatpush1.bf16.msra.mxu0 0
      %2607 = vmatprep.subr.bf16.mxu0 0
      %2608 = vmatpush1.bf16.msra.mxu0 0
      %2609 = vmatprep.subr.bf16.mxu0 0
      %2610 = vmatpush1.bf16.msra.mxu0 0
      %2611 = vmatprep.subr.bf16.mxu0 0
      %2612 = vmatpush1.bf16.msra.mxu0 0
      %2613 = vmatprep.subr.bf16.mxu0 0
      %2614 = vmatpush1.bf16.msra.mxu0 0
      %2615 = vmatprep.mubr.bf16.mxu0 0
      %2616 = vmatmul.mubr.bf16.gmra.mrb[0].mxu0 %v2578
      %v2617 = vpop.f32.mrb[0].mxu0
      %v2618 = vadd.f32 %v2550, %v2617
      %v2619 = vpop.f32.mrb[0].mxu0
      %v2620 = vpop.f32.mrb[0].mxu0
      %v2621 = vadd.f32 %v2550, %v2620
      %v2622 = vpop.f32.mrb[0].mxu0
      %2623 = vmatprep.mubr.bf16.mxu0 0
      %2624 = vmatmul.mubr.bf16.gmra.mrb[0].mxu0 %v2581
      %v2625 = vpop.f32.mrb[0].mxu0
      %v2626 = vadd.f32 %v2550, %v2625
      %v2627 = vpop.f32.mrb[0].mxu0
      %v2628 = vpop.f32.mrb[0].mxu0
      %v2629 = vadd.f32 %v2550, %v2628
      %v2630 = vpop.f32.mrb[0].mxu0
      %2631 = vdwg.mxu0
      %v2632 = vadd.f32 %v2447, %v2618
      %v2633 = vadd.f32 %v2448, %v2621
      %v2634 = vadd.f32 %v2449, %v2626
      %v2635 = vadd.f32 %v2450, %v2629
      %v2636 = vld [vmem:[%s905] sm:$0x1]
      %v2637 = vld [vmem:[%s908] sm:$0x1]
      %v2638 = vsel %vm1063, %v2632, 0.0
      %2639 = vadd.xlane.f32.xlu0 %v2638
      %v2640 = vpop.xlane.xlu0 %2639
      %v2641 = vsel %vm1063, %v2633, 0.0
      %2642 = vadd.xlane.f32.xlu0 %v2641
      %v2643 = vpop.xlane.xlu0 %2642
      %v2644 = vsel %vm1063, %v2634, 0.0
      %2645 = vadd.xlane.f32.xlu0 %v2644
      %v2646 = vpop.xlane.xlu0 %2645
      %v2647 = vsel %vm1063, %v2635, 0.0
      %2648 = vadd.xlane.f32.xlu0 %v2647
      %v2649 = vpop.xlane.xlu0 %2648
      %v2650 = vmul.f32 %v2640, %v2390
      %v2651 = vmul.f32 %v2643, %v2390
      %v2652 = vmul.f32 %v2646, %v2390
      %v2653 = vmul.f32 %v2649, %v2390
      %v2654 = vsub.f32 %v2632, %v2650
      %v2655 = vsub.f32 %v2633, %v2651
      %v2656 = vsub.f32 %v2634, %v2652
      %v2657 = vsub.f32 %v2635, %v2653
      %v2658 = vmul.f32 %v2654, %v2654
      %v2659 = vmul.f32 %v2655, %v2655
      %v2660 = vmul.f32 %v2656, %v2656
      %v2661 = vmul.f32 %v2657, %v2657
      %v2662 = vsel %vm1063, %v2658, 0.0
      %2663 = vadd.xlane.f32.xlu0 %v2662
      %v2664 = vpop.xlane.xlu0 %2663
      %v2665 = vsel %vm1063, %v2659, 0.0
      %2666 = vadd.xlane.f32.xlu0 %v2665
      %v2667 = vpop.xlane.xlu0 %2666
      %v2668 = vsel %vm1063, %v2660, 0.0
      %2669 = vadd.xlane.f32.xlu0 %v2668
      %v2670 = vpop.xlane.xlu0 %2669
      %v2671 = vsel %vm1063, %v2661, 0.0
      %2672 = vadd.xlane.f32.xlu0 %v2671
      %v2673 = vpop.xlane.xlu0 %2672
      %v2674 = vmul.f32 %v2664, %v2390
      %v2675 = vmul.f32 %v2667, %v2390
      %v2676 = vmul.f32 %v2670, %v2390
      %v2677 = vmul.f32 %v2673, %v2390
      %v2678 = vadd.f32 %v2674, 1e-05
      %v2679 = vadd.f32 %v2675, 1e-05
      %v2680 = vadd.f32 %v2676, 1e-05
      %v2681 = vadd.f32 %v2677, 1e-05
      %v2682 = vrsqrt.pop %v2678
      %v2683 = vrsqrt.pop %v2679
      %v2684 = vrsqrt.pop %v2680
      %v2685 = vrsqrt.pop %v2681
      %v2686 = vmul.f32 %v2654, %v2682
      %v2687 = vmul.f32 %v2655, %v2683
      %v2688 = vmul.f32 %v2656, %v2684
      %v2689 = vmul.f32 %v2657, %v2685
      %v2691 = vlaneseq
      %v2692 = vshrl.u32 %v2691, 7
      %v2693 = vsub.s32 0, %v2692
      %v2694 = vrot.slane %v2636, %v2693
      %v2696 = vmul.f32 %v2686, %v2694
      %v2697 = vmul.f32 %v2687, %v2694
      %v2698 = vmul.f32 %v2688, %v2694
      %v2699 = vmul.f32 %v2689, %v2694
      %v2701 = vlaneseq
      %v2702 = vshrl.u32 %v2701, 7
      %v2703 = vsub.s32 0, %v2702
      %v2704 = vrot.slane %v2637, %v2703
      %v2706 = vadd.f32 %v2696, %v2704
      %v2707 = vadd.f32 %v2697, %v2704
      %v2708 = vadd.f32 %v2698, %v2704
      %v2709 = vadd.f32 %v2699, %v2704
      %2710 = vst.msk [vmem:[#allocation2] sm:$0xff] %vm1063, %v2706
      %2711 = vst.msk [vmem:[#allocation2 + $0x8] sm:$0xff] %vm1063, %v2707
      %2712 = vst.msk [vmem:[#allocation2 + $0x10] sm:$0xff] %vm1063, %v2708
      %2713 = vst.msk [vmem:[#allocation2 + $0x18] sm:$0xff] %vm1063, %v2709
      %p2714 = scmp.eq.s32.totalorder %s33, 1
      // Predicated region
      $region113: #{vit_segmentation_forward.1} parent=107 // pred_check
        %p2715 = pneg %p2714
      $region114: #{vit_segmentation_forward.1} parent=107 // pred_check_branch
        %2717 = sbr.rel (%p2715) target = $region116
      $region115: #{vit_segmentation_forward.1} parent=107 // pred_region
        %v2718 = vpack.c.bf16 %v2707, %v2706
        %v2719 = vpack.c.bf16 %v2709, %v2708
        %v2720 = vld [vmem:[%s20] sm:$0xf]
        %v2721 = vld [vmem:[%s20 + $0x4] sm:$0xf]
        %v2722 = vld [vmem:[%s20 + $0x8] sm:$0xf]
        %v2723 = vld [vmem:[%s20 + $0xc] sm:$0xf]
        %v2724 = vld [vmem:[%s21] sm:$0x1]
        %v2726 = vlaneseq
        %v2727 = vshrl.u32 %v2726, 7
        %v2728 = vsub.s32 0, %v2727
        %v2729 = vrot.slane %v2724, %v2728
        %v2735 = vunpack.c.l.b16 %v2720
        %v2736 = vunpack.c.l.b16 %v2721
        %v2737 = vunpack.c.l.b16 %v2722
        %v2738 = vunpack.c.l.b16 %v2723
        %v2739 = vpack.c.b16 %v2736, %v2735
        %v2740 = vpack.c.b16 %v2738, %v2737
        %v2744 = vsel %vm1063, %v2718, 0
        %v2747 = vsel %vm1063, %v2719, 0
        %2749 = vmatprep.subr.bf16.mxu0 0
        %2750 = vmatpush1.bf16.msra.mxu0 %v2739
        %2751 = vmatprep.subr.bf16.mxu0 0
        %2752 = vmatpush1.bf16.msra.mxu0 %v2740
        %2753 = vmatprep.subr.bf16.mxu0 0
        %2754 = vmatpush1.bf16.msra.mxu0 0
        %2755 = vmatprep.subr.bf16.mxu0 0
        %2756 = vmatpush1.bf16.msra.mxu0 0
        %2757 = vmatprep.subr.bf16.mxu0 0
        %2758 = vmatpush1.bf16.msra.mxu0 0
        %2759 = vmatprep.subr.bf16.mxu0 0
        %2760 = vmatpush1.bf16.msra.mxu0 0
        %2761 = vmatprep.subr.bf16.mxu0 0
        %2762 = vmatpush1.bf16.msra.mxu0 0
        %2763 = vmatprep.subr.bf16.mxu0 0
        %2764 = vmatpush1.bf16.msra.mxu0 0
        %2765 = vmatprep.subr.bf16.mxu0 0
        %2766 = vmatpush1.bf16.msra.mxu0 0
        %2767 = vmatprep.subr.bf16.mxu0 0
        %2768 = vmatpush1.bf16.msra.mxu0 0
        %2769 = vmatprep.subr.bf16.mxu0 0
        %2770 = vmatpush1.bf16.msra.mxu0 0
        %2771 = vmatprep.subr.bf16.mxu0 0
        %2772 = vmatpush1.bf16.msra.mxu0 0
        %2773 = vmatprep.subr.bf16.mxu0 0
        %2774 = vmatpush1.bf16.msra.mxu0 0
        %2775 = vmatprep.subr.bf16.mxu0 0
        %2776 = vmatpush1.bf16.msra.mxu0 0
        %2777 = vmatprep.subr.bf16.mxu0 0
        %2778 = vmatpush1.bf16.msra.mxu0 0
        %2779 = vmatprep.subr.bf16.mxu0 0
        %2780 = vmatpush1.bf16.msra.mxu0 0
        %2781 = vmatprep.mubr.bf16.mxu0 0
        %2782 = vmatmul.mubr.bf16.gmra.mrb[0].mxu0 %v2744
        %v2783 = vpop.f32.mrb[0].mxu0
        %v2784 = vadd.f32 %v2729, %v2783
        %v2785 = vpop.f32.mrb[0].mxu0
        %v2786 = vpop.f32.mrb[0].mxu0
        %v2787 = vadd.f32 %v2729, %v2786
        %v2788 = vpop.f32.mrb[0].mxu0
        %2789 = vmatprep.mubr.bf16.mxu0 0
        %2790 = vmatmul.mubr.bf16.gmra.mrb[0].mxu0 %v2747
        %v2791 = vpop.f32.mrb[0].mxu0
        %v2792 = vadd.f32 %v2729, %v2791
        %v2793 = vpop.f32.mrb[0].mxu0
        %v2794 = vpop.f32.mrb[0].mxu0
        %v2795 = vadd.f32 %v2729, %v2794
        %v2796 = vpop.f32.mrb[0].mxu0
        %2797 = vdwg.mxu0
        %2798 = vst [vmem:[%s22] sm:$0xff] %v2784
        %2799 = vst [vmem:[%s22 + $0x8] sm:$0xff] %v2787
        %2800 = vst [vmem:[%s22 + $0x10] sm:$0xff] %v2792
        %2801 = vst [vmem:[%s22 + $0x18] sm:$0xff] %v2795
      $region116: #{vit_segmentation_forward.1} parent=107 // pred_fallthru
        _
      // Predicated region
      $region117: #{vit_segmentation_forward.1} parent=107 // pred_check
        %p2802 = pneg %p588
      $region118: #{vit_segmentation_forward.1} parent=107 // pred_check_branch
        %2804 = sbr.rel (%p2802) target = $region120
      $region119: #{vit_segmentation_forward.1} parent=107 // pred_region
        _
      $region120: #{vit_segmentation_forward.1} parent=107 // pred_fallthru
        _
      // Predicated region
      $region121: #{vit_segmentation_forward.1} parent=107 // pred_check
        %p2805 = pneg %p588
      $region122: #{vit_segmentation_forward.1} parent=107 // pred_check_branch
        %2807 = sbr.rel (%p2805) target = $region124
      $region123: #{vit_segmentation_forward.1} parent=107 // pred_region
        _
      $region124: #{vit_segmentation_forward.1} parent=107 // pred_fallthru
        _
    $region108: #{vit_segmentation_forward.1} parent=5 // pred_fallthru
      _
    %p2808 = scmp.le.s32.totalorder 2, %s28
    // Predicated region
    $region125: #{vit_segmentation_forward.1} parent=5 // pred_check
      %p2809 = pneg %p2808
    $region126: #{vit_segmentation_forward.1} parent=5 // pred_check_branch
      %2811 = sbr.rel (%p2809) target = $region128
    $region127: #{vit_segmentation_forward.1} parent=5 // pred_region
      %s2812 = ssub.s32 %s28, 2
    $region128: #{vit_segmentation_forward.1} parent=5 // pred_fallthru
      _
  $region6: #{vit_segmentation_forward.1} parent=0 // loop_footer
    %s32 = sadd.s32 1, %s28
  $region7: #{vit_segmentation_forward.1} parent=0 // loop_footer_branch
    %27 = sbr.rel target = $region3
  $region8: #{vit_segmentation_forward.1} parent=0 // loop_exit
    _

</llo_original>
